<compile_context>
chip_gen: v7x
topology: tpu7x:2x2x1
jax: 0.10.0
libtpu: 0.0.40
codegen_flags: <defaults>
</compile_context>

<pallas_src>
import functools

import jax
import jax.numpy as jnp
from jax import lax
from jax.experimental import pallas as pl
from jax.experimental.pallas import tpu as pltpu

_BN_EPS = 1e-5


def _mish(x):
    """x * tanh(softplus(x)), with a numerically stable softplus."""
    sp = jnp.maximum(x, 0.0) + jnp.log(1.0 + jnp.exp(-jnp.abs(x)))
    return x * jnp.tanh(sp)


def _dwconv5x5_same(y, taps, bias, pad_ref, *, W):
    """Depthwise 5x5 'same' convolution on a (C, H*W) slab.

    y       : (C, H*W) f32, row-major spatial flatten.
    taps    : (C, 25)  f32 per-channel taps, tap index = (dh+2)*5 + (dw+2).
    bias    : (C, 1)   f32 (BN shift folded in).
    pad_ref : (C, H*W + 2*margin) VMEM scratch; the slab is parked in the
              middle so every spatial shift becomes a static lane-offset read
              with zero-filled row padding.  Column wrap inside a row is
              masked with an iota-based lane mask.
    """
    C, HW = y.shape
    off0 = (pad_ref.shape[1] - HW) // 2
    assert off0 >= 2 * W + 2, "scratch margin too small for a 5x5 window"

    pad_ref[...] = jnp.zeros_like(pad_ref)
    pad_ref[:, off0:off0 + HW] = y

    col = lax.broadcasted_iota(jnp.int32, (C, HW), 1) % W
    acc = jnp.zeros((C, HW), jnp.float32)
    for dh in range(-2, 3):
        for dw in range(-2, 3):
            tap = (dh + 2) * 5 + (dw + 2)
            shift = dh * W + dw
            window = pad_ref[:, off0 + shift:off0 + shift + HW]
            # Row over/underflow lands in the zero margins; column wrap within
            # a row reads the neighbouring row and must be masked out.
            valid = jnp.logical_and(col + dw >= 0, col + dw < W)
            acc = acc + jnp.where(valid, window, 0.0) * taps[:, tap:tap + 1]
    return acc + bias


def _ghost_bottleneck_kernel(
        x_ref,                       # (1, Cin, HW)
        a1_ref, b1_ref,              # GhostConv1 primary 1x1 (BN folded)
        d1_ref, c1_ref,              # GhostConv1 cheap depthwise 5x5 (BN folded)
        a2a_ref, a2b_ref, b2_ref,    # GhostConv2 primary 1x1, split over [y1|y2]
        d2_ref, c2_ref,              # GhostConv2 cheap depthwise 5x5 (BN folded)
        o_ref,                       # (1, Cout, HW)
        pad1_ref, pad2_ref,          # VMEM scratch for the two depthwise convs
        *, W, hid):
    x = x_ref[0].astype(jnp.float32)                        # (Cin, HW)

    # GhostConv #1 (act = Mish): primary 1x1 conv, then cheap depthwise 5x5.
    y1 = jnp.dot(a1_ref[...], x, preferred_element_type=jnp.float32) + b1_ref[...]
    y1 = _mish(y1)                                          # (q1, HW)
    y2 = _mish(_dwconv5x5_same(y1, d1_ref[...], c1_ref[...], pad1_ref, W=W))

    # GhostConv #2 (no act).  concat([y1, y2], C) through its 1x1 weight is
    # computed as a split matmul so the concat never materialises.
    z1 = (jnp.dot(a2a_ref[...], y1, preferred_element_type=jnp.float32)
          + jnp.dot(a2b_ref[...], y2, preferred_element_type=jnp.float32)
          + b2_ref[...])                                    # (hid, HW)
    z2 = _dwconv5x5_same(z1, d2_ref[...], c2_ref[...], pad2_ref, W=W)

    # out = concat([z1, z2], C) + identity shortcut.
    o_ref[0, :hid, :] = (z1 + x[:hid, :]).astype(o_ref.dtype)
    o_ref[0, hid:, :] = (z2 + x[hid:, :]).astype(o_ref.dtype)


def _fold_bn(w, bn):
    """Fold eval-mode BatchNorm into a bias-free conv: returns (W', b')."""
    scale = bn["gamma"] / jnp.sqrt(bn["var"] + _BN_EPS)
    return w * scale[:, None], (bn["beta"] - bn["mean"] * scale)[:, None]


@jax.jit
def ghost_bottleneck_forward(x, params):
    """GhostBottleneck(in_ch, out_ch, k, stride=1) forward via one pallas_call."""
    N, cin, H, Wsp = x.shape
    HW = H * Wsp

    a1, b1 = _fold_bn(params["w1"], params["bn1"])
    q1 = a1.shape[0]
    d1, c1 = _fold_bn(params["wd1"].reshape(q1, 25), params["bnd1"])
    a2, b2 = _fold_bn(params["w2"], params["bn2"])
    hid = a2.shape[0]
    d2, c2 = _fold_bn(params["wd2"].reshape(hid, 25), params["bnd2"])
    cout = 2 * hid
    assert cin == cout, "stride==1 GhostBottleneck requires in_ch == out_ch"
    a2a, a2b = a2[:, :q1], a2[:, q1:]

    # Lane-dense slabs: channels on sublanes, H*W (multiple of 128 here) on lanes.
    x2 = x.reshape(N, cin, HW)

    kernel = functools.partial(_ghost_bottleneck_kernel, W=Wsp, hid=hid)

    def w_spec(arr):
        return pl.BlockSpec(arr.shape, lambda n: (0, 0))

    # VMEM footprint (test shape): ~2x(8 KiB in + 8 KiB out) double-buffered
    # blocks plus <40 KiB of weights/scratch — far below the scoped-VMEM
    # defaults on v5e/v6e/v7x, so no vmem_limit override is needed.  Larger
    # feature maps would tile H*W (with a 2-row halo) instead of taking it whole.
    out2 = pl.pallas_call(
        kernel,
        out_shape=jax.ShapeDtypeStruct((N, cout, HW), x.dtype),
        grid=(N,),
        in_specs=[
            pl.BlockSpec((1, cin, HW), lambda n: (n, 0, 0)),
            w_spec(a1), w_spec(b1), w_spec(d1), w_spec(c1),
            w_spec(a2a), w_spec(a2b), w_spec(b2), w_spec(d2), w_spec(c2),
        ],
        out_specs=pl.BlockSpec((1, cout, HW), lambda n: (n, 0, 0)),
        scratch_shapes=[
            pltpu.VMEM((q1, HW + 256), jnp.float32),
            pltpu.VMEM((hid, HW + 256), jnp.float32),
        ],
        compiler_params=pltpu.CompilerParams(
            dimension_semantics=("parallel",),   # batch images -> 2 TCs on v7x
        ),
    )(x2, a1, b1, d1, c1, a2a, a2b, b2, d2, c2)

    return out2.reshape(N, cout, H, Wsp)


def init_ghost_bottleneck_params(key, in_ch, out_ch, kernel_size=3, stride=1):
    """Random conv weights + eval-mode BatchNorm stats for GhostBottleneck."""
    assert stride == 1  # TODO(synk): stride==2 params (strided DWConv + conv shortcut).
    hid = out_ch // 2
    q1 = hid // 2
    keys = jax.random.split(key, 8)

    def bn_params(k, c):
        k1, k2, k3, k4 = jax.random.split(k, 4)
        return dict(
            gamma=jax.random.uniform(k1, (c,), jnp.float32, 0.5, 1.5),
            beta=0.1 * jax.random.normal(k2, (c,), jnp.float32),
            mean=0.1 * jax.random.normal(k3, (c,), jnp.float32),
            var=jax.random.uniform(k4, (c,), jnp.float32, 0.5, 1.5),
        )

    return dict(
        w1=0.3 * jax.random.normal(keys[0], (q1, in_ch), jnp.float32),
        bn1=bn_params(keys[1], q1),
        wd1=0.3 * jax.random.normal(keys[2], (q1, 5, 5), jnp.float32),
        bnd1=bn_params(keys[3], q1),
        w2=0.3 * jax.random.normal(keys[4], (hid, hid), jnp.float32),
        bn2=bn_params(keys[5], hid),
        wd2=0.3 * jax.random.normal(keys[6], (hid, 5, 5), jnp.float32),
        bnd2=bn_params(keys[7], hid),
    )


# ---------------------- pure-JAX reference (for validation) ----------------------
def _bn_eval(y, bn):
    scale = bn["gamma"] / jnp.sqrt(bn["var"] + _BN_EPS)
    shift = bn["beta"] - bn["mean"] * scale
    return y * scale[None, :, None, None] + shift[None, :, None, None]


def _conv1x1_ref(x, w):
    return lax.conv_general_dilated(
        x, w[:, :, None, None], window_strides=(1, 1), padding=((0, 0), (0, 0)),
        dimension_numbers=("NCHW", "OIHW", "NCHW"))


def _dwconv5x5_ref(x, w):
    c = x.shape[1]
    return lax.conv_general_dilated(
        x, w[:, None, :, :], window_strides=(1, 1), padding=((2, 2), (2, 2)),
        dimension_numbers=("NCHW", "OIHW", "NCHW"), feature_group_count=c)


@jax.jit
def ghost_bottleneck_reference(x, params):
    """Pure-JAX (XLA conv) reference matching the PyTorch forward (eval mode)."""
    y1 = _mish(_bn_eval(_conv1x1_ref(x, params["w1"]), params["bn1"]))
    y2 = _mish(_bn_eval(_dwconv5x5_ref(y1, params["wd1"]), params["bnd1"]))
    g = jnp.concatenate([y1, y2], axis=1)
    z1 = _bn_eval(_conv1x1_ref(g, params["w2"]), params["bn2"])
    z2 = _bn_eval(_dwconv5x5_ref(z1, params["wd2"]), params["bnd2"])
    return jnp.concatenate([z1, z2], axis=1) + x


if __name__ == "__main__":
    key = jax.random.PRNGKey(0)
    kx, kp = jax.random.split(key)

    N, C, H, W = 2, 8, 16, 16      # stride==1 bottleneck => in_ch == out_ch
    x = jax.random.normal(kx, (N, C, H, W), dtype=jnp.float32)
    params = init_ghost_bottleneck_params(kp, in_ch=C, out_ch=C,
                                          kernel_size=3, stride=1)

    out = jax.block_until_ready(ghost_bottleneck_forward(x, params))
    ref = jax.block_until_ready(ghost_bottleneck_reference(x, params))

    assert out.shape == (N, C, H, W) and out.dtype == x.dtype
    max_err = float(jnp.max(jnp.abs(out - ref)))
    assert max_err < 2e-3, f"Pallas kernel mismatch vs reference: max|err|={max_err}"

    print("KERNEL_OK")
</pallas_src>

<mosaic_0001>
module attributes {stable_mosaic.version = 11 : i64} {
  func.func @_ghost_bottleneck_kernel(%arg0: i32, %arg1: memref<1x8x256xf32, #tpu.memory_space<vmem>>, %arg2: memref<2x8xf32, #tpu.memory_space<vmem>>, %arg3: memref<2x1xf32, #tpu.memory_space<vmem>>, %arg4: memref<2x25xf32, #tpu.memory_space<vmem>>, %arg5: memref<2x1xf32, #tpu.memory_space<vmem>>, %arg6: memref<4x2xf32, #tpu.memory_space<vmem>>, %arg7: memref<4x2xf32, #tpu.memory_space<vmem>>, %arg8: memref<4x1xf32, #tpu.memory_space<vmem>>, %arg9: memref<4x25xf32, #tpu.memory_space<vmem>>, %arg10: memref<4x1xf32, #tpu.memory_space<vmem>>, %arg11: memref<1x8x256xf32, #tpu.memory_space<vmem>>, %arg12: memref<2x512xf32, #tpu.memory_space<vmem>>, %arg13: memref<4x512xf32, #tpu.memory_space<vmem>>) attributes {dimension_semantics = [#tpu.dimension_semantics<parallel>], iteration_bounds = array<i64: 2>, scalar_prefetch = 0 : i64, scratch_operands = 2 : i64, tpu.core_type = #tpu.core_type<tc>, window_params = [{transform_indices = @transform_0, window_bounds = array<i64: 1, 8, 256>}, {pipeline_mode = #tpu.pipeline_mode<synchronous>, transform_indices = @transform_1, window_bounds = array<i64: 2, 8>}, {pipeline_mode = #tpu.pipeline_mode<synchronous>, transform_indices = @transform_2, window_bounds = array<i64: 2, 1>}, {pipeline_mode = #tpu.pipeline_mode<synchronous>, transform_indices = @transform_3, window_bounds = array<i64: 2, 25>}, {pipeline_mode = #tpu.pipeline_mode<synchronous>, transform_indices = @transform_4, window_bounds = array<i64: 2, 1>}, {pipeline_mode = #tpu.pipeline_mode<synchronous>, transform_indices = @transform_5, window_bounds = array<i64: 4, 2>}, {pipeline_mode = #tpu.pipeline_mode<synchronous>, transform_indices = @transform_6, window_bounds = array<i64: 4, 2>}, {pipeline_mode = #tpu.pipeline_mode<synchronous>, transform_indices = @transform_7, window_bounds = array<i64: 4, 1>}, {pipeline_mode = #tpu.pipeline_mode<synchronous>, transform_indices = @transform_8, window_bounds = array<i64: 4, 25>}, {pipeline_mode = #tpu.pipeline_mode<synchronous>, transform_indices = @transform_9, window_bounds = array<i64: 4, 1>}, {transform_indices = @transform_10, window_bounds = array<i64: 1, 8, 256>}]} {
    %c0 = arith.constant 0 : index
    %c0_0 = arith.constant 0 : index
    %c0_1 = arith.constant 0 : index
    %0 = vector.load %arg1[%c0, %c0_0, %c0_1] : memref<1x8x256xf32, #tpu.memory_space<vmem>>, vector<1x8x256xf32>
    %1 = vector.shape_cast %0 : vector<1x8x256xf32> to vector<8x256xf32>
    %c0_2 = arith.constant 0 : index
    %c0_3 = arith.constant 0 : index
    %2 = vector.load %arg2[%c0_2, %c0_3] : memref<2x8xf32, #tpu.memory_space<vmem>>, vector<2x8xf32>
    %cst = arith.constant dense<0.000000e+00> : vector<2x256xf32>
    %3 = tpu.matmul %2, %1, %cst {dimension_numbers = #tpu.dot_dimension_numbers<[1], [0], [0], [1], [0, 0, 1, 1], [], []>} : vector<2x8xf32>, vector<8x256xf32>, vector<2x256xf32> -> vector<2x256xf32>
    %c0_4 = arith.constant 0 : index
    %c0_5 = arith.constant 0 : index
    %4 = vector.load %arg3[%c0_4, %c0_5] : memref<2x1xf32, #tpu.memory_space<vmem>>, vector<2x1xf32>
    %5 = vector.broadcast %4 : vector<2x1xf32> to vector<2x256xf32>
    %6 = arith.addf %3, %5 : vector<2x256xf32>
    %cst_6 = arith.constant 0.000000e+00 : f32
    %7 = vector.broadcast %cst_6 : f32 to vector<2x256xf32>
    %8 = arith.maximumf %6, %7 : vector<2x256xf32>
    %9 = math.absf %6 : vector<2x256xf32>
    %cst_7 = arith.constant 0.000000e+00 : f32
    %10 = vector.broadcast %cst_7 : f32 to vector<2x256xf32>
    %11 = arith.subf %10, %9 : vector<2x256xf32>
    %12 = math.exp %11 : vector<2x256xf32>
    %cst_8 = arith.constant 1.000000e+00 : f32
    %13 = vector.broadcast %cst_8 : f32 to vector<2x256xf32>
    %14 = arith.addf %13, %12 : vector<2x256xf32>
    %15 = math.log %14 : vector<2x256xf32>
    %16 = arith.addf %8, %15 : vector<2x256xf32>
    %17 = math.tanh %16 : vector<2x256xf32>
    %18 = arith.mulf %6, %17 : vector<2x256xf32>
    %c0_9 = arith.constant 0 : index
    %c0_10 = arith.constant 0 : index
    %19 = vector.load %arg4[%c0_9, %c0_10] : memref<2x25xf32, #tpu.memory_space<vmem>>, vector<2x25xf32>
    %c0_11 = arith.constant 0 : index
    %c0_12 = arith.constant 0 : index
    %20 = vector.load %arg5[%c0_11, %c0_12] : memref<2x1xf32, #tpu.memory_space<vmem>>, vector<2x1xf32>
    %cst_13 = arith.constant 0.000000e+00 : f32
    %21 = vector.broadcast %cst_13 : f32 to vector<2x512xf32>
    %c0_14 = arith.constant 0 : index
    %c0_15 = arith.constant 0 : index
    %22 = vector.load %arg12[%c0_14, %c0_15] : memref<2x512xf32, #tpu.memory_space<vmem>>, vector<2x512xf32>
    tpu.vector_store %arg12[%c0_14, %c0_15], %21 {strides = array<i32>} : memref<2x512xf32, #tpu.memory_space<vmem>>, vector<2x512xf32>,
    %c0_16 = arith.constant 0 : index
    %c128 = arith.constant 128 : index
    %23 = vector.load %arg12[%c0_16, %c128] : memref<2x512xf32, #tpu.memory_space<vmem>>, vector<2x256xf32>
    tpu.vector_store %arg12[%c0_16, %c128], %18 {strides = array<i32>} : memref<2x512xf32, #tpu.memory_space<vmem>>, vector<2x256xf32>,
    %24 = tpu.iota {dimensions = array<i32: 1>} : vector<2x256xi32>
    %c16_i32 = arith.constant 16 : i32
    %c0_i32 = arith.constant 0 : i32
    %25 = arith.cmpi eq, %c16_i32, %c0_i32 : i32
    %c1_i32 = arith.constant 1 : i32
    %26 = arith.select %25, %c1_i32, %c16_i32 : i32
    %27 = vector.broadcast %26 : i32 to vector<2x256xi32>
    %28 = arith.remsi %24, %27 : vector<2x256xi32>
    %c0_i32_17 = arith.constant 0 : i32
    %29 = vector.broadcast %c0_i32_17 : i32 to vector<2x256xi32>
    %30 = arith.cmpi ne, %28, %29 : vector<2x256xi32>
    %c0_i32_18 = arith.constant 0 : i32
    %31 = vector.broadcast %c0_i32_18 : i32 to vector<2x256xi32>
    %32 = arith.cmpi slt, %28, %31 : vector<2x256xi32>
    %c0_i32_19 = arith.constant 0 : i32
    %33 = arith.cmpi slt, %26, %c0_i32_19 : i32
    %34 = vector.broadcast %33 : i1 to vector<2x256xi1>
    %35 = vector.broadcast %34 : vector<2x256xi1> to vector<2x256xi1>
    %36 = arith.xori %32, %35 : vector<2x256xi1>
    %37 = arith.andi %36, %30 : vector<2x256xi1>
    %38 = vector.broadcast %26 : i32 to vector<2x256xi32>
    %39 = arith.addi %28, %38 : vector<2x256xi32>
    %40 = arith.select %37, %39, %28 : vector<2x256xi1>, vector<2x256xi32>
    %cst_20 = arith.constant 0.000000e+00 : f32
    %41 = vector.broadcast %cst_20 : f32 to vector<2x256xf32>
    %c0_21 = arith.constant 0 : index
    %c94 = arith.constant 94 : index
    %42 = vector.load %arg12[%c0_21, %c94] : memref<2x512xf32, #tpu.memory_space<vmem>>, vector<2x256xf32>
    %c-2_i32 = arith.constant -2 : i32
    %43 = vector.broadcast %c-2_i32 : i32 to vector<2x256xi32>
    %44 = arith.addi %40, %43 : vector<2x256xi32>
    %c0_i32_22 = arith.constant 0 : i32
    %45 = vector.broadcast %c0_i32_22 : i32 to vector<2x256xi32>
    %46 = arith.cmpi sge, %44, %45 : vector<2x256xi32>
    %c-2_i32_23 = arith.constant -2 : i32
    %47 = vector.broadcast %c-2_i32_23 : i32 to vector<2x256xi32>
    %48 = arith.addi %40, %47 : vector<2x256xi32>
    %c16_i32_24 = arith.constant 16 : i32
    %49 = vector.broadcast %c16_i32_24 : i32 to vector<2x256xi32>
    %50 = arith.cmpi slt, %48, %49 : vector<2x256xi32>
    %51 = arith.andi %46, %50 : vector<2x256xi1>
    %cst_25 = arith.constant 0.000000e+00 : f32
    %52 = vector.broadcast %cst_25 : f32 to vector<2x256xf32>
    %53 = arith.select %51, %42, %52 : vector<2x256xi1>, vector<2x256xf32>
    %54 = vector.extract_strided_slice %19 {offsets = [0, 0], sizes = [2, 1], strides = [1, 1]} : vector<2x25xf32> to vector<2x1xf32>
    %55 = vector.broadcast %54 : vector<2x1xf32> to vector<2x256xf32>
    %56 = arith.mulf %53, %55 : vector<2x256xf32>
    %57 = arith.addf %41, %56 : vector<2x256xf32>
    %c0_26 = arith.constant 0 : index
    %c95 = arith.constant 95 : index
    %58 = vector.load %arg12[%c0_26, %c95] : memref<2x512xf32, #tpu.memory_space<vmem>>, vector<2x256xf32>
    %c-1_i32 = arith.constant -1 : i32
    %59 = vector.broadcast %c-1_i32 : i32 to vector<2x256xi32>
    %60 = arith.addi %40, %59 : vector<2x256xi32>
    %c0_i32_27 = arith.constant 0 : i32
    %61 = vector.broadcast %c0_i32_27 : i32 to vector<2x256xi32>
    %62 = arith.cmpi sge, %60, %61 : vector<2x256xi32>
    %c-1_i32_28 = arith.constant -1 : i32
    %63 = vector.broadcast %c-1_i32_28 : i32 to vector<2x256xi32>
    %64 = arith.addi %40, %63 : vector<2x256xi32>
    %c16_i32_29 = arith.constant 16 : i32
    %65 = vector.broadcast %c16_i32_29 : i32 to vector<2x256xi32>
    %66 = arith.cmpi slt, %64, %65 : vector<2x256xi32>
    %67 = arith.andi %62, %66 : vector<2x256xi1>
    %cst_30 = arith.constant 0.000000e+00 : f32
    %68 = vector.broadcast %cst_30 : f32 to vector<2x256xf32>
    %69 = arith.select %67, %58, %68 : vector<2x256xi1>, vector<2x256xf32>
    %70 = vector.extract_strided_slice %19 {offsets = [0, 1], sizes = [2, 1], strides = [1, 1]} : vector<2x25xf32> to vector<2x1xf32>
    %71 = vector.broadcast %70 : vector<2x1xf32> to vector<2x256xf32>
    %72 = arith.mulf %69, %71 : vector<2x256xf32>
    %73 = arith.addf %57, %72 : vector<2x256xf32>
    %c0_31 = arith.constant 0 : index
    %c96 = arith.constant 96 : index
    %74 = vector.load %arg12[%c0_31, %c96] : memref<2x512xf32, #tpu.memory_space<vmem>>, vector<2x256xf32>
    %c0_i32_32 = arith.constant 0 : i32
    %75 = vector.broadcast %c0_i32_32 : i32 to vector<2x256xi32>
    %76 = arith.addi %40, %75 : vector<2x256xi32>
    %c0_i32_33 = arith.constant 0 : i32
    %77 = vector.broadcast %c0_i32_33 : i32 to vector<2x256xi32>
    %78 = arith.cmpi sge, %76, %77 : vector<2x256xi32>
    %c0_i32_34 = arith.constant 0 : i32
    %79 = vector.broadcast %c0_i32_34 : i32 to vector<2x256xi32>
    %80 = arith.addi %40, %79 : vector<2x256xi32>
    %c16_i32_35 = arith.constant 16 : i32
    %81 = vector.broadcast %c16_i32_35 : i32 to vector<2x256xi32>
    %82 = arith.cmpi slt, %80, %81 : vector<2x256xi32>
    %83 = arith.andi %78, %82 : vector<2x256xi1>
    %cst_36 = arith.constant 0.000000e+00 : f32
    %84 = vector.broadcast %cst_36 : f32 to vector<2x256xf32>
    %85 = arith.select %83, %74, %84 : vector<2x256xi1>, vector<2x256xf32>
    %86 = vector.extract_strided_slice %19 {offsets = [0, 2], sizes = [2, 1], strides = [1, 1]} : vector<2x25xf32> to vector<2x1xf32>
    %87 = vector.broadcast %86 : vector<2x1xf32> to vector<2x256xf32>
    %88 = arith.mulf %85, %87 : vector<2x256xf32>
    %89 = arith.addf %73, %88 : vector<2x256xf32>
    %c0_37 = arith.constant 0 : index
    %c97 = arith.constant 97 : index
    %90 = vector.load %arg12[%c0_37, %c97] : memref<2x512xf32, #tpu.memory_space<vmem>>, vector<2x256xf32>
    %c1_i32_38 = arith.constant 1 : i32
    %91 = vector.broadcast %c1_i32_38 : i32 to vector<2x256xi32>
    %92 = arith.addi %40, %91 : vector<2x256xi32>
    %c0_i32_39 = arith.constant 0 : i32
    %93 = vector.broadcast %c0_i32_39 : i32 to vector<2x256xi32>
    %94 = arith.cmpi sge, %92, %93 : vector<2x256xi32>
    %c1_i32_40 = arith.constant 1 : i32
    %95 = vector.broadcast %c1_i32_40 : i32 to vector<2x256xi32>
    %96 = arith.addi %40, %95 : vector<2x256xi32>
    %c16_i32_41 = arith.constant 16 : i32
    %97 = vector.broadcast %c16_i32_41 : i32 to vector<2x256xi32>
    %98 = arith.cmpi slt, %96, %97 : vector<2x256xi32>
    %99 = arith.andi %94, %98 : vector<2x256xi1>
    %cst_42 = arith.constant 0.000000e+00 : f32
    %100 = vector.broadcast %cst_42 : f32 to vector<2x256xf32>
    %101 = arith.select %99, %90, %100 : vector<2x256xi1>, vector<2x256xf32>
    %102 = vector.extract_strided_slice %19 {offsets = [0, 3], sizes = [2, 1], strides = [1, 1]} : vector<2x25xf32> to vector<2x1xf32>
    %103 = vector.broadcast %102 : vector<2x1xf32> to vector<2x256xf32>
    %104 = arith.mulf %101, %103 : vector<2x256xf32>
    %105 = arith.addf %89, %104 : vector<2x256xf32>
    %c0_43 = arith.constant 0 : index
    %c98 = arith.constant 98 : index
    %106 = vector.load %arg12[%c0_43, %c98] : memref<2x512xf32, #tpu.memory_space<vmem>>, vector<2x256xf32>
    %c2_i32 = arith.constant 2 : i32
    %107 = vector.broadcast %c2_i32 : i32 to vector<2x256xi32>
    %108 = arith.addi %40, %107 : vector<2x256xi32>
    %c0_i32_44 = arith.constant 0 : i32
    %109 = vector.broadcast %c0_i32_44 : i32 to vector<2x256xi32>
    %110 = arith.cmpi sge, %108, %109 : vector<2x256xi32>
    %c2_i32_45 = arith.constant 2 : i32
    %111 = vector.broadcast %c2_i32_45 : i32 to vector<2x256xi32>
    %112 = arith.addi %40, %111 : vector<2x256xi32>
    %c16_i32_46 = arith.constant 16 : i32
    %113 = vector.broadcast %c16_i32_46 : i32 to vector<2x256xi32>
    %114 = arith.cmpi slt, %112, %113 : vector<2x256xi32>
    %115 = arith.andi %110, %114 : vector<2x256xi1>
    %cst_47 = arith.constant 0.000000e+00 : f32
    %116 = vector.broadcast %cst_47 : f32 to vector<2x256xf32>
    %117 = arith.select %115, %106, %116 : vector<2x256xi1>, vector<2x256xf32>
    %118 = vector.extract_strided_slice %19 {offsets = [0, 4], sizes = [2, 1], strides = [1, 1]} : vector<2x25xf32> to vector<2x1xf32>
    %119 = vector.broadcast %118 : vector<2x1xf32> to vector<2x256xf32>
    %120 = arith.mulf %117, %119 : vector<2x256xf32>
    %121 = arith.addf %105, %120 : vector<2x256xf32>
    %c0_48 = arith.constant 0 : index
    %c110 = arith.constant 110 : index
    %122 = vector.load %arg12[%c0_48, %c110] : memref<2x512xf32, #tpu.memory_space<vmem>>, vector<2x256xf32>
    %c-2_i32_49 = arith.constant -2 : i32
    %123 = vector.broadcast %c-2_i32_49 : i32 to vector<2x256xi32>
    %124 = arith.addi %40, %123 : vector<2x256xi32>
    %c0_i32_50 = arith.constant 0 : i32
    %125 = vector.broadcast %c0_i32_50 : i32 to vector<2x256xi32>
    %126 = arith.cmpi sge, %124, %125 : vector<2x256xi32>
    %c-2_i32_51 = arith.constant -2 : i32
    %127 = vector.broadcast %c-2_i32_51 : i32 to vector<2x256xi32>
    %128 = arith.addi %40, %127 : vector<2x256xi32>
    %c16_i32_52 = arith.constant 16 : i32
    %129 = vector.broadcast %c16_i32_52 : i32 to vector<2x256xi32>
    %130 = arith.cmpi slt, %128, %129 : vector<2x256xi32>
    %131 = arith.andi %126, %130 : vector<2x256xi1>
    %cst_53 = arith.constant 0.000000e+00 : f32
    %132 = vector.broadcast %cst_53 : f32 to vector<2x256xf32>
    %133 = arith.select %131, %122, %132 : vector<2x256xi1>, vector<2x256xf32>
    %134 = vector.extract_strided_slice %19 {offsets = [0, 5], sizes = [2, 1], strides = [1, 1]} : vector<2x25xf32> to vector<2x1xf32>
    %135 = vector.broadcast %134 : vector<2x1xf32> to vector<2x256xf32>
    %136 = arith.mulf %133, %135 : vector<2x256xf32>
    %137 = arith.addf %121, %136 : vector<2x256xf32>
    %c0_54 = arith.constant 0 : index
    %c111 = arith.constant 111 : index
    %138 = vector.load %arg12[%c0_54, %c111] : memref<2x512xf32, #tpu.memory_space<vmem>>, vector<2x256xf32>
    %c-1_i32_55 = arith.constant -1 : i32
    %139 = vector.broadcast %c-1_i32_55 : i32 to vector<2x256xi32>
    %140 = arith.addi %40, %139 : vector<2x256xi32>
    %c0_i32_56 = arith.constant 0 : i32
    %141 = vector.broadcast %c0_i32_56 : i32 to vector<2x256xi32>
    %142 = arith.cmpi sge, %140, %141 : vector<2x256xi32>
    %c-1_i32_57 = arith.constant -1 : i32
    %143 = vector.broadcast %c-1_i32_57 : i32 to vector<2x256xi32>
    %144 = arith.addi %40, %143 : vector<2x256xi32>
    %c16_i32_58 = arith.constant 16 : i32
    %145 = vector.broadcast %c16_i32_58 : i32 to vector<2x256xi32>
    %146 = arith.cmpi slt, %144, %145 : vector<2x256xi32>
    %147 = arith.andi %142, %146 : vector<2x256xi1>
    %cst_59 = arith.constant 0.000000e+00 : f32
    %148 = vector.broadcast %cst_59 : f32 to vector<2x256xf32>
    %149 = arith.select %147, %138, %148 : vector<2x256xi1>, vector<2x256xf32>
    %150 = vector.extract_strided_slice %19 {offsets = [0, 6], sizes = [2, 1], strides = [1, 1]} : vector<2x25xf32> to vector<2x1xf32>
    %151 = vector.broadcast %150 : vector<2x1xf32> to vector<2x256xf32>
    %152 = arith.mulf %149, %151 : vector<2x256xf32>
    %153 = arith.addf %137, %152 : vector<2x256xf32>
    %c0_60 = arith.constant 0 : index
    %c112 = arith.constant 112 : index
    %154 = vector.load %arg12[%c0_60, %c112] : memref<2x512xf32, #tpu.memory_space<vmem>>, vector<2x256xf32>
    %c0_i32_61 = arith.constant 0 : i32
    %155 = vector.broadcast %c0_i32_61 : i32 to vector<2x256xi32>
    %156 = arith.addi %40, %155 : vector<2x256xi32>
    %c0_i32_62 = arith.constant 0 : i32
    %157 = vector.broadcast %c0_i32_62 : i32 to vector<2x256xi32>
    %158 = arith.cmpi sge, %156, %157 : vector<2x256xi32>
    %c0_i32_63 = arith.constant 0 : i32
    %159 = vector.broadcast %c0_i32_63 : i32 to vector<2x256xi32>
    %160 = arith.addi %40, %159 : vector<2x256xi32>
    %c16_i32_64 = arith.constant 16 : i32
    %161 = vector.broadcast %c16_i32_64 : i32 to vector<2x256xi32>
    %162 = arith.cmpi slt, %160, %161 : vector<2x256xi32>
    %163 = arith.andi %158, %162 : vector<2x256xi1>
    %cst_65 = arith.constant 0.000000e+00 : f32
    %164 = vector.broadcast %cst_65 : f32 to vector<2x256xf32>
    %165 = arith.select %163, %154, %164 : vector<2x256xi1>, vector<2x256xf32>
    %166 = vector.extract_strided_slice %19 {offsets = [0, 7], sizes = [2, 1], strides = [1, 1]} : vector<2x25xf32> to vector<2x1xf32>
    %167 = vector.broadcast %166 : vector<2x1xf32> to vector<2x256xf32>
    %168 = arith.mulf %165, %167 : vector<2x256xf32>
    %169 = arith.addf %153, %168 : vector<2x256xf32>
    %c0_66 = arith.constant 0 : index
    %c113 = arith.constant 113 : index
    %170 = vector.load %arg12[%c0_66, %c113] : memref<2x512xf32, #tpu.memory_space<vmem>>, vector<2x256xf32>
    %c1_i32_67 = arith.constant 1 : i32
    %171 = vector.broadcast %c1_i32_67 : i32 to vector<2x256xi32>
    %172 = arith.addi %40, %171 : vector<2x256xi32>
    %c0_i32_68 = arith.constant 0 : i32
    %173 = vector.broadcast %c0_i32_68 : i32 to vector<2x256xi32>
    %174 = arith.cmpi sge, %172, %173 : vector<2x256xi32>
    %c1_i32_69 = arith.constant 1 : i32
    %175 = vector.broadcast %c1_i32_69 : i32 to vector<2x256xi32>
    %176 = arith.addi %40, %175 : vector<2x256xi32>
    %c16_i32_70 = arith.constant 16 : i32
    %177 = vector.broadcast %c16_i32_70 : i32 to vector<2x256xi32>
    %178 = arith.cmpi slt, %176, %177 : vector<2x256xi32>
    %179 = arith.andi %174, %178 : vector<2x256xi1>
    %cst_71 = arith.constant 0.000000e+00 : f32
    %180 = vector.broadcast %cst_71 : f32 to vector<2x256xf32>
    %181 = arith.select %179, %170, %180 : vector<2x256xi1>, vector<2x256xf32>
    %182 = vector.extract_strided_slice %19 {offsets = [0, 8], sizes = [2, 1], strides = [1, 1]} : vector<2x25xf32> to vector<2x1xf32>
    %183 = vector.broadcast %182 : vector<2x1xf32> to vector<2x256xf32>
    %184 = arith.mulf %181, %183 : vector<2x256xf32>
    %185 = arith.addf %169, %184 : vector<2x256xf32>
    %c0_72 = arith.constant 0 : index
    %c114 = arith.constant 114 : index
    %186 = vector.load %arg12[%c0_72, %c114] : memref<2x512xf32, #tpu.memory_space<vmem>>, vector<2x256xf32>
    %c2_i32_73 = arith.constant 2 : i32
    %187 = vector.broadcast %c2_i32_73 : i32 to vector<2x256xi32>
    %188 = arith.addi %40, %187 : vector<2x256xi32>
    %c0_i32_74 = arith.constant 0 : i32
    %189 = vector.broadcast %c0_i32_74 : i32 to vector<2x256xi32>
    %190 = arith.cmpi sge, %188, %189 : vector<2x256xi32>
    %c2_i32_75 = arith.constant 2 : i32
    %191 = vector.broadcast %c2_i32_75 : i32 to vector<2x256xi32>
    %192 = arith.addi %40, %191 : vector<2x256xi32>
    %c16_i32_76 = arith.constant 16 : i32
    %193 = vector.broadcast %c16_i32_76 : i32 to vector<2x256xi32>
    %194 = arith.cmpi slt, %192, %193 : vector<2x256xi32>
    %195 = arith.andi %190, %194 : vector<2x256xi1>
    %cst_77 = arith.constant 0.000000e+00 : f32
    %196 = vector.broadcast %cst_77 : f32 to vector<2x256xf32>
    %197 = arith.select %195, %186, %196 : vector<2x256xi1>, vector<2x256xf32>
    %198 = vector.extract_strided_slice %19 {offsets = [0, 9], sizes = [2, 1], strides = [1, 1]} : vector<2x25xf32> to vector<2x1xf32>
    %199 = vector.broadcast %198 : vector<2x1xf32> to vector<2x256xf32>
    %200 = arith.mulf %197, %199 : vector<2x256xf32>
    %201 = arith.addf %185, %200 : vector<2x256xf32>
    %c0_78 = arith.constant 0 : index
    %c126 = arith.constant 126 : index
    %202 = vector.load %arg12[%c0_78, %c126] : memref<2x512xf32, #tpu.memory_space<vmem>>, vector<2x256xf32>
    %c-2_i32_79 = arith.constant -2 : i32
    %203 = vector.broadcast %c-2_i32_79 : i32 to vector<2x256xi32>
    %204 = arith.addi %40, %203 : vector<2x256xi32>
    %c0_i32_80 = arith.constant 0 : i32
    %205 = vector.broadcast %c0_i32_80 : i32 to vector<2x256xi32>
    %206 = arith.cmpi sge, %204, %205 : vector<2x256xi32>
    %c-2_i32_81 = arith.constant -2 : i32
    %207 = vector.broadcast %c-2_i32_81 : i32 to vector<2x256xi32>
    %208 = arith.addi %40, %207 : vector<2x256xi32>
    %c16_i32_82 = arith.constant 16 : i32
    %209 = vector.broadcast %c16_i32_82 : i32 to vector<2x256xi32>
    %210 = arith.cmpi slt, %208, %209 : vector<2x256xi32>
    %211 = arith.andi %206, %210 : vector<2x256xi1>
    %cst_83 = arith.constant 0.000000e+00 : f32
    %212 = vector.broadcast %cst_83 : f32 to vector<2x256xf32>
    %213 = arith.select %211, %202, %212 : vector<2x256xi1>, vector<2x256xf32>
    %214 = vector.extract_strided_slice %19 {offsets = [0, 10], sizes = [2, 1], strides = [1, 1]} : vector<2x25xf32> to vector<2x1xf32>
    %215 = vector.broadcast %214 : vector<2x1xf32> to vector<2x256xf32>
    %216 = arith.mulf %213, %215 : vector<2x256xf32>
    %217 = arith.addf %201, %216 : vector<2x256xf32>
    %c0_84 = arith.constant 0 : index
    %c127 = arith.constant 127 : index
    %218 = vector.load %arg12[%c0_84, %c127] : memref<2x512xf32, #tpu.memory_space<vmem>>, vector<2x256xf32>
    %c-1_i32_85 = arith.constant -1 : i32
    %219 = vector.broadcast %c-1_i32_85 : i32 to vector<2x256xi32>
    %220 = arith.addi %40, %219 : vector<2x256xi32>
    %c0_i32_86 = arith.constant 0 : i32
    %221 = vector.broadcast %c0_i32_86 : i32 to vector<2x256xi32>
    %222 = arith.cmpi sge, %220, %221 : vector<2x256xi32>
    %c-1_i32_87 = arith.constant -1 : i32
    %223 = vector.broadcast %c-1_i32_87 : i32 to vector<2x256xi32>
    %224 = arith.addi %40, %223 : vector<2x256xi32>
    %c16_i32_88 = arith.constant 16 : i32
    %225 = vector.broadcast %c16_i32_88 : i32 to vector<2x256xi32>
    %226 = arith.cmpi slt, %224, %225 : vector<2x256xi32>
    %227 = arith.andi %222, %226 : vector<2x256xi1>
    %cst_89 = arith.constant 0.000000e+00 : f32
    %228 = vector.broadcast %cst_89 : f32 to vector<2x256xf32>
    %229 = arith.select %227, %218, %228 : vector<2x256xi1>, vector<2x256xf32>
    %230 = vector.extract_strided_slice %19 {offsets = [0, 11], sizes = [2, 1], strides = [1, 1]} : vector<2x25xf32> to vector<2x1xf32>
    %231 = vector.broadcast %230 : vector<2x1xf32> to vector<2x256xf32>
    %232 = arith.mulf %229, %231 : vector<2x256xf32>
    %233 = arith.addf %217, %232 : vector<2x256xf32>
    %c0_90 = arith.constant 0 : index
    %c128_91 = arith.constant 128 : index
    %234 = vector.load %arg12[%c0_90, %c128_91] : memref<2x512xf32, #tpu.memory_space<vmem>>, vector<2x256xf32>
    %c0_i32_92 = arith.constant 0 : i32
    %235 = vector.broadcast %c0_i32_92 : i32 to vector<2x256xi32>
    %236 = arith.addi %40, %235 : vector<2x256xi32>
    %c0_i32_93 = arith.constant 0 : i32
    %237 = vector.broadcast %c0_i32_93 : i32 to vector<2x256xi32>
    %238 = arith.cmpi sge, %236, %237 : vector<2x256xi32>
    %c0_i32_94 = arith.constant 0 : i32
    %239 = vector.broadcast %c0_i32_94 : i32 to vector<2x256xi32>
    %240 = arith.addi %40, %239 : vector<2x256xi32>
    %c16_i32_95 = arith.constant 16 : i32
    %241 = vector.broadcast %c16_i32_95 : i32 to vector<2x256xi32>
    %242 = arith.cmpi slt, %240, %241 : vector<2x256xi32>
    %243 = arith.andi %238, %242 : vector<2x256xi1>
    %cst_96 = arith.constant 0.000000e+00 : f32
    %244 = vector.broadcast %cst_96 : f32 to vector<2x256xf32>
    %245 = arith.select %243, %234, %244 : vector<2x256xi1>, vector<2x256xf32>
    %246 = vector.extract_strided_slice %19 {offsets = [0, 12], sizes = [2, 1], strides = [1, 1]} : vector<2x25xf32> to vector<2x1xf32>
    %247 = vector.broadcast %246 : vector<2x1xf32> to vector<2x256xf32>
    %248 = arith.mulf %245, %247 : vector<2x256xf32>
    %249 = arith.addf %233, %248 : vector<2x256xf32>
    %c0_97 = arith.constant 0 : index
    %c129 = arith.constant 129 : index
    %250 = vector.load %arg12[%c0_97, %c129] : memref<2x512xf32, #tpu.memory_space<vmem>>, vector<2x256xf32>
    %c1_i32_98 = arith.constant 1 : i32
    %251 = vector.broadcast %c1_i32_98 : i32 to vector<2x256xi32>
    %252 = arith.addi %40, %251 : vector<2x256xi32>
    %c0_i32_99 = arith.constant 0 : i32
    %253 = vector.broadcast %c0_i32_99 : i32 to vector<2x256xi32>
    %254 = arith.cmpi sge, %252, %253 : vector<2x256xi32>
    %c1_i32_100 = arith.constant 1 : i32
    %255 = vector.broadcast %c1_i32_100 : i32 to vector<2x256xi32>
    %256 = arith.addi %40, %255 : vector<2x256xi32>
    %c16_i32_101 = arith.constant 16 : i32
    %257 = vector.broadcast %c16_i32_101 : i32 to vector<2x256xi32>
    %258 = arith.cmpi slt, %256, %257 : vector<2x256xi32>
    %259 = arith.andi %254, %258 : vector<2x256xi1>
    %cst_102 = arith.constant 0.000000e+00 : f32
    %260 = vector.broadcast %cst_102 : f32 to vector<2x256xf32>
    %261 = arith.select %259, %250, %260 : vector<2x256xi1>, vector<2x256xf32>
    %262 = vector.extract_strided_slice %19 {offsets = [0, 13], sizes = [2, 1], strides = [1, 1]} : vector<2x25xf32> to vector<2x1xf32>
    %263 = vector.broadcast %262 : vector<2x1xf32> to vector<2x256xf32>
    %264 = arith.mulf %261, %263 : vector<2x256xf32>
    %265 = arith.addf %249, %264 : vector<2x256xf32>
    %c0_103 = arith.constant 0 : index
    %c130 = arith.constant 130 : index
    %266 = vector.load %arg12[%c0_103, %c130] : memref<2x512xf32, #tpu.memory_space<vmem>>, vector<2x256xf32>
    %c2_i32_104 = arith.constant 2 : i32
    %267 = vector.broadcast %c2_i32_104 : i32 to vector<2x256xi32>
    %268 = arith.addi %40, %267 : vector<2x256xi32>
    %c0_i32_105 = arith.constant 0 : i32
    %269 = vector.broadcast %c0_i32_105 : i32 to vector<2x256xi32>
    %270 = arith.cmpi sge, %268, %269 : vector<2x256xi32>
    %c2_i32_106 = arith.constant 2 : i32
    %271 = vector.broadcast %c2_i32_106 : i32 to vector<2x256xi32>
    %272 = arith.addi %40, %271 : vector<2x256xi32>
    %c16_i32_107 = arith.constant 16 : i32
    %273 = vector.broadcast %c16_i32_107 : i32 to vector<2x256xi32>
    %274 = arith.cmpi slt, %272, %273 : vector<2x256xi32>
    %275 = arith.andi %270, %274 : vector<2x256xi1>
    %cst_108 = arith.constant 0.000000e+00 : f32
    %276 = vector.broadcast %cst_108 : f32 to vector<2x256xf32>
    %277 = arith.select %275, %266, %276 : vector<2x256xi1>, vector<2x256xf32>
    %278 = vector.extract_strided_slice %19 {offsets = [0, 14], sizes = [2, 1], strides = [1, 1]} : vector<2x25xf32> to vector<2x1xf32>
    %279 = vector.broadcast %278 : vector<2x1xf32> to vector<2x256xf32>
    %280 = arith.mulf %277, %279 : vector<2x256xf32>
    %281 = arith.addf %265, %280 : vector<2x256xf32>
    %c0_109 = arith.constant 0 : index
    %c142 = arith.constant 142 : index
    %282 = vector.load %arg12[%c0_109, %c142] : memref<2x512xf32, #tpu.memory_space<vmem>>, vector<2x256xf32>
    %c-2_i32_110 = arith.constant -2 : i32
    %283 = vector.broadcast %c-2_i32_110 : i32 to vector<2x256xi32>
    %284 = arith.addi %40, %283 : vector<2x256xi32>
    %c0_i32_111 = arith.constant 0 : i32
    %285 = vector.broadcast %c0_i32_111 : i32 to vector<2x256xi32>
    %286 = arith.cmpi sge, %284, %285 : vector<2x256xi32>
    %c-2_i32_112 = arith.constant -2 : i32
    %287 = vector.broadcast %c-2_i32_112 : i32 to vector<2x256xi32>
    %288 = arith.addi %40, %287 : vector<2x256xi32>
    %c16_i32_113 = arith.constant 16 : i32
    %289 = vector.broadcast %c16_i32_113 : i32 to vector<2x256xi32>
    %290 = arith.cmpi slt, %288, %289 : vector<2x256xi32>
    %291 = arith.andi %286, %290 : vector<2x256xi1>
    %cst_114 = arith.constant 0.000000e+00 : f32
    %292 = vector.broadcast %cst_114 : f32 to vector<2x256xf32>
    %293 = arith.select %291, %282, %292 : vector<2x256xi1>, vector<2x256xf32>
    %294 = vector.extract_strided_slice %19 {offsets = [0, 15], sizes = [2, 1], strides = [1, 1]} : vector<2x25xf32> to vector<2x1xf32>
    %295 = vector.broadcast %294 : vector<2x1xf32> to vector<2x256xf32>
    %296 = arith.mulf %293, %295 : vector<2x256xf32>
    %297 = arith.addf %281, %296 : vector<2x256xf32>
    %c0_115 = arith.constant 0 : index
    %c143 = arith.constant 143 : index
    %298 = vector.load %arg12[%c0_115, %c143] : memref<2x512xf32, #tpu.memory_space<vmem>>, vector<2x256xf32>
    %c-1_i32_116 = arith.constant -1 : i32
    %299 = vector.broadcast %c-1_i32_116 : i32 to vector<2x256xi32>
    %300 = arith.addi %40, %299 : vector<2x256xi32>
    %c0_i32_117 = arith.constant 0 : i32
    %301 = vector.broadcast %c0_i32_117 : i32 to vector<2x256xi32>
    %302 = arith.cmpi sge, %300, %301 : vector<2x256xi32>
    %c-1_i32_118 = arith.constant -1 : i32
    %303 = vector.broadcast %c-1_i32_118 : i32 to vector<2x256xi32>
    %304 = arith.addi %40, %303 : vector<2x256xi32>
    %c16_i32_119 = arith.constant 16 : i32
    %305 = vector.broadcast %c16_i32_119 : i32 to vector<2x256xi32>
    %306 = arith.cmpi slt, %304, %305 : vector<2x256xi32>
    %307 = arith.andi %302, %306 : vector<2x256xi1>
    %cst_120 = arith.constant 0.000000e+00 : f32
    %308 = vector.broadcast %cst_120 : f32 to vector<2x256xf32>
    %309 = arith.select %307, %298, %308 : vector<2x256xi1>, vector<2x256xf32>
    %310 = vector.extract_strided_slice %19 {offsets = [0, 16], sizes = [2, 1], strides = [1, 1]} : vector<2x25xf32> to vector<2x1xf32>
    %311 = vector.broadcast %310 : vector<2x1xf32> to vector<2x256xf32>
    %312 = arith.mulf %309, %311 : vector<2x256xf32>
    %313 = arith.addf %297, %312 : vector<2x256xf32>
    %c0_121 = arith.constant 0 : index
    %c144 = arith.constant 144 : index
    %314 = vector.load %arg12[%c0_121, %c144] : memref<2x512xf32, #tpu.memory_space<vmem>>, vector<2x256xf32>
    %c0_i32_122 = arith.constant 0 : i32
    %315 = vector.broadcast %c0_i32_122 : i32 to vector<2x256xi32>
    %316 = arith.addi %40, %315 : vector<2x256xi32>
    %c0_i32_123 = arith.constant 0 : i32
    %317 = vector.broadcast %c0_i32_123 : i32 to vector<2x256xi32>
    %318 = arith.cmpi sge, %316, %317 : vector<2x256xi32>
    %c0_i32_124 = arith.constant 0 : i32
    %319 = vector.broadcast %c0_i32_124 : i32 to vector<2x256xi32>
    %320 = arith.addi %40, %319 : vector<2x256xi32>
    %c16_i32_125 = arith.constant 16 : i32
    %321 = vector.broadcast %c16_i32_125 : i32 to vector<2x256xi32>
    %322 = arith.cmpi slt, %320, %321 : vector<2x256xi32>
    %323 = arith.andi %318, %322 : vector<2x256xi1>
    %cst_126 = arith.constant 0.000000e+00 : f32
    %324 = vector.broadcast %cst_126 : f32 to vector<2x256xf32>
    %325 = arith.select %323, %314, %324 : vector<2x256xi1>, vector<2x256xf32>
    %326 = vector.extract_strided_slice %19 {offsets = [0, 17], sizes = [2, 1], strides = [1, 1]} : vector<2x25xf32> to vector<2x1xf32>
    %327 = vector.broadcast %326 : vector<2x1xf32> to vector<2x256xf32>
    %328 = arith.mulf %325, %327 : vector<2x256xf32>
    %329 = arith.addf %313, %328 : vector<2x256xf32>
    %c0_127 = arith.constant 0 : index
    %c145 = arith.constant 145 : index
    %330 = vector.load %arg12[%c0_127, %c145] : memref<2x512xf32, #tpu.memory_space<vmem>>, vector<2x256xf32>
    %c1_i32_128 = arith.constant 1 : i32
    %331 = vector.broadcast %c1_i32_128 : i32 to vector<2x256xi32>
    %332 = arith.addi %40, %331 : vector<2x256xi32>
    %c0_i32_129 = arith.constant 0 : i32
    %333 = vector.broadcast %c0_i32_129 : i32 to vector<2x256xi32>
    %334 = arith.cmpi sge, %332, %333 : vector<2x256xi32>
    %c1_i32_130 = arith.constant 1 : i32
    %335 = vector.broadcast %c1_i32_130 : i32 to vector<2x256xi32>
    %336 = arith.addi %40, %335 : vector<2x256xi32>
    %c16_i32_131 = arith.constant 16 : i32
    %337 = vector.broadcast %c16_i32_131 : i32 to vector<2x256xi32>
    %338 = arith.cmpi slt, %336, %337 : vector<2x256xi32>
    %339 = arith.andi %334, %338 : vector<2x256xi1>
    %cst_132 = arith.constant 0.000000e+00 : f32
    %340 = vector.broadcast %cst_132 : f32 to vector<2x256xf32>
    %341 = arith.select %339, %330, %340 : vector<2x256xi1>, vector<2x256xf32>
    %342 = vector.extract_strided_slice %19 {offsets = [0, 18], sizes = [2, 1], strides = [1, 1]} : vector<2x25xf32> to vector<2x1xf32>
    %343 = vector.broadcast %342 : vector<2x1xf32> to vector<2x256xf32>
    %344 = arith.mulf %341, %343 : vector<2x256xf32>
    %345 = arith.addf %329, %344 : vector<2x256xf32>
    %c0_133 = arith.constant 0 : index
    %c146 = arith.constant 146 : index
    %346 = vector.load %arg12[%c0_133, %c146] : memref<2x512xf32, #tpu.memory_space<vmem>>, vector<2x256xf32>
    %c2_i32_134 = arith.constant 2 : i32
    %347 = vector.broadcast %c2_i32_134 : i32 to vector<2x256xi32>
    %348 = arith.addi %40, %347 : vector<2x256xi32>
    %c0_i32_135 = arith.constant 0 : i32
    %349 = vector.broadcast %c0_i32_135 : i32 to vector<2x256xi32>
    %350 = arith.cmpi sge, %348, %349 : vector<2x256xi32>
    %c2_i32_136 = arith.constant 2 : i32
    %351 = vector.broadcast %c2_i32_136 : i32 to vector<2x256xi32>
    %352 = arith.addi %40, %351 : vector<2x256xi32>
    %c16_i32_137 = arith.constant 16 : i32
    %353 = vector.broadcast %c16_i32_137 : i32 to vector<2x256xi32>
    %354 = arith.cmpi slt, %352, %353 : vector<2x256xi32>
    %355 = arith.andi %350, %354 : vector<2x256xi1>
    %cst_138 = arith.constant 0.000000e+00 : f32
    %356 = vector.broadcast %cst_138 : f32 to vector<2x256xf32>
    %357 = arith.select %355, %346, %356 : vector<2x256xi1>, vector<2x256xf32>
    %358 = vector.extract_strided_slice %19 {offsets = [0, 19], sizes = [2, 1], strides = [1, 1]} : vector<2x25xf32> to vector<2x1xf32>
    %359 = vector.broadcast %358 : vector<2x1xf32> to vector<2x256xf32>
    %360 = arith.mulf %357, %359 : vector<2x256xf32>
    %361 = arith.addf %345, %360 : vector<2x256xf32>
    %c0_139 = arith.constant 0 : index
    %c158 = arith.constant 158 : index
    %362 = vector.load %arg12[%c0_139, %c158] : memref<2x512xf32, #tpu.memory_space<vmem>>, vector<2x256xf32>
    %c-2_i32_140 = arith.constant -2 : i32
    %363 = vector.broadcast %c-2_i32_140 : i32 to vector<2x256xi32>
    %364 = arith.addi %40, %363 : vector<2x256xi32>
    %c0_i32_141 = arith.constant 0 : i32
    %365 = vector.broadcast %c0_i32_141 : i32 to vector<2x256xi32>
    %366 = arith.cmpi sge, %364, %365 : vector<2x256xi32>
    %c-2_i32_142 = arith.constant -2 : i32
    %367 = vector.broadcast %c-2_i32_142 : i32 to vector<2x256xi32>
    %368 = arith.addi %40, %367 : vector<2x256xi32>
    %c16_i32_143 = arith.constant 16 : i32
    %369 = vector.broadcast %c16_i32_143 : i32 to vector<2x256xi32>
    %370 = arith.cmpi slt, %368, %369 : vector<2x256xi32>
    %371 = arith.andi %366, %370 : vector<2x256xi1>
    %cst_144 = arith.constant 0.000000e+00 : f32
    %372 = vector.broadcast %cst_144 : f32 to vector<2x256xf32>
    %373 = arith.select %371, %362, %372 : vector<2x256xi1>, vector<2x256xf32>
    %374 = vector.extract_strided_slice %19 {offsets = [0, 20], sizes = [2, 1], strides = [1, 1]} : vector<2x25xf32> to vector<2x1xf32>
    %375 = vector.broadcast %374 : vector<2x1xf32> to vector<2x256xf32>
    %376 = arith.mulf %373, %375 : vector<2x256xf32>
    %377 = arith.addf %361, %376 : vector<2x256xf32>
    %c0_145 = arith.constant 0 : index
    %c159 = arith.constant 159 : index
    %378 = vector.load %arg12[%c0_145, %c159] : memref<2x512xf32, #tpu.memory_space<vmem>>, vector<2x256xf32>
    %c-1_i32_146 = arith.constant -1 : i32
    %379 = vector.broadcast %c-1_i32_146 : i32 to vector<2x256xi32>
    %380 = arith.addi %40, %379 : vector<2x256xi32>
    %c0_i32_147 = arith.constant 0 : i32
    %381 = vector.broadcast %c0_i32_147 : i32 to vector<2x256xi32>
    %382 = arith.cmpi sge, %380, %381 : vector<2x256xi32>
    %c-1_i32_148 = arith.constant -1 : i32
    %383 = vector.broadcast %c-1_i32_148 : i32 to vector<2x256xi32>
    %384 = arith.addi %40, %383 : vector<2x256xi32>
    %c16_i32_149 = arith.constant 16 : i32
    %385 = vector.broadcast %c16_i32_149 : i32 to vector<2x256xi32>
    %386 = arith.cmpi slt, %384, %385 : vector<2x256xi32>
    %387 = arith.andi %382, %386 : vector<2x256xi1>
    %cst_150 = arith.constant 0.000000e+00 : f32
    %388 = vector.broadcast %cst_150 : f32 to vector<2x256xf32>
    %389 = arith.select %387, %378, %388 : vector<2x256xi1>, vector<2x256xf32>
    %390 = vector.extract_strided_slice %19 {offsets = [0, 21], sizes = [2, 1], strides = [1, 1]} : vector<2x25xf32> to vector<2x1xf32>
    %391 = vector.broadcast %390 : vector<2x1xf32> to vector<2x256xf32>
    %392 = arith.mulf %389, %391 : vector<2x256xf32>
    %393 = arith.addf %377, %392 : vector<2x256xf32>
    %c0_151 = arith.constant 0 : index
    %c160 = arith.constant 160 : index
    %394 = vector.load %arg12[%c0_151, %c160] : memref<2x512xf32, #tpu.memory_space<vmem>>, vector<2x256xf32>
    %c0_i32_152 = arith.constant 0 : i32
    %395 = vector.broadcast %c0_i32_152 : i32 to vector<2x256xi32>
    %396 = arith.addi %40, %395 : vector<2x256xi32>
    %c0_i32_153 = arith.constant 0 : i32
    %397 = vector.broadcast %c0_i32_153 : i32 to vector<2x256xi32>
    %398 = arith.cmpi sge, %396, %397 : vector<2x256xi32>
    %c0_i32_154 = arith.constant 0 : i32
    %399 = vector.broadcast %c0_i32_154 : i32 to vector<2x256xi32>
    %400 = arith.addi %40, %399 : vector<2x256xi32>
    %c16_i32_155 = arith.constant 16 : i32
    %401 = vector.broadcast %c16_i32_155 : i32 to vector<2x256xi32>
    %402 = arith.cmpi slt, %400, %401 : vector<2x256xi32>
    %403 = arith.andi %398, %402 : vector<2x256xi1>
    %cst_156 = arith.constant 0.000000e+00 : f32
    %404 = vector.broadcast %cst_156 : f32 to vector<2x256xf32>
    %405 = arith.select %403, %394, %404 : vector<2x256xi1>, vector<2x256xf32>
    %406 = vector.extract_strided_slice %19 {offsets = [0, 22], sizes = [2, 1], strides = [1, 1]} : vector<2x25xf32> to vector<2x1xf32>
    %407 = vector.broadcast %406 : vector<2x1xf32> to vector<2x256xf32>
    %408 = arith.mulf %405, %407 : vector<2x256xf32>
    %409 = arith.addf %393, %408 : vector<2x256xf32>
    %c0_157 = arith.constant 0 : index
    %c161 = arith.constant 161 : index
    %410 = vector.load %arg12[%c0_157, %c161] : memref<2x512xf32, #tpu.memory_space<vmem>>, vector<2x256xf32>
    %c1_i32_158 = arith.constant 1 : i32
    %411 = vector.broadcast %c1_i32_158 : i32 to vector<2x256xi32>
    %412 = arith.addi %40, %411 : vector<2x256xi32>
    %c0_i32_159 = arith.constant 0 : i32
    %413 = vector.broadcast %c0_i32_159 : i32 to vector<2x256xi32>
    %414 = arith.cmpi sge, %412, %413 : vector<2x256xi32>
    %c1_i32_160 = arith.constant 1 : i32
    %415 = vector.broadcast %c1_i32_160 : i32 to vector<2x256xi32>
    %416 = arith.addi %40, %415 : vector<2x256xi32>
    %c16_i32_161 = arith.constant 16 : i32
    %417 = vector.broadcast %c16_i32_161 : i32 to vector<2x256xi32>
    %418 = arith.cmpi slt, %416, %417 : vector<2x256xi32>
    %419 = arith.andi %414, %418 : vector<2x256xi1>
    %cst_162 = arith.constant 0.000000e+00 : f32
    %420 = vector.broadcast %cst_162 : f32 to vector<2x256xf32>
    %421 = arith.select %419, %410, %420 : vector<2x256xi1>, vector<2x256xf32>
    %422 = vector.extract_strided_slice %19 {offsets = [0, 23], sizes = [2, 1], strides = [1, 1]} : vector<2x25xf32> to vector<2x1xf32>
    %423 = vector.broadcast %422 : vector<2x1xf32> to vector<2x256xf32>
    %424 = arith.mulf %421, %423 : vector<2x256xf32>
    %425 = arith.addf %409, %424 : vector<2x256xf32>
    %c0_163 = arith.constant 0 : index
    %c162 = arith.constant 162 : index
    %426 = vector.load %arg12[%c0_163, %c162] : memref<2x512xf32, #tpu.memory_space<vmem>>, vector<2x256xf32>
    %c2_i32_164 = arith.constant 2 : i32
    %427 = vector.broadcast %c2_i32_164 : i32 to vector<2x256xi32>
    %428 = arith.addi %40, %427 : vector<2x256xi32>
    %c0_i32_165 = arith.constant 0 : i32
    %429 = vector.broadcast %c0_i32_165 : i32 to vector<2x256xi32>
    %430 = arith.cmpi sge, %428, %429 : vector<2x256xi32>
    %c2_i32_166 = arith.constant 2 : i32
    %431 = vector.broadcast %c2_i32_166 : i32 to vector<2x256xi32>
    %432 = arith.addi %40, %431 : vector<2x256xi32>
    %c16_i32_167 = arith.constant 16 : i32
    %433 = vector.broadcast %c16_i32_167 : i32 to vector<2x256xi32>
    %434 = arith.cmpi slt, %432, %433 : vector<2x256xi32>
    %435 = arith.andi %430, %434 : vector<2x256xi1>
    %cst_168 = arith.constant 0.000000e+00 : f32
    %436 = vector.broadcast %cst_168 : f32 to vector<2x256xf32>
    %437 = arith.select %435, %426, %436 : vector<2x256xi1>, vector<2x256xf32>
    %438 = vector.extract_strided_slice %19 {offsets = [0, 24], sizes = [2, 1], strides = [1, 1]} : vector<2x25xf32> to vector<2x1xf32>
    %439 = vector.broadcast %438 : vector<2x1xf32> to vector<2x256xf32>
    %440 = arith.mulf %437, %439 : vector<2x256xf32>
    %441 = arith.addf %425, %440 : vector<2x256xf32>
    %442 = vector.broadcast %20 : vector<2x1xf32> to vector<2x256xf32>
    %443 = arith.addf %441, %442 : vector<2x256xf32>
    %cst_169 = arith.constant 0.000000e+00 : f32
    %444 = vector.broadcast %cst_169 : f32 to vector<2x256xf32>
    %445 = arith.maximumf %443, %444 : vector<2x256xf32>
    %446 = math.absf %443 : vector<2x256xf32>
    %cst_170 = arith.constant 0.000000e+00 : f32
    %447 = vector.broadcast %cst_170 : f32 to vector<2x256xf32>
    %448 = arith.subf %447, %446 : vector<2x256xf32>
    %449 = math.exp %448 : vector<2x256xf32>
    %cst_171 = arith.constant 1.000000e+00 : f32
    %450 = vector.broadcast %cst_171 : f32 to vector<2x256xf32>
    %451 = arith.addf %450, %449 : vector<2x256xf32>
    %452 = math.log %451 : vector<2x256xf32>
    %453 = arith.addf %445, %452 : vector<2x256xf32>
    %454 = math.tanh %453 : vector<2x256xf32>
    %455 = arith.mulf %443, %454 : vector<2x256xf32>
    %c0_172 = arith.constant 0 : index
    %c0_173 = arith.constant 0 : index
    %456 = vector.load %arg6[%c0_172, %c0_173] : memref<4x2xf32, #tpu.memory_space<vmem>>, vector<4x2xf32>
    %cst_174 = arith.constant dense<0.000000e+00> : vector<4x256xf32>
    %457 = tpu.matmul %456, %18, %cst_174 {dimension_numbers = #tpu.dot_dimension_numbers<[1], [0], [0], [1], [0, 0, 1, 1], [], []>} : vector<4x2xf32>, vector<2x256xf32>, vector<4x256xf32> -> vector<4x256xf32>
    %c0_175 = arith.constant 0 : index
    %c0_176 = arith.constant 0 : index
    %458 = vector.load %arg7[%c0_175, %c0_176] : memref<4x2xf32, #tpu.memory_space<vmem>>, vector<4x2xf32>
    %cst_177 = arith.constant dense<0.000000e+00> : vector<4x256xf32>
    %459 = tpu.matmul %458, %455, %cst_177 {dimension_numbers = #tpu.dot_dimension_numbers<[1], [0], [0], [1], [0, 0, 1, 1], [], []>} : vector<4x2xf32>, vector<2x256xf32>, vector<4x256xf32> -> vector<4x256xf32>
    %460 = arith.addf %457, %459 : vector<4x256xf32>
    %c0_178 = arith.constant 0 : index
    %c0_179 = arith.constant 0 : index
    %461 = vector.load %arg8[%c0_178, %c0_179] : memref<4x1xf32, #tpu.memory_space<vmem>>, vector<4x1xf32>
    %462 = vector.broadcast %461 : vector<4x1xf32> to vector<4x256xf32>
    %463 = arith.addf %460, %462 : vector<4x256xf32>
    %c0_180 = arith.constant 0 : index
    %c0_181 = arith.constant 0 : index
    %464 = vector.load %arg9[%c0_180, %c0_181] : memref<4x25xf32, #tpu.memory_space<vmem>>, vector<4x25xf32>
    %c0_182 = arith.constant 0 : index
    %c0_183 = arith.constant 0 : index
    %465 = vector.load %arg10[%c0_182, %c0_183] : memref<4x1xf32, #tpu.memory_space<vmem>>, vector<4x1xf32>
    %cst_184 = arith.constant 0.000000e+00 : f32
    %466 = vector.broadcast %cst_184 : f32 to vector<4x512xf32>
    %c0_185 = arith.constant 0 : index
    %c0_186 = arith.constant 0 : index
    %467 = vector.load %arg13[%c0_185, %c0_186] : memref<4x512xf32, #tpu.memory_space<vmem>>, vector<4x512xf32>
    tpu.vector_store %arg13[%c0_185, %c0_186], %466 {strides = array<i32>} : memref<4x512xf32, #tpu.memory_space<vmem>>, vector<4x512xf32>,
    %c0_187 = arith.constant 0 : index
    %c128_188 = arith.constant 128 : index
    %468 = vector.load %arg13[%c0_187, %c128_188] : memref<4x512xf32, #tpu.memory_space<vmem>>, vector<4x256xf32>
    tpu.vector_store %arg13[%c0_187, %c128_188], %463 {strides = array<i32>} : memref<4x512xf32, #tpu.memory_space<vmem>>, vector<4x256xf32>,
    %469 = tpu.iota {dimensions = array<i32: 1>} : vector<4x256xi32>
    %c16_i32_189 = arith.constant 16 : i32
    %c0_i32_190 = arith.constant 0 : i32
    %470 = arith.cmpi eq, %c16_i32_189, %c0_i32_190 : i32
    %c1_i32_191 = arith.constant 1 : i32
    %471 = arith.select %470, %c1_i32_191, %c16_i32_189 : i32
    %472 = vector.broadcast %471 : i32 to vector<4x256xi32>
    %473 = arith.remsi %469, %472 : vector<4x256xi32>
    %c0_i32_192 = arith.constant 0 : i32
    %474 = vector.broadcast %c0_i32_192 : i32 to vector<4x256xi32>
    %475 = arith.cmpi ne, %473, %474 : vector<4x256xi32>
    %c0_i32_193 = arith.constant 0 : i32
    %476 = vector.broadcast %c0_i32_193 : i32 to vector<4x256xi32>
    %477 = arith.cmpi slt, %473, %476 : vector<4x256xi32>
    %c0_i32_194 = arith.constant 0 : i32
    %478 = arith.cmpi slt, %471, %c0_i32_194 : i32
    %479 = vector.broadcast %478 : i1 to vector<4x256xi1>
    %480 = vector.broadcast %479 : vector<4x256xi1> to vector<4x256xi1>
    %481 = arith.xori %477, %480 : vector<4x256xi1>
    %482 = arith.andi %481, %475 : vector<4x256xi1>
    %483 = vector.broadcast %471 : i32 to vector<4x256xi32>
    %484 = arith.addi %473, %483 : vector<4x256xi32>
    %485 = arith.select %482, %484, %473 : vector<4x256xi1>, vector<4x256xi32>
    %cst_195 = arith.constant 0.000000e+00 : f32
    %486 = vector.broadcast %cst_195 : f32 to vector<4x256xf32>
    %c0_196 = arith.constant 0 : index
    %c94_197 = arith.constant 94 : index
    %487 = vector.load %arg13[%c0_196, %c94_197] : memref<4x512xf32, #tpu.memory_space<vmem>>, vector<4x256xf32>
    %c-2_i32_198 = arith.constant -2 : i32
    %488 = vector.broadcast %c-2_i32_198 : i32 to vector<4x256xi32>
    %489 = arith.addi %485, %488 : vector<4x256xi32>
    %c0_i32_199 = arith.constant 0 : i32
    %490 = vector.broadcast %c0_i32_199 : i32 to vector<4x256xi32>
    %491 = arith.cmpi sge, %489, %490 : vector<4x256xi32>
    %c-2_i32_200 = arith.constant -2 : i32
    %492 = vector.broadcast %c-2_i32_200 : i32 to vector<4x256xi32>
    %493 = arith.addi %485, %492 : vector<4x256xi32>
    %c16_i32_201 = arith.constant 16 : i32
    %494 = vector.broadcast %c16_i32_201 : i32 to vector<4x256xi32>
    %495 = arith.cmpi slt, %493, %494 : vector<4x256xi32>
    %496 = arith.andi %491, %495 : vector<4x256xi1>
    %cst_202 = arith.constant 0.000000e+00 : f32
    %497 = vector.broadcast %cst_202 : f32 to vector<4x256xf32>
    %498 = arith.select %496, %487, %497 : vector<4x256xi1>, vector<4x256xf32>
    %499 = vector.extract_strided_slice %464 {offsets = [0, 0], sizes = [4, 1], strides = [1, 1]} : vector<4x25xf32> to vector<4x1xf32>
    %500 = vector.broadcast %499 : vector<4x1xf32> to vector<4x256xf32>
    %501 = arith.mulf %498, %500 : vector<4x256xf32>
    %502 = arith.addf %486, %501 : vector<4x256xf32>
    %c0_203 = arith.constant 0 : index
    %c95_204 = arith.constant 95 : index
    %503 = vector.load %arg13[%c0_203, %c95_204] : memref<4x512xf32, #tpu.memory_space<vmem>>, vector<4x256xf32>
    %c-1_i32_205 = arith.constant -1 : i32
    %504 = vector.broadcast %c-1_i32_205 : i32 to vector<4x256xi32>
    %505 = arith.addi %485, %504 : vector<4x256xi32>
    %c0_i32_206 = arith.constant 0 : i32
    %506 = vector.broadcast %c0_i32_206 : i32 to vector<4x256xi32>
    %507 = arith.cmpi sge, %505, %506 : vector<4x256xi32>
    %c-1_i32_207 = arith.constant -1 : i32
    %508 = vector.broadcast %c-1_i32_207 : i32 to vector<4x256xi32>
    %509 = arith.addi %485, %508 : vector<4x256xi32>
    %c16_i32_208 = arith.constant 16 : i32
    %510 = vector.broadcast %c16_i32_208 : i32 to vector<4x256xi32>
    %511 = arith.cmpi slt, %509, %510 : vector<4x256xi32>
    %512 = arith.andi %507, %511 : vector<4x256xi1>
    %cst_209 = arith.constant 0.000000e+00 : f32
    %513 = vector.broadcast %cst_209 : f32 to vector<4x256xf32>
    %514 = arith.select %512, %503, %513 : vector<4x256xi1>, vector<4x256xf32>
    %515 = vector.extract_strided_slice %464 {offsets = [0, 1], sizes = [4, 1], strides = [1, 1]} : vector<4x25xf32> to vector<4x1xf32>
    %516 = vector.broadcast %515 : vector<4x1xf32> to vector<4x256xf32>
    %517 = arith.mulf %514, %516 : vector<4x256xf32>
    %518 = arith.addf %502, %517 : vector<4x256xf32>
    %c0_210 = arith.constant 0 : index
    %c96_211 = arith.constant 96 : index
    %519 = vector.load %arg13[%c0_210, %c96_211] : memref<4x512xf32, #tpu.memory_space<vmem>>, vector<4x256xf32>
    %c0_i32_212 = arith.constant 0 : i32
    %520 = vector.broadcast %c0_i32_212 : i32 to vector<4x256xi32>
    %521 = arith.addi %485, %520 : vector<4x256xi32>
    %c0_i32_213 = arith.constant 0 : i32
    %522 = vector.broadcast %c0_i32_213 : i32 to vector<4x256xi32>
    %523 = arith.cmpi sge, %521, %522 : vector<4x256xi32>
    %c0_i32_214 = arith.constant 0 : i32
    %524 = vector.broadcast %c0_i32_214 : i32 to vector<4x256xi32>
    %525 = arith.addi %485, %524 : vector<4x256xi32>
    %c16_i32_215 = arith.constant 16 : i32
    %526 = vector.broadcast %c16_i32_215 : i32 to vector<4x256xi32>
    %527 = arith.cmpi slt, %525, %526 : vector<4x256xi32>
    %528 = arith.andi %523, %527 : vector<4x256xi1>
    %cst_216 = arith.constant 0.000000e+00 : f32
    %529 = vector.broadcast %cst_216 : f32 to vector<4x256xf32>
    %530 = arith.select %528, %519, %529 : vector<4x256xi1>, vector<4x256xf32>
    %531 = vector.extract_strided_slice %464 {offsets = [0, 2], sizes = [4, 1], strides = [1, 1]} : vector<4x25xf32> to vector<4x1xf32>
    %532 = vector.broadcast %531 : vector<4x1xf32> to vector<4x256xf32>
    %533 = arith.mulf %530, %532 : vector<4x256xf32>
    %534 = arith.addf %518, %533 : vector<4x256xf32>
    %c0_217 = arith.constant 0 : index
    %c97_218 = arith.constant 97 : index
    %535 = vector.load %arg13[%c0_217, %c97_218] : memref<4x512xf32, #tpu.memory_space<vmem>>, vector<4x256xf32>
    %c1_i32_219 = arith.constant 1 : i32
    %536 = vector.broadcast %c1_i32_219 : i32 to vector<4x256xi32>
    %537 = arith.addi %485, %536 : vector<4x256xi32>
    %c0_i32_220 = arith.constant 0 : i32
    %538 = vector.broadcast %c0_i32_220 : i32 to vector<4x256xi32>
    %539 = arith.cmpi sge, %537, %538 : vector<4x256xi32>
    %c1_i32_221 = arith.constant 1 : i32
    %540 = vector.broadcast %c1_i32_221 : i32 to vector<4x256xi32>
    %541 = arith.addi %485, %540 : vector<4x256xi32>
    %c16_i32_222 = arith.constant 16 : i32
    %542 = vector.broadcast %c16_i32_222 : i32 to vector<4x256xi32>
    %543 = arith.cmpi slt, %541, %542 : vector<4x256xi32>
    %544 = arith.andi %539, %543 : vector<4x256xi1>
    %cst_223 = arith.constant 0.000000e+00 : f32
    %545 = vector.broadcast %cst_223 : f32 to vector<4x256xf32>
    %546 = arith.select %544, %535, %545 : vector<4x256xi1>, vector<4x256xf32>
    %547 = vector.extract_strided_slice %464 {offsets = [0, 3], sizes = [4, 1], strides = [1, 1]} : vector<4x25xf32> to vector<4x1xf32>
    %548 = vector.broadcast %547 : vector<4x1xf32> to vector<4x256xf32>
    %549 = arith.mulf %546, %548 : vector<4x256xf32>
    %550 = arith.addf %534, %549 : vector<4x256xf32>
    %c0_224 = arith.constant 0 : index
    %c98_225 = arith.constant 98 : index
    %551 = vector.load %arg13[%c0_224, %c98_225] : memref<4x512xf32, #tpu.memory_space<vmem>>, vector<4x256xf32>
    %c2_i32_226 = arith.constant 2 : i32
    %552 = vector.broadcast %c2_i32_226 : i32 to vector<4x256xi32>
    %553 = arith.addi %485, %552 : vector<4x256xi32>
    %c0_i32_227 = arith.constant 0 : i32
    %554 = vector.broadcast %c0_i32_227 : i32 to vector<4x256xi32>
    %555 = arith.cmpi sge, %553, %554 : vector<4x256xi32>
    %c2_i32_228 = arith.constant 2 : i32
    %556 = vector.broadcast %c2_i32_228 : i32 to vector<4x256xi32>
    %557 = arith.addi %485, %556 : vector<4x256xi32>
    %c16_i32_229 = arith.constant 16 : i32
    %558 = vector.broadcast %c16_i32_229 : i32 to vector<4x256xi32>
    %559 = arith.cmpi slt, %557, %558 : vector<4x256xi32>
    %560 = arith.andi %555, %559 : vector<4x256xi1>
    %cst_230 = arith.constant 0.000000e+00 : f32
    %561 = vector.broadcast %cst_230 : f32 to vector<4x256xf32>
    %562 = arith.select %560, %551, %561 : vector<4x256xi1>, vector<4x256xf32>
    %563 = vector.extract_strided_slice %464 {offsets = [0, 4], sizes = [4, 1], strides = [1, 1]} : vector<4x25xf32> to vector<4x1xf32>
    %564 = vector.broadcast %563 : vector<4x1xf32> to vector<4x256xf32>
    %565 = arith.mulf %562, %564 : vector<4x256xf32>
    %566 = arith.addf %550, %565 : vector<4x256xf32>
    %c0_231 = arith.constant 0 : index
    %c110_232 = arith.constant 110 : index
    %567 = vector.load %arg13[%c0_231, %c110_232] : memref<4x512xf32, #tpu.memory_space<vmem>>, vector<4x256xf32>
    %c-2_i32_233 = arith.constant -2 : i32
    %568 = vector.broadcast %c-2_i32_233 : i32 to vector<4x256xi32>
    %569 = arith.addi %485, %568 : vector<4x256xi32>
    %c0_i32_234 = arith.constant 0 : i32
    %570 = vector.broadcast %c0_i32_234 : i32 to vector<4x256xi32>
    %571 = arith.cmpi sge, %569, %570 : vector<4x256xi32>
    %c-2_i32_235 = arith.constant -2 : i32
    %572 = vector.broadcast %c-2_i32_235 : i32 to vector<4x256xi32>
    %573 = arith.addi %485, %572 : vector<4x256xi32>
    %c16_i32_236 = arith.constant 16 : i32
    %574 = vector.broadcast %c16_i32_236 : i32 to vector<4x256xi32>
    %575 = arith.cmpi slt, %573, %574 : vector<4x256xi32>
    %576 = arith.andi %571, %575 : vector<4x256xi1>
    %cst_237 = arith.constant 0.000000e+00 : f32
    %577 = vector.broadcast %cst_237 : f32 to vector<4x256xf32>
    %578 = arith.select %576, %567, %577 : vector<4x256xi1>, vector<4x256xf32>
    %579 = vector.extract_strided_slice %464 {offsets = [0, 5], sizes = [4, 1], strides = [1, 1]} : vector<4x25xf32> to vector<4x1xf32>
    %580 = vector.broadcast %579 : vector<4x1xf32> to vector<4x256xf32>
    %581 = arith.mulf %578, %580 : vector<4x256xf32>
    %582 = arith.addf %566, %581 : vector<4x256xf32>
    %c0_238 = arith.constant 0 : index
    %c111_239 = arith.constant 111 : index
    %583 = vector.load %arg13[%c0_238, %c111_239] : memref<4x512xf32, #tpu.memory_space<vmem>>, vector<4x256xf32>
    %c-1_i32_240 = arith.constant -1 : i32
    %584 = vector.broadcast %c-1_i32_240 : i32 to vector<4x256xi32>
    %585 = arith.addi %485, %584 : vector<4x256xi32>
    %c0_i32_241 = arith.constant 0 : i32
    %586 = vector.broadcast %c0_i32_241 : i32 to vector<4x256xi32>
    %587 = arith.cmpi sge, %585, %586 : vector<4x256xi32>
    %c-1_i32_242 = arith.constant -1 : i32
    %588 = vector.broadcast %c-1_i32_242 : i32 to vector<4x256xi32>
    %589 = arith.addi %485, %588 : vector<4x256xi32>
    %c16_i32_243 = arith.constant 16 : i32
    %590 = vector.broadcast %c16_i32_243 : i32 to vector<4x256xi32>
    %591 = arith.cmpi slt, %589, %590 : vector<4x256xi32>
    %592 = arith.andi %587, %591 : vector<4x256xi1>
    %cst_244 = arith.constant 0.000000e+00 : f32
    %593 = vector.broadcast %cst_244 : f32 to vector<4x256xf32>
    %594 = arith.select %592, %583, %593 : vector<4x256xi1>, vector<4x256xf32>
    %595 = vector.extract_strided_slice %464 {offsets = [0, 6], sizes = [4, 1], strides = [1, 1]} : vector<4x25xf32> to vector<4x1xf32>
    %596 = vector.broadcast %595 : vector<4x1xf32> to vector<4x256xf32>
    %597 = arith.mulf %594, %596 : vector<4x256xf32>
    %598 = arith.addf %582, %597 : vector<4x256xf32>
    %c0_245 = arith.constant 0 : index
    %c112_246 = arith.constant 112 : index
    %599 = vector.load %arg13[%c0_245, %c112_246] : memref<4x512xf32, #tpu.memory_space<vmem>>, vector<4x256xf32>
    %c0_i32_247 = arith.constant 0 : i32
    %600 = vector.broadcast %c0_i32_247 : i32 to vector<4x256xi32>
    %601 = arith.addi %485, %600 : vector<4x256xi32>
    %c0_i32_248 = arith.constant 0 : i32
    %602 = vector.broadcast %c0_i32_248 : i32 to vector<4x256xi32>
    %603 = arith.cmpi sge, %601, %602 : vector<4x256xi32>
    %c0_i32_249 = arith.constant 0 : i32
    %604 = vector.broadcast %c0_i32_249 : i32 to vector<4x256xi32>
    %605 = arith.addi %485, %604 : vector<4x256xi32>
    %c16_i32_250 = arith.constant 16 : i32
    %606 = vector.broadcast %c16_i32_250 : i32 to vector<4x256xi32>
    %607 = arith.cmpi slt, %605, %606 : vector<4x256xi32>
    %608 = arith.andi %603, %607 : vector<4x256xi1>
    %cst_251 = arith.constant 0.000000e+00 : f32
    %609 = vector.broadcast %cst_251 : f32 to vector<4x256xf32>
    %610 = arith.select %608, %599, %609 : vector<4x256xi1>, vector<4x256xf32>
    %611 = vector.extract_strided_slice %464 {offsets = [0, 7], sizes = [4, 1], strides = [1, 1]} : vector<4x25xf32> to vector<4x1xf32>
    %612 = vector.broadcast %611 : vector<4x1xf32> to vector<4x256xf32>
    %613 = arith.mulf %610, %612 : vector<4x256xf32>
    %614 = arith.addf %598, %613 : vector<4x256xf32>
    %c0_252 = arith.constant 0 : index
    %c113_253 = arith.constant 113 : index
    %615 = vector.load %arg13[%c0_252, %c113_253] : memref<4x512xf32, #tpu.memory_space<vmem>>, vector<4x256xf32>
    %c1_i32_254 = arith.constant 1 : i32
    %616 = vector.broadcast %c1_i32_254 : i32 to vector<4x256xi32>
    %617 = arith.addi %485, %616 : vector<4x256xi32>
    %c0_i32_255 = arith.constant 0 : i32
    %618 = vector.broadcast %c0_i32_255 : i32 to vector<4x256xi32>
    %619 = arith.cmpi sge, %617, %618 : vector<4x256xi32>
    %c1_i32_256 = arith.constant 1 : i32
    %620 = vector.broadcast %c1_i32_256 : i32 to vector<4x256xi32>
    %621 = arith.addi %485, %620 : vector<4x256xi32>
    %c16_i32_257 = arith.constant 16 : i32
    %622 = vector.broadcast %c16_i32_257 : i32 to vector<4x256xi32>
    %623 = arith.cmpi slt, %621, %622 : vector<4x256xi32>
    %624 = arith.andi %619, %623 : vector<4x256xi1>
    %cst_258 = arith.constant 0.000000e+00 : f32
    %625 = vector.broadcast %cst_258 : f32 to vector<4x256xf32>
    %626 = arith.select %624, %615, %625 : vector<4x256xi1>, vector<4x256xf32>
    %627 = vector.extract_strided_slice %464 {offsets = [0, 8], sizes = [4, 1], strides = [1, 1]} : vector<4x25xf32> to vector<4x1xf32>
    %628 = vector.broadcast %627 : vector<4x1xf32> to vector<4x256xf32>
    %629 = arith.mulf %626, %628 : vector<4x256xf32>
    %630 = arith.addf %614, %629 : vector<4x256xf32>
    %c0_259 = arith.constant 0 : index
    %c114_260 = arith.constant 114 : index
    %631 = vector.load %arg13[%c0_259, %c114_260] : memref<4x512xf32, #tpu.memory_space<vmem>>, vector<4x256xf32>
    %c2_i32_261 = arith.constant 2 : i32
    %632 = vector.broadcast %c2_i32_261 : i32 to vector<4x256xi32>
    %633 = arith.addi %485, %632 : vector<4x256xi32>
    %c0_i32_262 = arith.constant 0 : i32
    %634 = vector.broadcast %c0_i32_262 : i32 to vector<4x256xi32>
    %635 = arith.cmpi sge, %633, %634 : vector<4x256xi32>
    %c2_i32_263 = arith.constant 2 : i32
    %636 = vector.broadcast %c2_i32_263 : i32 to vector<4x256xi32>
    %637 = arith.addi %485, %636 : vector<4x256xi32>
    %c16_i32_264 = arith.constant 16 : i32
    %638 = vector.broadcast %c16_i32_264 : i32 to vector<4x256xi32>
    %639 = arith.cmpi slt, %637, %638 : vector<4x256xi32>
    %640 = arith.andi %635, %639 : vector<4x256xi1>
    %cst_265 = arith.constant 0.000000e+00 : f32
    %641 = vector.broadcast %cst_265 : f32 to vector<4x256xf32>
    %642 = arith.select %640, %631, %641 : vector<4x256xi1>, vector<4x256xf32>
    %643 = vector.extract_strided_slice %464 {offsets = [0, 9], sizes = [4, 1], strides = [1, 1]} : vector<4x25xf32> to vector<4x1xf32>
    %644 = vector.broadcast %643 : vector<4x1xf32> to vector<4x256xf32>
    %645 = arith.mulf %642, %644 : vector<4x256xf32>
    %646 = arith.addf %630, %645 : vector<4x256xf32>
    %c0_266 = arith.constant 0 : index
    %c126_267 = arith.constant 126 : index
    %647 = vector.load %arg13[%c0_266, %c126_267] : memref<4x512xf32, #tpu.memory_space<vmem>>, vector<4x256xf32>
    %c-2_i32_268 = arith.constant -2 : i32
    %648 = vector.broadcast %c-2_i32_268 : i32 to vector<4x256xi32>
    %649 = arith.addi %485, %648 : vector<4x256xi32>
    %c0_i32_269 = arith.constant 0 : i32
    %650 = vector.broadcast %c0_i32_269 : i32 to vector<4x256xi32>
    %651 = arith.cmpi sge, %649, %650 : vector<4x256xi32>
    %c-2_i32_270 = arith.constant -2 : i32
    %652 = vector.broadcast %c-2_i32_270 : i32 to vector<4x256xi32>
    %653 = arith.addi %485, %652 : vector<4x256xi32>
    %c16_i32_271 = arith.constant 16 : i32
    %654 = vector.broadcast %c16_i32_271 : i32 to vector<4x256xi32>
    %655 = arith.cmpi slt, %653, %654 : vector<4x256xi32>
    %656 = arith.andi %651, %655 : vector<4x256xi1>
    %cst_272 = arith.constant 0.000000e+00 : f32
    %657 = vector.broadcast %cst_272 : f32 to vector<4x256xf32>
    %658 = arith.select %656, %647, %657 : vector<4x256xi1>, vector<4x256xf32>
    %659 = vector.extract_strided_slice %464 {offsets = [0, 10], sizes = [4, 1], strides = [1, 1]} : vector<4x25xf32> to vector<4x1xf32>
    %660 = vector.broadcast %659 : vector<4x1xf32> to vector<4x256xf32>
    %661 = arith.mulf %658, %660 : vector<4x256xf32>
    %662 = arith.addf %646, %661 : vector<4x256xf32>
    %c0_273 = arith.constant 0 : index
    %c127_274 = arith.constant 127 : index
    %663 = vector.load %arg13[%c0_273, %c127_274] : memref<4x512xf32, #tpu.memory_space<vmem>>, vector<4x256xf32>
    %c-1_i32_275 = arith.constant -1 : i32
    %664 = vector.broadcast %c-1_i32_275 : i32 to vector<4x256xi32>
    %665 = arith.addi %485, %664 : vector<4x256xi32>
    %c0_i32_276 = arith.constant 0 : i32
    %666 = vector.broadcast %c0_i32_276 : i32 to vector<4x256xi32>
    %667 = arith.cmpi sge, %665, %666 : vector<4x256xi32>
    %c-1_i32_277 = arith.constant -1 : i32
    %668 = vector.broadcast %c-1_i32_277 : i32 to vector<4x256xi32>
    %669 = arith.addi %485, %668 : vector<4x256xi32>
    %c16_i32_278 = arith.constant 16 : i32
    %670 = vector.broadcast %c16_i32_278 : i32 to vector<4x256xi32>
    %671 = arith.cmpi slt, %669, %670 : vector<4x256xi32>
    %672 = arith.andi %667, %671 : vector<4x256xi1>
    %cst_279 = arith.constant 0.000000e+00 : f32
    %673 = vector.broadcast %cst_279 : f32 to vector<4x256xf32>
    %674 = arith.select %672, %663, %673 : vector<4x256xi1>, vector<4x256xf32>
    %675 = vector.extract_strided_slice %464 {offsets = [0, 11], sizes = [4, 1], strides = [1, 1]} : vector<4x25xf32> to vector<4x1xf32>
    %676 = vector.broadcast %675 : vector<4x1xf32> to vector<4x256xf32>
    %677 = arith.mulf %674, %676 : vector<4x256xf32>
    %678 = arith.addf %662, %677 : vector<4x256xf32>
    %c0_280 = arith.constant 0 : index
    %c128_281 = arith.constant 128 : index
    %679 = vector.load %arg13[%c0_280, %c128_281] : memref<4x512xf32, #tpu.memory_space<vmem>>, vector<4x256xf32>
    %c0_i32_282 = arith.constant 0 : i32
    %680 = vector.broadcast %c0_i32_282 : i32 to vector<4x256xi32>
    %681 = arith.addi %485, %680 : vector<4x256xi32>
    %c0_i32_283 = arith.constant 0 : i32
    %682 = vector.broadcast %c0_i32_283 : i32 to vector<4x256xi32>
    %683 = arith.cmpi sge, %681, %682 : vector<4x256xi32>
    %c0_i32_284 = arith.constant 0 : i32
    %684 = vector.broadcast %c0_i32_284 : i32 to vector<4x256xi32>
    %685 = arith.addi %485, %684 : vector<4x256xi32>
    %c16_i32_285 = arith.constant 16 : i32
    %686 = vector.broadcast %c16_i32_285 : i32 to vector<4x256xi32>
    %687 = arith.cmpi slt, %685, %686 : vector<4x256xi32>
    %688 = arith.andi %683, %687 : vector<4x256xi1>
    %cst_286 = arith.constant 0.000000e+00 : f32
    %689 = vector.broadcast %cst_286 : f32 to vector<4x256xf32>
    %690 = arith.select %688, %679, %689 : vector<4x256xi1>, vector<4x256xf32>
    %691 = vector.extract_strided_slice %464 {offsets = [0, 12], sizes = [4, 1], strides = [1, 1]} : vector<4x25xf32> to vector<4x1xf32>
    %692 = vector.broadcast %691 : vector<4x1xf32> to vector<4x256xf32>
    %693 = arith.mulf %690, %692 : vector<4x256xf32>
    %694 = arith.addf %678, %693 : vector<4x256xf32>
    %c0_287 = arith.constant 0 : index
    %c129_288 = arith.constant 129 : index
    %695 = vector.load %arg13[%c0_287, %c129_288] : memref<4x512xf32, #tpu.memory_space<vmem>>, vector<4x256xf32>
    %c1_i32_289 = arith.constant 1 : i32
    %696 = vector.broadcast %c1_i32_289 : i32 to vector<4x256xi32>
    %697 = arith.addi %485, %696 : vector<4x256xi32>
    %c0_i32_290 = arith.constant 0 : i32
    %698 = vector.broadcast %c0_i32_290 : i32 to vector<4x256xi32>
    %699 = arith.cmpi sge, %697, %698 : vector<4x256xi32>
    %c1_i32_291 = arith.constant 1 : i32
    %700 = vector.broadcast %c1_i32_291 : i32 to vector<4x256xi32>
    %701 = arith.addi %485, %700 : vector<4x256xi32>
    %c16_i32_292 = arith.constant 16 : i32
    %702 = vector.broadcast %c16_i32_292 : i32 to vector<4x256xi32>
    %703 = arith.cmpi slt, %701, %702 : vector<4x256xi32>
    %704 = arith.andi %699, %703 : vector<4x256xi1>
    %cst_293 = arith.constant 0.000000e+00 : f32
    %705 = vector.broadcast %cst_293 : f32 to vector<4x256xf32>
    %706 = arith.select %704, %695, %705 : vector<4x256xi1>, vector<4x256xf32>
    %707 = vector.extract_strided_slice %464 {offsets = [0, 13], sizes = [4, 1], strides = [1, 1]} : vector<4x25xf32> to vector<4x1xf32>
    %708 = vector.broadcast %707 : vector<4x1xf32> to vector<4x256xf32>
    %709 = arith.mulf %706, %708 : vector<4x256xf32>
    %710 = arith.addf %694, %709 : vector<4x256xf32>
    %c0_294 = arith.constant 0 : index
    %c130_295 = arith.constant 130 : index
    %711 = vector.load %arg13[%c0_294, %c130_295] : memref<4x512xf32, #tpu.memory_space<vmem>>, vector<4x256xf32>
    %c2_i32_296 = arith.constant 2 : i32
    %712 = vector.broadcast %c2_i32_296 : i32 to vector<4x256xi32>
    %713 = arith.addi %485, %712 : vector<4x256xi32>
    %c0_i32_297 = arith.constant 0 : i32
    %714 = vector.broadcast %c0_i32_297 : i32 to vector<4x256xi32>
    %715 = arith.cmpi sge, %713, %714 : vector<4x256xi32>
    %c2_i32_298 = arith.constant 2 : i32
    %716 = vector.broadcast %c2_i32_298 : i32 to vector<4x256xi32>
    %717 = arith.addi %485, %716 : vector<4x256xi32>
    %c16_i32_299 = arith.constant 16 : i32
    %718 = vector.broadcast %c16_i32_299 : i32 to vector<4x256xi32>
    %719 = arith.cmpi slt, %717, %718 : vector<4x256xi32>
    %720 = arith.andi %715, %719 : vector<4x256xi1>
    %cst_300 = arith.constant 0.000000e+00 : f32
    %721 = vector.broadcast %cst_300 : f32 to vector<4x256xf32>
    %722 = arith.select %720, %711, %721 : vector<4x256xi1>, vector<4x256xf32>
    %723 = vector.extract_strided_slice %464 {offsets = [0, 14], sizes = [4, 1], strides = [1, 1]} : vector<4x25xf32> to vector<4x1xf32>
    %724 = vector.broadcast %723 : vector<4x1xf32> to vector<4x256xf32>
    %725 = arith.mulf %722, %724 : vector<4x256xf32>
    %726 = arith.addf %710, %725 : vector<4x256xf32>
    %c0_301 = arith.constant 0 : index
    %c142_302 = arith.constant 142 : index
    %727 = vector.load %arg13[%c0_301, %c142_302] : memref<4x512xf32, #tpu.memory_space<vmem>>, vector<4x256xf32>
    %c-2_i32_303 = arith.constant -2 : i32
    %728 = vector.broadcast %c-2_i32_303 : i32 to vector<4x256xi32>
    %729 = arith.addi %485, %728 : vector<4x256xi32>
    %c0_i32_304 = arith.constant 0 : i32
    %730 = vector.broadcast %c0_i32_304 : i32 to vector<4x256xi32>
    %731 = arith.cmpi sge, %729, %730 : vector<4x256xi32>
    %c-2_i32_305 = arith.constant -2 : i32
    %732 = vector.broadcast %c-2_i32_305 : i32 to vector<4x256xi32>
    %733 = arith.addi %485, %732 : vector<4x256xi32>
    %c16_i32_306 = arith.constant 16 : i32
    %734 = vector.broadcast %c16_i32_306 : i32 to vector<4x256xi32>
    %735 = arith.cmpi slt, %733, %734 : vector<4x256xi32>
    %736 = arith.andi %731, %735 : vector<4x256xi1>
    %cst_307 = arith.constant 0.000000e+00 : f32
    %737 = vector.broadcast %cst_307 : f32 to vector<4x256xf32>
    %738 = arith.select %736, %727, %737 : vector<4x256xi1>, vector<4x256xf32>
    %739 = vector.extract_strided_slice %464 {offsets = [0, 15], sizes = [4, 1], strides = [1, 1]} : vector<4x25xf32> to vector<4x1xf32>
    %740 = vector.broadcast %739 : vector<4x1xf32> to vector<4x256xf32>
    %741 = arith.mulf %738, %740 : vector<4x256xf32>
    %742 = arith.addf %726, %741 : vector<4x256xf32>
    %c0_308 = arith.constant 0 : index
    %c143_309 = arith.constant 143 : index
    %743 = vector.load %arg13[%c0_308, %c143_309] : memref<4x512xf32, #tpu.memory_space<vmem>>, vector<4x256xf32>
    %c-1_i32_310 = arith.constant -1 : i32
    %744 = vector.broadcast %c-1_i32_310 : i32 to vector<4x256xi32>
    %745 = arith.addi %485, %744 : vector<4x256xi32>
    %c0_i32_311 = arith.constant 0 : i32
    %746 = vector.broadcast %c0_i32_311 : i32 to vector<4x256xi32>
    %747 = arith.cmpi sge, %745, %746 : vector<4x256xi32>
    %c-1_i32_312 = arith.constant -1 : i32
    %748 = vector.broadcast %c-1_i32_312 : i32 to vector<4x256xi32>
    %749 = arith.addi %485, %748 : vector<4x256xi32>
    %c16_i32_313 = arith.constant 16 : i32
    %750 = vector.broadcast %c16_i32_313 : i32 to vector<4x256xi32>
    %751 = arith.cmpi slt, %749, %750 : vector<4x256xi32>
    %752 = arith.andi %747, %751 : vector<4x256xi1>
    %cst_314 = arith.constant 0.000000e+00 : f32
    %753 = vector.broadcast %cst_314 : f32 to vector<4x256xf32>
    %754 = arith.select %752, %743, %753 : vector<4x256xi1>, vector<4x256xf32>
    %755 = vector.extract_strided_slice %464 {offsets = [0, 16], sizes = [4, 1], strides = [1, 1]} : vector<4x25xf32> to vector<4x1xf32>
    %756 = vector.broadcast %755 : vector<4x1xf32> to vector<4x256xf32>
    %757 = arith.mulf %754, %756 : vector<4x256xf32>
    %758 = arith.addf %742, %757 : vector<4x256xf32>
    %c0_315 = arith.constant 0 : index
    %c144_316 = arith.constant 144 : index
    %759 = vector.load %arg13[%c0_315, %c144_316] : memref<4x512xf32, #tpu.memory_space<vmem>>, vector<4x256xf32>
    %c0_i32_317 = arith.constant 0 : i32
    %760 = vector.broadcast %c0_i32_317 : i32 to vector<4x256xi32>
    %761 = arith.addi %485, %760 : vector<4x256xi32>
    %c0_i32_318 = arith.constant 0 : i32
    %762 = vector.broadcast %c0_i32_318 : i32 to vector<4x256xi32>
    %763 = arith.cmpi sge, %761, %762 : vector<4x256xi32>
    %c0_i32_319 = arith.constant 0 : i32
    %764 = vector.broadcast %c0_i32_319 : i32 to vector<4x256xi32>
    %765 = arith.addi %485, %764 : vector<4x256xi32>
    %c16_i32_320 = arith.constant 16 : i32
    %766 = vector.broadcast %c16_i32_320 : i32 to vector<4x256xi32>
    %767 = arith.cmpi slt, %765, %766 : vector<4x256xi32>
    %768 = arith.andi %763, %767 : vector<4x256xi1>
    %cst_321 = arith.constant 0.000000e+00 : f32
    %769 = vector.broadcast %cst_321 : f32 to vector<4x256xf32>
    %770 = arith.select %768, %759, %769 : vector<4x256xi1>, vector<4x256xf32>
    %771 = vector.extract_strided_slice %464 {offsets = [0, 17], sizes = [4, 1], strides = [1, 1]} : vector<4x25xf32> to vector<4x1xf32>
    %772 = vector.broadcast %771 : vector<4x1xf32> to vector<4x256xf32>
    %773 = arith.mulf %770, %772 : vector<4x256xf32>
    %774 = arith.addf %758, %773 : vector<4x256xf32>
    %c0_322 = arith.constant 0 : index
    %c145_323 = arith.constant 145 : index
    %775 = vector.load %arg13[%c0_322, %c145_323] : memref<4x512xf32, #tpu.memory_space<vmem>>, vector<4x256xf32>
    %c1_i32_324 = arith.constant 1 : i32
    %776 = vector.broadcast %c1_i32_324 : i32 to vector<4x256xi32>
    %777 = arith.addi %485, %776 : vector<4x256xi32>
    %c0_i32_325 = arith.constant 0 : i32
    %778 = vector.broadcast %c0_i32_325 : i32 to vector<4x256xi32>
    %779 = arith.cmpi sge, %777, %778 : vector<4x256xi32>
    %c1_i32_326 = arith.constant 1 : i32
    %780 = vector.broadcast %c1_i32_326 : i32 to vector<4x256xi32>
    %781 = arith.addi %485, %780 : vector<4x256xi32>
    %c16_i32_327 = arith.constant 16 : i32
    %782 = vector.broadcast %c16_i32_327 : i32 to vector<4x256xi32>
    %783 = arith.cmpi slt, %781, %782 : vector<4x256xi32>
    %784 = arith.andi %779, %783 : vector<4x256xi1>
    %cst_328 = arith.constant 0.000000e+00 : f32
    %785 = vector.broadcast %cst_328 : f32 to vector<4x256xf32>
    %786 = arith.select %784, %775, %785 : vector<4x256xi1>, vector<4x256xf32>
    %787 = vector.extract_strided_slice %464 {offsets = [0, 18], sizes = [4, 1], strides = [1, 1]} : vector<4x25xf32> to vector<4x1xf32>
    %788 = vector.broadcast %787 : vector<4x1xf32> to vector<4x256xf32>
    %789 = arith.mulf %786, %788 : vector<4x256xf32>
    %790 = arith.addf %774, %789 : vector<4x256xf32>
    %c0_329 = arith.constant 0 : index
    %c146_330 = arith.constant 146 : index
    %791 = vector.load %arg13[%c0_329, %c146_330] : memref<4x512xf32, #tpu.memory_space<vmem>>, vector<4x256xf32>
    %c2_i32_331 = arith.constant 2 : i32
    %792 = vector.broadcast %c2_i32_331 : i32 to vector<4x256xi32>
    %793 = arith.addi %485, %792 : vector<4x256xi32>
    %c0_i32_332 = arith.constant 0 : i32
    %794 = vector.broadcast %c0_i32_332 : i32 to vector<4x256xi32>
    %795 = arith.cmpi sge, %793, %794 : vector<4x256xi32>
    %c2_i32_333 = arith.constant 2 : i32
    %796 = vector.broadcast %c2_i32_333 : i32 to vector<4x256xi32>
    %797 = arith.addi %485, %796 : vector<4x256xi32>
    %c16_i32_334 = arith.constant 16 : i32
    %798 = vector.broadcast %c16_i32_334 : i32 to vector<4x256xi32>
    %799 = arith.cmpi slt, %797, %798 : vector<4x256xi32>
    %800 = arith.andi %795, %799 : vector<4x256xi1>
    %cst_335 = arith.constant 0.000000e+00 : f32
    %801 = vector.broadcast %cst_335 : f32 to vector<4x256xf32>
    %802 = arith.select %800, %791, %801 : vector<4x256xi1>, vector<4x256xf32>
    %803 = vector.extract_strided_slice %464 {offsets = [0, 19], sizes = [4, 1], strides = [1, 1]} : vector<4x25xf32> to vector<4x1xf32>
    %804 = vector.broadcast %803 : vector<4x1xf32> to vector<4x256xf32>
    %805 = arith.mulf %802, %804 : vector<4x256xf32>
    %806 = arith.addf %790, %805 : vector<4x256xf32>
    %c0_336 = arith.constant 0 : index
    %c158_337 = arith.constant 158 : index
    %807 = vector.load %arg13[%c0_336, %c158_337] : memref<4x512xf32, #tpu.memory_space<vmem>>, vector<4x256xf32>
    %c-2_i32_338 = arith.constant -2 : i32
    %808 = vector.broadcast %c-2_i32_338 : i32 to vector<4x256xi32>
    %809 = arith.addi %485, %808 : vector<4x256xi32>
    %c0_i32_339 = arith.constant 0 : i32
    %810 = vector.broadcast %c0_i32_339 : i32 to vector<4x256xi32>
    %811 = arith.cmpi sge, %809, %810 : vector<4x256xi32>
    %c-2_i32_340 = arith.constant -2 : i32
    %812 = vector.broadcast %c-2_i32_340 : i32 to vector<4x256xi32>
    %813 = arith.addi %485, %812 : vector<4x256xi32>
    %c16_i32_341 = arith.constant 16 : i32
    %814 = vector.broadcast %c16_i32_341 : i32 to vector<4x256xi32>
    %815 = arith.cmpi slt, %813, %814 : vector<4x256xi32>
    %816 = arith.andi %811, %815 : vector<4x256xi1>
    %cst_342 = arith.constant 0.000000e+00 : f32
    %817 = vector.broadcast %cst_342 : f32 to vector<4x256xf32>
    %818 = arith.select %816, %807, %817 : vector<4x256xi1>, vector<4x256xf32>
    %819 = vector.extract_strided_slice %464 {offsets = [0, 20], sizes = [4, 1], strides = [1, 1]} : vector<4x25xf32> to vector<4x1xf32>
    %820 = vector.broadcast %819 : vector<4x1xf32> to vector<4x256xf32>
    %821 = arith.mulf %818, %820 : vector<4x256xf32>
    %822 = arith.addf %806, %821 : vector<4x256xf32>
    %c0_343 = arith.constant 0 : index
    %c159_344 = arith.constant 159 : index
    %823 = vector.load %arg13[%c0_343, %c159_344] : memref<4x512xf32, #tpu.memory_space<vmem>>, vector<4x256xf32>
    %c-1_i32_345 = arith.constant -1 : i32
    %824 = vector.broadcast %c-1_i32_345 : i32 to vector<4x256xi32>
    %825 = arith.addi %485, %824 : vector<4x256xi32>
    %c0_i32_346 = arith.constant 0 : i32
    %826 = vector.broadcast %c0_i32_346 : i32 to vector<4x256xi32>
    %827 = arith.cmpi sge, %825, %826 : vector<4x256xi32>
    %c-1_i32_347 = arith.constant -1 : i32
    %828 = vector.broadcast %c-1_i32_347 : i32 to vector<4x256xi32>
    %829 = arith.addi %485, %828 : vector<4x256xi32>
    %c16_i32_348 = arith.constant 16 : i32
    %830 = vector.broadcast %c16_i32_348 : i32 to vector<4x256xi32>
    %831 = arith.cmpi slt, %829, %830 : vector<4x256xi32>
    %832 = arith.andi %827, %831 : vector<4x256xi1>
    %cst_349 = arith.constant 0.000000e+00 : f32
    %833 = vector.broadcast %cst_349 : f32 to vector<4x256xf32>
    %834 = arith.select %832, %823, %833 : vector<4x256xi1>, vector<4x256xf32>
    %835 = vector.extract_strided_slice %464 {offsets = [0, 21], sizes = [4, 1], strides = [1, 1]} : vector<4x25xf32> to vector<4x1xf32>
    %836 = vector.broadcast %835 : vector<4x1xf32> to vector<4x256xf32>
    %837 = arith.mulf %834, %836 : vector<4x256xf32>
    %838 = arith.addf %822, %837 : vector<4x256xf32>
    %c0_350 = arith.constant 0 : index
    %c160_351 = arith.constant 160 : index
    %839 = vector.load %arg13[%c0_350, %c160_351] : memref<4x512xf32, #tpu.memory_space<vmem>>, vector<4x256xf32>
    %c0_i32_352 = arith.constant 0 : i32
    %840 = vector.broadcast %c0_i32_352 : i32 to vector<4x256xi32>
    %841 = arith.addi %485, %840 : vector<4x256xi32>
    %c0_i32_353 = arith.constant 0 : i32
    %842 = vector.broadcast %c0_i32_353 : i32 to vector<4x256xi32>
    %843 = arith.cmpi sge, %841, %842 : vector<4x256xi32>
    %c0_i32_354 = arith.constant 0 : i32
    %844 = vector.broadcast %c0_i32_354 : i32 to vector<4x256xi32>
    %845 = arith.addi %485, %844 : vector<4x256xi32>
    %c16_i32_355 = arith.constant 16 : i32
    %846 = vector.broadcast %c16_i32_355 : i32 to vector<4x256xi32>
    %847 = arith.cmpi slt, %845, %846 : vector<4x256xi32>
    %848 = arith.andi %843, %847 : vector<4x256xi1>
    %cst_356 = arith.constant 0.000000e+00 : f32
    %849 = vector.broadcast %cst_356 : f32 to vector<4x256xf32>
    %850 = arith.select %848, %839, %849 : vector<4x256xi1>, vector<4x256xf32>
    %851 = vector.extract_strided_slice %464 {offsets = [0, 22], sizes = [4, 1], strides = [1, 1]} : vector<4x25xf32> to vector<4x1xf32>
    %852 = vector.broadcast %851 : vector<4x1xf32> to vector<4x256xf32>
    %853 = arith.mulf %850, %852 : vector<4x256xf32>
    %854 = arith.addf %838, %853 : vector<4x256xf32>
    %c0_357 = arith.constant 0 : index
    %c161_358 = arith.constant 161 : index
    %855 = vector.load %arg13[%c0_357, %c161_358] : memref<4x512xf32, #tpu.memory_space<vmem>>, vector<4x256xf32>
    %c1_i32_359 = arith.constant 1 : i32
    %856 = vector.broadcast %c1_i32_359 : i32 to vector<4x256xi32>
    %857 = arith.addi %485, %856 : vector<4x256xi32>
    %c0_i32_360 = arith.constant 0 : i32
    %858 = vector.broadcast %c0_i32_360 : i32 to vector<4x256xi32>
    %859 = arith.cmpi sge, %857, %858 : vector<4x256xi32>
    %c1_i32_361 = arith.constant 1 : i32
    %860 = vector.broadcast %c1_i32_361 : i32 to vector<4x256xi32>
    %861 = arith.addi %485, %860 : vector<4x256xi32>
    %c16_i32_362 = arith.constant 16 : i32
    %862 = vector.broadcast %c16_i32_362 : i32 to vector<4x256xi32>
    %863 = arith.cmpi slt, %861, %862 : vector<4x256xi32>
    %864 = arith.andi %859, %863 : vector<4x256xi1>
    %cst_363 = arith.constant 0.000000e+00 : f32
    %865 = vector.broadcast %cst_363 : f32 to vector<4x256xf32>
    %866 = arith.select %864, %855, %865 : vector<4x256xi1>, vector<4x256xf32>
    %867 = vector.extract_strided_slice %464 {offsets = [0, 23], sizes = [4, 1], strides = [1, 1]} : vector<4x25xf32> to vector<4x1xf32>
    %868 = vector.broadcast %867 : vector<4x1xf32> to vector<4x256xf32>
    %869 = arith.mulf %866, %868 : vector<4x256xf32>
    %870 = arith.addf %854, %869 : vector<4x256xf32>
    %c0_364 = arith.constant 0 : index
    %c162_365 = arith.constant 162 : index
    %871 = vector.load %arg13[%c0_364, %c162_365] : memref<4x512xf32, #tpu.memory_space<vmem>>, vector<4x256xf32>
    %c2_i32_366 = arith.constant 2 : i32
    %872 = vector.broadcast %c2_i32_366 : i32 to vector<4x256xi32>
    %873 = arith.addi %485, %872 : vector<4x256xi32>
    %c0_i32_367 = arith.constant 0 : i32
    %874 = vector.broadcast %c0_i32_367 : i32 to vector<4x256xi32>
    %875 = arith.cmpi sge, %873, %874 : vector<4x256xi32>
    %c2_i32_368 = arith.constant 2 : i32
    %876 = vector.broadcast %c2_i32_368 : i32 to vector<4x256xi32>
    %877 = arith.addi %485, %876 : vector<4x256xi32>
    %c16_i32_369 = arith.constant 16 : i32
    %878 = vector.broadcast %c16_i32_369 : i32 to vector<4x256xi32>
    %879 = arith.cmpi slt, %877, %878 : vector<4x256xi32>
    %880 = arith.andi %875, %879 : vector<4x256xi1>
    %cst_370 = arith.constant 0.000000e+00 : f32
    %881 = vector.broadcast %cst_370 : f32 to vector<4x256xf32>
    %882 = arith.select %880, %871, %881 : vector<4x256xi1>, vector<4x256xf32>
    %883 = vector.extract_strided_slice %464 {offsets = [0, 24], sizes = [4, 1], strides = [1, 1]} : vector<4x25xf32> to vector<4x1xf32>
    %884 = vector.broadcast %883 : vector<4x1xf32> to vector<4x256xf32>
    %885 = arith.mulf %882, %884 : vector<4x256xf32>
    %886 = arith.addf %870, %885 : vector<4x256xf32>
    %887 = vector.broadcast %465 : vector<4x1xf32> to vector<4x256xf32>
    %888 = arith.addf %886, %887 : vector<4x256xf32>
    %889 = vector.extract_strided_slice %1 {offsets = [0, 0], sizes = [4, 256], strides = [1, 1]} : vector<8x256xf32> to vector<4x256xf32>
    %890 = arith.addf %463, %889 : vector<4x256xf32>
    %c0_371 = arith.constant 0 : index
    %c0_372 = arith.constant 0 : index
    %c0_373 = arith.constant 0 : index
    %891 = vector.load %arg11[%c0_371, %c0_372, %c0_373] : memref<1x8x256xf32, #tpu.memory_space<vmem>>, vector<1x4x256xf32>
    %892 = vector.shape_cast %891 : vector<1x4x256xf32> to vector<4x256xf32>
    %893 = vector.shape_cast %890 : vector<4x256xf32> to vector<1x4x256xf32>
    tpu.vector_store %arg11[%c0_371, %c0_372, %c0_373], %893 {strides = array<i32>} : memref<1x8x256xf32, #tpu.memory_space<vmem>>, vector<1x4x256xf32>,
    %894 = vector.extract_strided_slice %1 {offsets = [4, 0], sizes = [4, 256], strides = [1, 1]} : vector<8x256xf32> to vector<4x256xf32>
    %895 = arith.addf %888, %894 : vector<4x256xf32>
    %c0_374 = arith.constant 0 : index
    %c4 = arith.constant 4 : index
    %c0_375 = arith.constant 0 : index
    %896 = vector.load %arg11[%c0_374, %c4, %c0_375] : memref<1x8x256xf32, #tpu.memory_space<vmem>>, vector<1x4x256xf32>
    %897 = vector.shape_cast %896 : vector<1x4x256xf32> to vector<4x256xf32>
    %898 = vector.shape_cast %895 : vector<4x256xf32> to vector<1x4x256xf32>
    tpu.vector_store %arg11[%c0_374, %c4, %c0_375], %898 {strides = array<i32>} : memref<1x8x256xf32, #tpu.memory_space<vmem>>, vector<1x4x256xf32>,
    return
  }
  func.func @transform_0(%arg0: i32) -> (i32, i32, i32) {
    %c0_i32 = arith.constant 0 : i32
    %c0_i32_0 = arith.constant 0 : i32
    %c0_i32_1 = arith.constant 0 : i32
    return %arg0, %c0_i32, %c0_i32_0 : i32, i32, i32
  }
  func.func @transform_1(%arg0: i32) -> (i32, i32) {
    %c0_i32 = arith.constant 0 : i32
    %c0_i32_0 = arith.constant 0 : i32
    %c0_i32_1 = arith.constant 0 : i32
    return %c0_i32, %c0_i32_0 : i32, i32
  }
  func.func @transform_2(%arg0: i32) -> (i32, i32) {
    %c0_i32 = arith.constant 0 : i32
    %c0_i32_0 = arith.constant 0 : i32
    %c0_i32_1 = arith.constant 0 : i32
    return %c0_i32, %c0_i32_0 : i32, i32
  }
  func.func @transform_3(%arg0: i32) -> (i32, i32) {
    %c0_i32 = arith.constant 0 : i32
    %c0_i32_0 = arith.constant 0 : i32
    %c0_i32_1 = arith.constant 0 : i32
    return %c0_i32, %c0_i32_0 : i32, i32
  }
  func.func @transform_4(%arg0: i32) -> (i32, i32) {
    %c0_i32 = arith.constant 0 : i32
    %c0_i32_0 = arith.constant 0 : i32
    %c0_i32_1 = arith.constant 0 : i32
    return %c0_i32, %c0_i32_0 : i32, i32
  }
  func.func @transform_5(%arg0: i32) -> (i32, i32) {
    %c0_i32 = arith.constant 0 : i32
    %c0_i32_0 = arith.constant 0 : i32
    %c0_i32_1 = arith.constant 0 : i32
    return %c0_i32, %c0_i32_0 : i32, i32
  }
  func.func @transform_6(%arg0: i32) -> (i32, i32) {
    %c0_i32 = arith.constant 0 : i32
    %c0_i32_0 = arith.constant 0 : i32
    %c0_i32_1 = arith.constant 0 : i32
    return %c0_i32, %c0_i32_0 : i32, i32
  }
  func.func @transform_7(%arg0: i32) -> (i32, i32) {
    %c0_i32 = arith.constant 0 : i32
    %c0_i32_0 = arith.constant 0 : i32
    %c0_i32_1 = arith.constant 0 : i32
    return %c0_i32, %c0_i32_0 : i32, i32
  }
  func.func @transform_8(%arg0: i32) -> (i32, i32) {
    %c0_i32 = arith.constant 0 : i32
    %c0_i32_0 = arith.constant 0 : i32
    %c0_i32_1 = arith.constant 0 : i32
    return %c0_i32, %c0_i32_0 : i32, i32
  }
  func.func @transform_9(%arg0: i32) -> (i32, i32) {
    %c0_i32 = arith.constant 0 : i32
    %c0_i32_0 = arith.constant 0 : i32
    %c0_i32_1 = arith.constant 0 : i32
    return %c0_i32, %c0_i32_0 : i32, i32
  }
  func.func @transform_10(%arg0: i32) -> (i32, i32, i32) {
    %c0_i32 = arith.constant 0 : i32
    %c0_i32_0 = arith.constant 0 : i32
    %c0_i32_1 = arith.constant 0 : i32
    return %arg0, %c0_i32, %c0_i32_0 : i32, i32, i32
  }
}

</mosaic_0001>

<llo_original>
// kernel: ghost_bottleneck_forward.1
$region0: #{ghost_bottleneck_forward.1}
  #allocation0 [shape = 'u32[]', space=smem, size = 0x4, offset = 0x4, fixed_abs, tag = 'smem constant byte address 0x4 - core index']
  #allocation1 [shape = 'u32[144,128]{1,0:T(1,128)}', space=vmem, size = 0x12000, scoped, tag = 'internal scratch']
  #allocation2 [shape = 'f32[2,512]{1,0:T(2,128)}', space=vmem, size = 0x1000, scoped, tag = 'scratch operand']
  #allocation3 [shape = 'f32[4,512]{1,0:T(4,128)}', space=vmem, size = 0x2000, scoped, tag = 'scratch operand']
  %s0 = inlined_call_operand.vmem [shape: f32[2,8,256], index: 0, kind: input, shape index: {}]
  %s1 = inlined_call_operand.vmem [shape: f32[2,8], index: 1, kind: input, shape index: {}]
  %s2 = inlined_call_operand.vmem [shape: f32[2,1], index: 2, kind: input, shape index: {}]
  %s3 = inlined_call_operand.vmem [shape: f32[2,25], index: 3, kind: input, shape index: {}]
  %s4 = inlined_call_operand.vmem [shape: f32[2,1], index: 4, kind: input, shape index: {}]
  %s5 = inlined_call_operand.vmem [shape: f32[4,2], index: 5, kind: input, shape index: {}]
  %s6 = inlined_call_operand.vmem [shape: f32[4,2], index: 6, kind: input, shape index: {}]
  %s7 = inlined_call_operand.vmem [shape: f32[4,1], index: 7, kind: input, shape index: {}]
  %s8 = inlined_call_operand.vmem [shape: f32[4,25], index: 8, kind: input, shape index: {}]
  %s9 = inlined_call_operand.vmem [shape: f32[4,1], index: 9, kind: input, shape index: {}]
  %s10 = inlined_call_operand.vmem [shape: f32[2,8,256], index: 10, kind: output, shape index: {}]
  %s11 = sld [smem:[#allocation0]]
  $region73: #{ghost_bottleneck_forward.1} parent=0
    _
  %s13 = ssub.s32 1, %s11
  %s14 = scalar_select 0, %s13, %s11
  loop: start=0, step=1, limit=4
  $region2: #{ghost_bottleneck_forward.1} parent=0 // loop_pre_header
    _
  $region3: #{ghost_bottleneck_forward.1} parent=0 // loop_header
    %s16 = sphi 0, %s20
    %p17 = scmp.ge.s32.totalorder %s16, 4
    %s26 = sphi 0, %s28
    %s29 = sphi 0, %s26
    %s30 = sphi 0, %s29
    %s46 = sphi 0, %s30
    %s50 = sphi 0, %s50
    %s52 = sphi 0, %s50
    %s53 = sphi 0, %s52
    %s67 = sphi 0, %s53
    %s71 = sphi 0, %s71
    %s73 = sphi 0, %s71
    %s74 = sphi 0, %s73
    %s88 = sphi 0, %s74
    %s92 = sphi 0, %s92
    %s94 = sphi 0, %s92
    %s95 = sphi 0, %s94
    %s109 = sphi 0, %s95
    %s113 = sphi 0, %s113
    %s115 = sphi 0, %s113
    %s116 = sphi 0, %s115
    %s130 = sphi 0, %s116
    %s134 = sphi 0, %s134
    %s136 = sphi 0, %s134
    %s137 = sphi 0, %s136
    %s151 = sphi 0, %s137
    %s155 = sphi 0, %s155
    %s157 = sphi 0, %s155
    %s158 = sphi 0, %s157
    %s172 = sphi 0, %s158
    %s176 = sphi 0, %s176
    %s178 = sphi 0, %s176
    %s179 = sphi 0, %s178
    %s193 = sphi 0, %s179
    %s197 = sphi 0, %s197
    %s199 = sphi 0, %s197
    %s200 = sphi 0, %s199
    %s214 = sphi 0, %s200
    %s218 = sphi 0, %s218
    %s220 = sphi 0, %s218
    %s221 = sphi 0, %s220
    %s235 = sphi 0, %s221
    %s241 = sphi 0, %s243
    %s244 = sphi 0, %s241
    %s245 = sphi 0, %s244
    %s261 = sphi 0, %s245
  $region4: #{ghost_bottleneck_forward.1} parent=0 // loop_header_branch
    %19 = sbr.rel (%p17) target = $region8
  $region5: #{ghost_bottleneck_forward.1} parent=0 // loop_body
    %s21 = ssub.s32 %s16, 1
    %s22 = ssub.s32 %s16, 2
    %s23 = sadd.s32 %s16, 1
    %s24 = ssub.s32 %s16, %s23
    %p25 = scmp.eq.s32.totalorder %s24, 0
    %s27 = sadd.s32 %s26, 1
    %s28 = scalar_select %p25, %s26, %s27
    %p31 = pneg %p25
    %p32 = scmp.eq.s32.totalorder %s16, 1
    %p33 = por %p31, %p32
    %p34 = scmp.ne.s32.totalorder %s26, %s29
    %p35 = scmp.eq.s32.totalorder %s16, 0
    %p36 = por %p34, %p35
    %p37 = scmp.ne.s32.totalorder %s26, %s29
    %p38 = scmp.eq.s32.totalorder %s21, 1
    %p39 = por %p37, %p38
    %p40 = scmp.ne.s32.totalorder %s29, %s30
    %p41 = scmp.eq.s32.totalorder %s21, 0
    %p42 = por %p40, %p41
    %p43 = scmp.ne.s32.totalorder %s29, %s30
    %p44 = scmp.eq.s32.totalorder %s22, 1
    %p45 = por %p43, %p44
    %p47 = scmp.ne.s32.totalorder %s30, %s46
    %p48 = scmp.eq.s32.totalorder %s22, 0
    %p49 = por %p47, %p48
    %s51 = sadd.s32 %s50, 1
    %p54 = scmp.eq.s32.totalorder %s16, 1
    %p55 = scmp.ne.s32.totalorder %s50, %s52
    %p56 = scmp.eq.s32.totalorder %s16, 0
    %p57 = por %p55, %p56
    %p58 = scmp.ne.s32.totalorder %s50, %s52
    %p59 = scmp.eq.s32.totalorder %s21, 1
    %p60 = por %p58, %p59
    %p61 = scmp.ne.s32.totalorder %s52, %s53
    %p62 = scmp.eq.s32.totalorder %s21, 0
    %p63 = por %p61, %p62
    %p64 = scmp.ne.s32.totalorder %s52, %s53
    %p65 = scmp.eq.s32.totalorder %s22, 1
    %p66 = por %p64, %p65
    %p68 = scmp.ne.s32.totalorder %s53, %s67
    %p69 = scmp.eq.s32.totalorder %s22, 0
    %p70 = por %p68, %p69
    %s72 = sadd.s32 %s71, 1
    %p75 = scmp.eq.s32.totalorder %s16, 1
    %p76 = scmp.ne.s32.totalorder %s71, %s73
    %p77 = scmp.eq.s32.totalorder %s16, 0
    %p78 = por %p76, %p77
    %p79 = scmp.ne.s32.totalorder %s71, %s73
    %p80 = scmp.eq.s32.totalorder %s21, 1
    %p81 = por %p79, %p80
    %p82 = scmp.ne.s32.totalorder %s73, %s74
    %p83 = scmp.eq.s32.totalorder %s21, 0
    %p84 = por %p82, %p83
    %p85 = scmp.ne.s32.totalorder %s73, %s74
    %p86 = scmp.eq.s32.totalorder %s22, 1
    %p87 = por %p85, %p86
    %p89 = scmp.ne.s32.totalorder %s74, %s88
    %p90 = scmp.eq.s32.totalorder %s22, 0
    %p91 = por %p89, %p90
    %s93 = sadd.s32 %s92, 1
    %p96 = scmp.eq.s32.totalorder %s16, 1
    %p97 = scmp.ne.s32.totalorder %s92, %s94
    %p98 = scmp.eq.s32.totalorder %s16, 0
    %p99 = por %p97, %p98
    %p100 = scmp.ne.s32.totalorder %s92, %s94
    %p101 = scmp.eq.s32.totalorder %s21, 1
    %p102 = por %p100, %p101
    %p103 = scmp.ne.s32.totalorder %s94, %s95
    %p104 = scmp.eq.s32.totalorder %s21, 0
    %p105 = por %p103, %p104
    %p106 = scmp.ne.s32.totalorder %s94, %s95
    %p107 = scmp.eq.s32.totalorder %s22, 1
    %p108 = por %p106, %p107
    %p110 = scmp.ne.s32.totalorder %s95, %s109
    %p111 = scmp.eq.s32.totalorder %s22, 0
    %p112 = por %p110, %p111
    %s114 = sadd.s32 %s113, 1
    %p117 = scmp.eq.s32.totalorder %s16, 1
    %p118 = scmp.ne.s32.totalorder %s113, %s115
    %p119 = scmp.eq.s32.totalorder %s16, 0
    %p120 = por %p118, %p119
    %p121 = scmp.ne.s32.totalorder %s113, %s115
    %p122 = scmp.eq.s32.totalorder %s21, 1
    %p123 = por %p121, %p122
    %p124 = scmp.ne.s32.totalorder %s115, %s116
    %p125 = scmp.eq.s32.totalorder %s21, 0
    %p126 = por %p124, %p125
    %p127 = scmp.ne.s32.totalorder %s115, %s116
    %p128 = scmp.eq.s32.totalorder %s22, 1
    %p129 = por %p127, %p128
    %p131 = scmp.ne.s32.totalorder %s116, %s130
    %p132 = scmp.eq.s32.totalorder %s22, 0
    %p133 = por %p131, %p132
    %s135 = sadd.s32 %s134, 1
    %p138 = scmp.eq.s32.totalorder %s16, 1
    %p139 = scmp.ne.s32.totalorder %s134, %s136
    %p140 = scmp.eq.s32.totalorder %s16, 0
    %p141 = por %p139, %p140
    %p142 = scmp.ne.s32.totalorder %s134, %s136
    %p143 = scmp.eq.s32.totalorder %s21, 1
    %p144 = por %p142, %p143
    %p145 = scmp.ne.s32.totalorder %s136, %s137
    %p146 = scmp.eq.s32.totalorder %s21, 0
    %p147 = por %p145, %p146
    %p148 = scmp.ne.s32.totalorder %s136, %s137
    %p149 = scmp.eq.s32.totalorder %s22, 1
    %p150 = por %p148, %p149
    %p152 = scmp.ne.s32.totalorder %s137, %s151
    %p153 = scmp.eq.s32.totalorder %s22, 0
    %p154 = por %p152, %p153
    %s156 = sadd.s32 %s155, 1
    %p159 = scmp.eq.s32.totalorder %s16, 1
    %p160 = scmp.ne.s32.totalorder %s155, %s157
    %p161 = scmp.eq.s32.totalorder %s16, 0
    %p162 = por %p160, %p161
    %p163 = scmp.ne.s32.totalorder %s155, %s157
    %p164 = scmp.eq.s32.totalorder %s21, 1
    %p165 = por %p163, %p164
    %p166 = scmp.ne.s32.totalorder %s157, %s158
    %p167 = scmp.eq.s32.totalorder %s21, 0
    %p168 = por %p166, %p167
    %p169 = scmp.ne.s32.totalorder %s157, %s158
    %p170 = scmp.eq.s32.totalorder %s22, 1
    %p171 = por %p169, %p170
    %p173 = scmp.ne.s32.totalorder %s158, %s172
    %p174 = scmp.eq.s32.totalorder %s22, 0
    %p175 = por %p173, %p174
    %s177 = sadd.s32 %s176, 1
    %p180 = scmp.eq.s32.totalorder %s16, 1
    %p181 = scmp.ne.s32.totalorder %s176, %s178
    %p182 = scmp.eq.s32.totalorder %s16, 0
    %p183 = por %p181, %p182
    %p184 = scmp.ne.s32.totalorder %s176, %s178
    %p185 = scmp.eq.s32.totalorder %s21, 1
    %p186 = por %p184, %p185
    %p187 = scmp.ne.s32.totalorder %s178, %s179
    %p188 = scmp.eq.s32.totalorder %s21, 0
    %p189 = por %p187, %p188
    %p190 = scmp.ne.s32.totalorder %s178, %s179
    %p191 = scmp.eq.s32.totalorder %s22, 1
    %p192 = por %p190, %p191
    %p194 = scmp.ne.s32.totalorder %s179, %s193
    %p195 = scmp.eq.s32.totalorder %s22, 0
    %p196 = por %p194, %p195
    %s198 = sadd.s32 %s197, 1
    %p201 = scmp.eq.s32.totalorder %s16, 1
    %p202 = scmp.ne.s32.totalorder %s197, %s199
    %p203 = scmp.eq.s32.totalorder %s16, 0
    %p204 = por %p202, %p203
    %p205 = scmp.ne.s32.totalorder %s197, %s199
    %p206 = scmp.eq.s32.totalorder %s21, 1
    %p207 = por %p205, %p206
    %p208 = scmp.ne.s32.totalorder %s199, %s200
    %p209 = scmp.eq.s32.totalorder %s21, 0
    %p210 = por %p208, %p209
    %p211 = scmp.ne.s32.totalorder %s199, %s200
    %p212 = scmp.eq.s32.totalorder %s22, 1
    %p213 = por %p211, %p212
    %p215 = scmp.ne.s32.totalorder %s200, %s214
    %p216 = scmp.eq.s32.totalorder %s22, 0
    %p217 = por %p215, %p216
    %s219 = sadd.s32 %s218, 1
    %p222 = scmp.eq.s32.totalorder %s16, 1
    %p223 = scmp.ne.s32.totalorder %s218, %s220
    %p224 = scmp.eq.s32.totalorder %s16, 0
    %p225 = por %p223, %p224
    %p226 = scmp.ne.s32.totalorder %s218, %s220
    %p227 = scmp.eq.s32.totalorder %s21, 1
    %p228 = por %p226, %p227
    %p229 = scmp.ne.s32.totalorder %s220, %s221
    %p230 = scmp.eq.s32.totalorder %s21, 0
    %p231 = por %p229, %p230
    %p232 = scmp.ne.s32.totalorder %s220, %s221
    %p233 = scmp.eq.s32.totalorder %s22, 1
    %p234 = por %p232, %p233
    %p236 = scmp.ne.s32.totalorder %s221, %s235
    %p237 = scmp.eq.s32.totalorder %s22, 0
    %p238 = por %p236, %p237
    %s239 = ssub.s32 %s16, %s23
    %p240 = scmp.eq.s32.totalorder %s239, 0
    %s242 = sadd.s32 %s241, 1
    %s243 = scalar_select %p240, %s241, %s242
    %p246 = pneg %p240
    %p247 = scmp.eq.s32.totalorder %s16, 1
    %p248 = por %p246, %p247
    %p249 = scmp.ne.s32.totalorder %s241, %s244
    %p250 = scmp.eq.s32.totalorder %s16, 0
    %p251 = por %p249, %p250
    %p252 = scmp.ne.s32.totalorder %s241, %s244
    %p253 = scmp.eq.s32.totalorder %s21, 1
    %p254 = por %p252, %p253
    %p255 = scmp.ne.s32.totalorder %s244, %s245
    %p256 = scmp.eq.s32.totalorder %s21, 0
    %p257 = por %p255, %p256
    %p258 = scmp.ne.s32.totalorder %s244, %s245
    %p259 = scmp.eq.s32.totalorder %s22, 1
    %p260 = por %p258, %p259
    %p262 = scmp.ne.s32.totalorder %s245, %s261
    %p263 = scmp.eq.s32.totalorder %s22, 0
    %p264 = por %p262, %p263
    %p265 = scmp.le.s32.totalorder 1, %s16
    %p266 = scmp.lt.s32.totalorder %s16, 3
    %p267 = pnand %p265, %p266
    %p268 = pneg %p267
    // Predicated region
    $region9: #{ghost_bottleneck_forward.1} parent=5 // pred_check
      _
    $region10: #{ghost_bottleneck_forward.1} parent=5 // pred_check_branch
      %270 = sbr.rel (%p267) target = $region12
    $region11: #{ghost_bottleneck_forward.1} parent=5 // pred_region
      %s271 = ssub.s32 %s16, 1
      // Predicated region
      $region13: #{ghost_bottleneck_forward.1} parent=11 // pred_check
        %p272 = pneg %p63
      $region14: #{ghost_bottleneck_forward.1} parent=11 // pred_check_branch
        %274 = sbr.rel (%p272) target = $region16
      $region15: #{ghost_bottleneck_forward.1} parent=11 // pred_region
        _
      $region16: #{ghost_bottleneck_forward.1} parent=11 // pred_fallthru
        _
      // Predicated region
      $region17: #{ghost_bottleneck_forward.1} parent=11 // pred_check
        %p275 = pneg %p84
      $region18: #{ghost_bottleneck_forward.1} parent=11 // pred_check_branch
        %277 = sbr.rel (%p275) target = $region20
      $region19: #{ghost_bottleneck_forward.1} parent=11 // pred_region
        _
      $region20: #{ghost_bottleneck_forward.1} parent=11 // pred_fallthru
        _
      // Predicated region
      $region21: #{ghost_bottleneck_forward.1} parent=11 // pred_check
        %p278 = pneg %p105
      $region22: #{ghost_bottleneck_forward.1} parent=11 // pred_check_branch
        %280 = sbr.rel (%p278) target = $region24
      $region23: #{ghost_bottleneck_forward.1} parent=11 // pred_region
        _
      $region24: #{ghost_bottleneck_forward.1} parent=11 // pred_fallthru
        _
      // Predicated region
      $region25: #{ghost_bottleneck_forward.1} parent=11 // pred_check
        %p281 = pneg %p126
      $region26: #{ghost_bottleneck_forward.1} parent=11 // pred_check_branch
        %283 = sbr.rel (%p281) target = $region28
      $region27: #{ghost_bottleneck_forward.1} parent=11 // pred_region
        _
      $region28: #{ghost_bottleneck_forward.1} parent=11 // pred_fallthru
        _
      // Predicated region
      $region29: #{ghost_bottleneck_forward.1} parent=11 // pred_check
        %p284 = pneg %p147
      $region30: #{ghost_bottleneck_forward.1} parent=11 // pred_check_branch
        %286 = sbr.rel (%p284) target = $region32
      $region31: #{ghost_bottleneck_forward.1} parent=11 // pred_region
        _
      $region32: #{ghost_bottleneck_forward.1} parent=11 // pred_fallthru
        _
      // Predicated region
      $region33: #{ghost_bottleneck_forward.1} parent=11 // pred_check
        %p287 = pneg %p168
      $region34: #{ghost_bottleneck_forward.1} parent=11 // pred_check_branch
        %289 = sbr.rel (%p287) target = $region36
      $region35: #{ghost_bottleneck_forward.1} parent=11 // pred_region
        _
      $region36: #{ghost_bottleneck_forward.1} parent=11 // pred_fallthru
        _
      // Predicated region
      $region37: #{ghost_bottleneck_forward.1} parent=11 // pred_check
        %p290 = pneg %p189
      $region38: #{ghost_bottleneck_forward.1} parent=11 // pred_check_branch
        %292 = sbr.rel (%p290) target = $region40
      $region39: #{ghost_bottleneck_forward.1} parent=11 // pred_region
        _
      $region40: #{ghost_bottleneck_forward.1} parent=11 // pred_fallthru
        _
      // Predicated region
      $region41: #{ghost_bottleneck_forward.1} parent=11 // pred_check
        %p293 = pneg %p210
      $region42: #{ghost_bottleneck_forward.1} parent=11 // pred_check_branch
        %295 = sbr.rel (%p293) target = $region44
      $region43: #{ghost_bottleneck_forward.1} parent=11 // pred_region
        _
      $region44: #{ghost_bottleneck_forward.1} parent=11 // pred_fallthru
        _
      // Predicated region
      $region45: #{ghost_bottleneck_forward.1} parent=11 // pred_check
        %p296 = pneg %p231
      $region46: #{ghost_bottleneck_forward.1} parent=11 // pred_check_branch
        %298 = sbr.rel (%p296) target = $region48
      $region47: #{ghost_bottleneck_forward.1} parent=11 // pred_region
        _
      $region48: #{ghost_bottleneck_forward.1} parent=11 // pred_fallthru
        _
    $region12: #{ghost_bottleneck_forward.1} parent=5 // pred_fallthru
      _
    %p299 = scmp.lt.s32.totalorder %s16, 2
    // Predicated region
    $region49: #{ghost_bottleneck_forward.1} parent=5 // pred_check
      %p300 = pneg %p299
    $region50: #{ghost_bottleneck_forward.1} parent=5 // pred_check_branch
      %302 = sbr.rel (%p300) target = $region52
    $region51: #{ghost_bottleneck_forward.1} parent=5 // pred_region
      // Predicated region
      $region53: #{ghost_bottleneck_forward.1} parent=51 // pred_check
        %p303 = pneg %p36
      $region54: #{ghost_bottleneck_forward.1} parent=51 // pred_check_branch
        %305 = sbr.rel (%p303) target = $region56
      $region55: #{ghost_bottleneck_forward.1} parent=51 // pred_region
        %p306 = scmp.lt.s32.totalorder %s16, 1
        %s307 = scalar_select %p306, %s16, 1
        %s308 = smul.addr %s307, 2
        %s309 = smul.addr %s308, 8
        %s310 = scalar_lea.vmem %s0, %s309
      $region56: #{ghost_bottleneck_forward.1} parent=51 // pred_fallthru
        _
    $region52: #{ghost_bottleneck_forward.1} parent=5 // pred_fallthru
      _
    %p311 = scmp.le.s32.totalorder 1, %s16
    %p312 = scmp.lt.s32.totalorder %s16, 3
    %p313 = pnand %p311, %p312
    %p314 = pneg %p313
    // Predicated region
    $region57: #{ghost_bottleneck_forward.1} parent=5 // pred_check
      _
    $region58: #{ghost_bottleneck_forward.1} parent=5 // pred_check_branch
      %316 = sbr.rel (%p313) target = $region60
    $region59: #{ghost_bottleneck_forward.1} parent=5 // pred_region
      %s317 = ssub.s32 %s16, 1
      %p318 = scmp.lt.s32.totalorder %s21, 1
      %s319 = scalar_select %p318, %s21, 1
      %s320 = smul.addr %s319, 2
      %s321 = smul.addr %s320, 8
      %s322 = scalar_lea.vmem %s0, %s321
      %p323 = pneg %p42
      %p324 = pneg %p39
      %p325 = pneg %p63
      %p326 = pneg %p60
      %p327 = pneg %p84
      %p328 = pneg %p81
      %p329 = pneg %p105
      %p330 = pneg %p102
      %p331 = pneg %p126
      %p332 = pneg %p123
      %p333 = pneg %p147
      %p334 = pneg %p144
      %p335 = pneg %p168
      %p336 = pneg %p165
      %p337 = pneg %p189
      %p338 = pneg %p186
      %p339 = pneg %p210
      %p340 = pneg %p207
      %p341 = pneg %p231
      %p342 = pneg %p228
      %p343 = pneg %p257
      %p344 = pneg %p254
      %p345 = scmp.lt.s32.totalorder %s21, 1
      %s346 = scalar_select %p345, %s21, 1
      %s347 = smul.addr %s346, 2
      %s348 = smul.addr %s347, 8
      %s349 = scalar_lea.vmem %s10, %s348
      %p350 = scmp.lt.s32.totalorder %s21, 1
      %s351 = scalar_select %p350, %s21, 1
      %s352 = smul.addr %s351, 2
      %s353 = smul.addr %s352, 8
      %s354 = scalar_lea.vmem %s0, %s353
      %p355 = scmp.lt.s32.totalorder %s21, 1
      %s356 = scalar_select %p355, %s21, 1
      %s357 = smul.addr %s356, 2
      %s358 = smul.addr %s357, 8
      %s359 = scalar_lea.vmem %s10, %s358
      %v360 = vld [vmem:[%s354] sm:$0xff]
      %v361 = vld [vmem:[%s354 + $0x8] sm:$0xff]
      %v362 = vld [vmem:[%s1] sm:$0x3]
      %v363 = vld [vmem:[%s2] sm:$0x3]
      %365 = vset.pattern.permute.xlu0 0
      %366 = vperm.xlu0 %365, %v363
      %v367 = vpop.permute.xlu0 %366
      %vm369 = vcmask 64512
      %v371 = vsel %vm369, %v362, 0
      %373 = vmatprep.subr.mxu0 %v361
      %374 = vmatpush1.msra.mxu0 %v360
      %375 = vmatprep.subr.mxu0 0.0
      %376 = vmatpush1.msra.mxu0 0.0
      %377 = vmatprep.subr.mxu0 0.0
      %378 = vmatpush1.msra.mxu0 0.0
      %379 = vmatprep.subr.mxu0 0.0
      %380 = vmatpush1.msra.mxu0 0.0
      %381 = vmatprep.subr.mxu0 0.0
      %382 = vmatpush1.msra.mxu0 0.0
      %383 = vmatprep.subr.mxu0 0.0
      %384 = vmatpush1.msra.mxu0 0.0
      %385 = vmatprep.subr.mxu0 0.0
      %386 = vmatpush1.msra.mxu0 0.0
      %387 = vmatprep.subr.mxu0 0.0
      %388 = vmatpush1.msra.mxu0 0.0
      %389 = vmatprep.subr.mxu0 0.0
      %390 = vmatpush1.msra.mxu0 0.0
      %391 = vmatprep.subr.mxu0 0.0
      %392 = vmatpush1.msra.mxu0 0.0
      %393 = vmatprep.subr.mxu0 0.0
      %394 = vmatpush1.msra.mxu0 0.0
      %395 = vmatprep.subr.mxu0 0.0
      %396 = vmatpush1.msra.mxu0 0.0
      %397 = vmatprep.subr.mxu0 0.0
      %398 = vmatpush1.msra.mxu0 0.0
      %399 = vmatprep.subr.mxu0 0.0
      %400 = vmatpush1.msra.mxu0 0.0
      %401 = vmatprep.subr.mxu0 0.0
      %402 = vmatpush1.msra.mxu0 0.0
      %403 = vmatprep.subr.mxu0 0.0
      %404 = vmatpush1.msra.mxu0 0.0
      %405 = vmatprep.subr.mxu0 0.0
      %406 = vmatpush1.msra.mxu0 0.0
      %407 = vmatprep.subr.mxu0 0.0
      %408 = vmatpush1.msra.mxu0 0.0
      %409 = vmatprep.subr.mxu0 0.0
      %410 = vmatpush1.msra.mxu0 0.0
      %411 = vmatprep.subr.mxu0 0.0
      %412 = vmatpush1.msra.mxu0 0.0
      %413 = vmatprep.subr.mxu0 0.0
      %414 = vmatpush1.msra.mxu0 0.0
      %415 = vmatprep.subr.mxu0 0.0
      %416 = vmatpush1.msra.mxu0 0.0
      %417 = vmatprep.subr.mxu0 0.0
      %418 = vmatpush1.msra.mxu0 0.0
      %419 = vmatprep.subr.mxu0 0.0
      %420 = vmatpush1.msra.mxu0 0.0
      %421 = vmatprep.subr.mxu0 0.0
      %422 = vmatpush1.msra.mxu0 0.0
      %423 = vmatprep.subr.mxu0 0.0
      %424 = vmatpush1.msra.mxu0 0.0
      %425 = vmatprep.subr.mxu0 0.0
      %426 = vmatpush1.msra.mxu0 0.0
      %427 = vmatprep.subr.mxu0 0.0
      %428 = vmatpush1.msra.mxu0 0.0
      %429 = vmatprep.subr.mxu0 0.0
      %430 = vmatpush1.msra.mxu0 0.0
      %431 = vmatprep.subr.mxu0 0.0
      %432 = vmatpush1.msra.mxu0 0.0
      %433 = vmatprep.subr.mxu0 0.0
      %434 = vmatpush1.msra.mxu0 0.0
      %435 = vmatprep.subr.mxu0 0.0
      %436 = vmatpush1.msra.mxu0 0.0
      %437 = vmatprep.mubr.f32.mxu0 0.0
      %438 = vmatmul.mubr.f32.gmra.mrb[0].mxu0 %v371
      %v439 = vpop.f32.mrb[0].mxu0
      %v440 = vadd.f32 %v367, %v439
      %v441 = vpop.f32.mrb[0].mxu0
      %v442 = vadd.f32 %v367, %v441
      %443 = vdwg.mxu0
      %v444 = vmax.f32 %v440, 0.0
      %v445 = vmax.f32 %v442, 0.0
      %v446 = vand.u32 2147483647, %v440
      %v447 = vand.u32 2147483647, %v442
      %v448 = vsub.f32 0.0, %v446
      %v449 = vsub.f32 0.0, %v447
      %v450 = vmul.f32 %v448, 1.442695
      %v451 = vpow.pop %v450
      %v452 = vmul.f32 %v449, 1.442695
      %v453 = vpow.pop %v452
      %v454 = vadd.f32 %v451, 1.0
      %v455 = vadd.f32 %v453, 1.0
      %v456 = vlog2.pop %v454
      %v457 = vmul.f32 %v456, 0.6931472
      %v458 = vlog2.pop %v455
      %v459 = vmul.f32 %v458, 0.6931472
      %v460 = vadd.f32 %v444, %v457
      %v461 = vadd.f32 %v445, %v459
      %v462 = vtanh.pop %v460
      %v463 = vtanh.pop %v461
      %v464 = vmul.f32 %v440, %v462
      %v465 = vmul.f32 %v442, %v463
      %v466 = vld [vmem:[%s3] sm:$0x3]
      %v467 = vld [vmem:[%s4] sm:$0x3]
      %468 = vst [vmem:[#allocation2] sm:$0xff] 0.0
      %v471 = vcombine.low %v464, %v465
      %v473 = vunpack.c.l.s4 1983009808
      %v474 = vunpack.c.0.s8 %v473
      %v475 = vlaneseq
      %v476 = vshrl.u32 %v475, 7
      %v477 = vsub.s32 %v474, %v476
      %v478 = vrot.slane %v471, %v477
      %480 = vst [vmem:[#allocation2 + $0x2] sm:$0xf] %v478
      %v481 = vlaneseq
      %v482 = vand.u32 %v481, 127
      %v483 = vadd.s32 %v482, 128
      %vm484 = vcmp.lt.s32.totalorder %v482, 0
      %v485 = vsub.s32 0, %v482
      %v486 = vsel %vm484, %v485, %v482
      %v487 = vshrl.u32 %v486, 4
      %v488 = vand.u32 %v486, 15
      %v489 = vsub.s32 0, %v488
      %v490 = vsel %vm484, %v489, %v488
      %vm491 = vcmp.lt.s32.totalorder %v483, 0
      %v492 = vsub.s32 0, %v483
      %v493 = vsel %vm491, %v492, %v483
      %v494 = vshrl.u32 %v493, 4
      %v495 = vand.u32 %v493, 15
      %v496 = vsub.s32 0, %v495
      %v497 = vsel %vm491, %v496, %v495
      %vm498 = vcmp.ne.s32.totalorder %v490, 0
      %vm499 = vcmp.ne.s32.totalorder %v497, 0
      %vm500 = vcmp.lt.s32.totalorder %v490, 0
      %vm501 = vcmp.lt.s32.totalorder %v497, 0
      %vm502 = vmand %vm500, %vm498
      %vm503 = vmand %vm501, %vm499
      %v504 = vadd.s32 %v490, 16
      %v505 = vadd.s32 %v497, 16
      %v506 = vsel %vm502, %v504, %v490
      %v507 = vsel %vm503, %v505, %v497
      %v508 = vld [vmem:[#allocation2] sm:$0x3f]
      %v509 = vadd.s32 %v506, 4294967294
      %v510 = vadd.s32 %v507, 4294967294
      %vm511 = vcmp.ge.s32.totalorder %v509, 0
      %vm512 = vcmp.ge.s32.totalorder %v510, 0
      %vm513 = vcmp.lt.s32.totalorder %v509, 16
      %vm514 = vcmp.lt.s32.totalorder %v510, 16
      %vm515 = vmand %vm511, %vm513
      %vm516 = vmand %vm512, %vm514
      %v518 = vcombine.high %v508, %v508
      %v520 = vunpack.c.l.s4 1983009808
      %v521 = vunpack.c.0.s8 %v520
      %v522 = vlaneseq
      %v523 = vshrl.u32 %v522, 7
      %v524 = vsub.s32 %v521, %v523
      %v525 = vrot.slane %v508, %v524
      %v527 = vunpack.c.l.s4 1983009808
      %v528 = vunpack.c.0.s8 %v527
      %v529 = vlaneseq
      %v530 = vshrl.u32 %v529, 7
      %v531 = vsub.s32 %v528, %v530
      %v532 = vrot.slane %v518, %v531
      %v533 = vcombine.high %v525, %v525
      %534 = vrot.lane.b32.xlu0 %v525, 34
      %v535 = vpop.permute.xlu0 %534
      %536 = vrot.lane.b32.xlu0 %v533, 34
      %v537 = vpop.permute.xlu0 %536
      %538 = vrot.lane.b32.xlu0 %v532, 34
      %v539 = vpop.permute.xlu0 %538
      %vm540 = vcmask 277504
      %v541 = vsel %vm540, %v535, %v537
      %v542 = vsel %vm540, %v537, %v539
      %v545 = vsel %vm515, %v541, 0.0
      %v546 = vsel %vm516, %v542, 0.0
      %548 = vset.pattern.permute.xlu0 0
      %549 = vperm.xlu0 %548, %v466
      %v550 = vpop.permute.xlu0 %549
      %v552 = vmul.f32 %v545, %v550
      %v553 = vmul.f32 %v546, %v550
      %v554 = vadd.f32 %v552, 0.0
      %v555 = vadd.f32 %v553, 0.0
      %v556 = vld [vmem:[#allocation2] sm:$0x3f]
      %v557 = vadd.s32 %v506, 4294967295
      %v558 = vadd.s32 %v507, 4294967295
      %vm559 = vcmp.ge.s32.totalorder %v557, 0
      %vm560 = vcmp.ge.s32.totalorder %v558, 0
      %vm561 = vcmp.lt.s32.totalorder %v557, 16
      %vm562 = vcmp.lt.s32.totalorder %v558, 16
      %vm563 = vmand %vm559, %vm561
      %vm564 = vmand %vm560, %vm562
      %v566 = vcombine.high %v556, %v556
      %v568 = vunpack.c.l.s4 1983009808
      %v569 = vunpack.c.0.s8 %v568
      %v570 = vlaneseq
      %v571 = vshrl.u32 %v570, 7
      %v572 = vsub.s32 %v569, %v571
      %v573 = vrot.slane %v556, %v572
      %v575 = vunpack.c.l.s4 1983009808
      %v576 = vunpack.c.0.s8 %v575
      %v577 = vlaneseq
      %v578 = vshrl.u32 %v577, 7
      %v579 = vsub.s32 %v576, %v578
      %v580 = vrot.slane %v566, %v579
      %v581 = vcombine.high %v573, %v573
      %582 = vrot.lane.b32.xlu0 %v573, 33
      %v583 = vpop.permute.xlu0 %582
      %584 = vrot.lane.b32.xlu0 %v581, 33
      %v585 = vpop.permute.xlu0 %584
      %586 = vrot.lane.b32.xlu0 %v580, 33
      %v587 = vpop.permute.xlu0 %586
      %vm588 = vcmask 269312
      %v589 = vsel %vm588, %v583, %v585
      %v590 = vsel %vm588, %v585, %v587
      %v593 = vsel %vm563, %v589, 0.0
      %v594 = vsel %vm564, %v590, 0.0
      %595 = vset.pattern.permute.xlu0 1
      %596 = vperm.xlu0 %595, %v466
      %v597 = vpop.permute.xlu0 %596
      %v599 = vmul.f32 %v593, %v597
      %v600 = vmul.f32 %v594, %v597
      %v601 = vadd.f32 %v554, %v599
      %v602 = vadd.f32 %v555, %v600
      %v603 = vld [vmem:[#allocation2] sm:$0x3f]
      %vm604 = vcmp.ge.s32.totalorder %v506, 0
      %vm605 = vcmp.ge.s32.totalorder %v507, 0
      %vm606 = vcmp.lt.s32.totalorder %v506, 16
      %vm607 = vcmp.lt.s32.totalorder %v507, 16
      %vm608 = vmand %vm604, %vm606
      %vm609 = vmand %vm605, %vm607
      %v611 = vcombine.high %v603, %v603
      %v613 = vunpack.c.l.s4 1983009808
      %v614 = vunpack.c.0.s8 %v613
      %v615 = vlaneseq
      %v616 = vshrl.u32 %v615, 7
      %v617 = vsub.s32 %v614, %v616
      %v618 = vrot.slane %v603, %v617
      %v620 = vunpack.c.l.s4 1983009808
      %v621 = vunpack.c.0.s8 %v620
      %v622 = vlaneseq
      %v623 = vshrl.u32 %v622, 7
      %v624 = vsub.s32 %v621, %v623
      %v625 = vrot.slane %v611, %v624
      %v626 = vcombine.high %v618, %v618
      %627 = vrot.lane.b32.xlu0 %v618, 32
      %v628 = vpop.permute.xlu0 %627
      %629 = vrot.lane.b32.xlu0 %v626, 32
      %v630 = vpop.permute.xlu0 %629
      %631 = vrot.lane.b32.xlu0 %v625, 32
      %v632 = vpop.permute.xlu0 %631
      %vm633 = vcmask 261120
      %v634 = vsel %vm633, %v628, %v630
      %v635 = vsel %vm633, %v630, %v632
      %v638 = vsel %vm608, %v634, 0.0
      %v639 = vsel %vm609, %v635, 0.0
      %640 = vset.pattern.permute.xlu0 2
      %641 = vperm.xlu0 %640, %v466
      %v642 = vpop.permute.xlu0 %641
      %v644 = vmul.f32 %v638, %v642
      %v645 = vmul.f32 %v639, %v642
      %v646 = vadd.f32 %v601, %v644
      %v647 = vadd.f32 %v602, %v645
      %v648 = vld [vmem:[#allocation2] sm:$0x3f]
      %v649 = vadd.s32 %v506, 1
      %v650 = vadd.s32 %v507, 1
      %vm651 = vcmp.ge.s32.totalorder %v649, 0
      %vm652 = vcmp.ge.s32.totalorder %v650, 0
      %vm653 = vcmp.lt.s32.totalorder %v649, 16
      %vm654 = vcmp.lt.s32.totalorder %v650, 16
      %vm655 = vmand %vm651, %vm653
      %vm656 = vmand %vm652, %vm654
      %v658 = vcombine.high %v648, %v648
      %v660 = vunpack.c.l.s4 1983009808
      %v661 = vunpack.c.0.s8 %v660
      %v662 = vlaneseq
      %v663 = vshrl.u32 %v662, 7
      %v664 = vsub.s32 %v661, %v663
      %v665 = vrot.slane %v648, %v664
      %v667 = vunpack.c.l.s4 1983009808
      %v668 = vunpack.c.0.s8 %v667
      %v669 = vlaneseq
      %v670 = vshrl.u32 %v669, 7
      %v671 = vsub.s32 %v668, %v670
      %v672 = vrot.slane %v658, %v671
      %v673 = vcombine.high %v665, %v665
      %674 = vrot.lane.b32.xlu0 %v665, 31
      %v675 = vpop.permute.xlu0 %674
      %676 = vrot.lane.b32.xlu0 %v673, 31
      %v677 = vpop.permute.xlu0 %676
      %678 = vrot.lane.b32.xlu0 %v672, 31
      %v679 = vpop.permute.xlu0 %678
      %vm680 = vcmask 252928
      %v681 = vsel %vm680, %v675, %v677
      %v682 = vsel %vm680, %v677, %v679
      %v685 = vsel %vm655, %v681, 0.0
      %v686 = vsel %vm656, %v682, 0.0
      %687 = vset.pattern.permute.xlu0 3
      %688 = vperm.xlu0 %687, %v466
      %v689 = vpop.permute.xlu0 %688
      %v691 = vmul.f32 %v685, %v689
      %v692 = vmul.f32 %v686, %v689
      %v693 = vadd.f32 %v646, %v691
      %v694 = vadd.f32 %v647, %v692
      %v695 = vld [vmem:[#allocation2] sm:$0x3f]
      %v696 = vadd.s32 %v506, 2
      %v697 = vadd.s32 %v507, 2
      %vm698 = vcmp.ge.s32.totalorder %v696, 0
      %vm699 = vcmp.ge.s32.totalorder %v697, 0
      %vm700 = vcmp.lt.s32.totalorder %v696, 16
      %vm701 = vcmp.lt.s32.totalorder %v697, 16
      %vm702 = vmand %vm698, %vm700
      %vm703 = vmand %vm699, %vm701
      %v705 = vcombine.high %v695, %v695
      %v707 = vunpack.c.l.s4 1983009808
      %v708 = vunpack.c.0.s8 %v707
      %v709 = vlaneseq
      %v710 = vshrl.u32 %v709, 7
      %v711 = vsub.s32 %v708, %v710
      %v712 = vrot.slane %v695, %v711
      %v714 = vunpack.c.l.s4 1983009808
      %v715 = vunpack.c.0.s8 %v714
      %v716 = vlaneseq
      %v717 = vshrl.u32 %v716, 7
      %v718 = vsub.s32 %v715, %v717
      %v719 = vrot.slane %v705, %v718
      %v720 = vcombine.high %v712, %v712
      %721 = vrot.lane.b32.xlu0 %v712, 30
      %v722 = vpop.permute.xlu0 %721
      %723 = vrot.lane.b32.xlu0 %v720, 30
      %v724 = vpop.permute.xlu0 %723
      %725 = vrot.lane.b32.xlu0 %v719, 30
      %v726 = vpop.permute.xlu0 %725
      %vm727 = vcmask 244736
      %v728 = vsel %vm727, %v722, %v724
      %v729 = vsel %vm727, %v724, %v726
      %v732 = vsel %vm702, %v728, 0.0
      %v733 = vsel %vm703, %v729, 0.0
      %734 = vset.pattern.permute.xlu0 4
      %735 = vperm.xlu0 %734, %v466
      %v736 = vpop.permute.xlu0 %735
      %v738 = vmul.f32 %v732, %v736
      %v739 = vmul.f32 %v733, %v736
      %v740 = vadd.f32 %v693, %v738
      %v741 = vadd.f32 %v694, %v739
      %v742 = vld [vmem:[#allocation2] sm:$0x3f]
      %v744 = vcombine.high %v742, %v742
      %v746 = vunpack.c.l.s4 1983009808
      %v747 = vunpack.c.0.s8 %v746
      %v748 = vlaneseq
      %v749 = vshrl.u32 %v748, 7
      %v750 = vsub.s32 %v747, %v749
      %v751 = vrot.slane %v742, %v750
      %v753 = vunpack.c.l.s4 1983009808
      %v754 = vunpack.c.0.s8 %v753
      %v755 = vlaneseq
      %v756 = vshrl.u32 %v755, 7
      %v757 = vsub.s32 %v754, %v756
      %v758 = vrot.slane %v744, %v757
      %v759 = vcombine.high %v751, %v751
      %760 = vrot.lane.b32.xlu0 %v751, 18
      %v761 = vpop.permute.xlu0 %760
      %762 = vrot.lane.b32.xlu0 %v759, 18
      %v763 = vpop.permute.xlu0 %762
      %764 = vrot.lane.b32.xlu0 %v758, 18
      %v765 = vpop.permute.xlu0 %764
      %vm766 = vcmask 146432
      %v767 = vsel %vm766, %v761, %v763
      %v768 = vsel %vm766, %v763, %v765
      %v771 = vsel %vm515, %v767, 0.0
      %v772 = vsel %vm516, %v768, 0.0
      %773 = vset.pattern.permute.xlu0 5
      %774 = vperm.xlu0 %773, %v466
      %v775 = vpop.permute.xlu0 %774
      %v777 = vmul.f32 %v771, %v775
      %v778 = vmul.f32 %v772, %v775
      %v779 = vadd.f32 %v740, %v777
      %v780 = vadd.f32 %v741, %v778
      %v781 = vld [vmem:[#allocation2] sm:$0x3f]
      %v783 = vcombine.high %v781, %v781
      %v785 = vunpack.c.l.s4 1983009808
      %v786 = vunpack.c.0.s8 %v785
      %v787 = vlaneseq
      %v788 = vshrl.u32 %v787, 7
      %v789 = vsub.s32 %v786, %v788
      %v790 = vrot.slane %v781, %v789
      %v792 = vunpack.c.l.s4 1983009808
      %v793 = vunpack.c.0.s8 %v792
      %v794 = vlaneseq
      %v795 = vshrl.u32 %v794, 7
      %v796 = vsub.s32 %v793, %v795
      %v797 = vrot.slane %v783, %v796
      %v798 = vcombine.high %v790, %v790
      %799 = vrot.lane.b32.xlu0 %v790, 17
      %v800 = vpop.permute.xlu0 %799
      %801 = vrot.lane.b32.xlu0 %v798, 17
      %v802 = vpop.permute.xlu0 %801
      %803 = vrot.lane.b32.xlu0 %v797, 17
      %v804 = vpop.permute.xlu0 %803
      %vm805 = vcmask 138240
      %v806 = vsel %vm805, %v800, %v802
      %v807 = vsel %vm805, %v802, %v804
      %v810 = vsel %vm563, %v806, 0.0
      %v811 = vsel %vm564, %v807, 0.0
      %812 = vset.pattern.permute.xlu0 6
      %813 = vperm.xlu0 %812, %v466
      %v814 = vpop.permute.xlu0 %813
      %v816 = vmul.f32 %v810, %v814
      %v817 = vmul.f32 %v811, %v814
      %v818 = vadd.f32 %v779, %v816
      %v819 = vadd.f32 %v780, %v817
      %v820 = vld [vmem:[#allocation2] sm:$0x3f]
      %v822 = vcombine.high %v820, %v820
      %v824 = vunpack.c.l.s4 1983009808
      %v825 = vunpack.c.0.s8 %v824
      %v826 = vlaneseq
      %v827 = vshrl.u32 %v826, 7
      %v828 = vsub.s32 %v825, %v827
      %v829 = vrot.slane %v820, %v828
      %v831 = vunpack.c.l.s4 1983009808
      %v832 = vunpack.c.0.s8 %v831
      %v833 = vlaneseq
      %v834 = vshrl.u32 %v833, 7
      %v835 = vsub.s32 %v832, %v834
      %v836 = vrot.slane %v822, %v835
      %v837 = vcombine.high %v829, %v829
      %838 = vrot.lane.b32.xlu0 %v829, 16
      %v839 = vpop.permute.xlu0 %838
      %840 = vrot.lane.b32.xlu0 %v837, 16
      %v841 = vpop.permute.xlu0 %840
      %842 = vrot.lane.b32.xlu0 %v836, 16
      %v843 = vpop.permute.xlu0 %842
      %vm844 = vcmask 130048
      %v845 = vsel %vm844, %v839, %v841
      %v846 = vsel %vm844, %v841, %v843
      %v849 = vsel %vm608, %v845, 0.0
      %v850 = vsel %vm609, %v846, 0.0
      %851 = vset.pattern.permute.xlu0 7
      %852 = vperm.xlu0 %851, %v466
      %v853 = vpop.permute.xlu0 %852
      %v855 = vmul.f32 %v849, %v853
      %v856 = vmul.f32 %v850, %v853
      %v857 = vadd.f32 %v818, %v855
      %v858 = vadd.f32 %v819, %v856
      %v859 = vld [vmem:[#allocation2] sm:$0x3f]
      %v861 = vcombine.high %v859, %v859
      %v863 = vunpack.c.l.s4 1983009808
      %v864 = vunpack.c.0.s8 %v863
      %v865 = vlaneseq
      %v866 = vshrl.u32 %v865, 7
      %v867 = vsub.s32 %v864, %v866
      %v868 = vrot.slane %v859, %v867
      %v870 = vunpack.c.l.s4 1983009808
      %v871 = vunpack.c.0.s8 %v870
      %v872 = vlaneseq
      %v873 = vshrl.u32 %v872, 7
      %v874 = vsub.s32 %v871, %v873
      %v875 = vrot.slane %v861, %v874
      %v876 = vcombine.high %v868, %v868
      %877 = vrot.lane.b32.xlu0 %v868, 15
      %v878 = vpop.permute.xlu0 %877
      %879 = vrot.lane.b32.xlu0 %v876, 15
      %v880 = vpop.permute.xlu0 %879
      %881 = vrot.lane.b32.xlu0 %v875, 15
      %v882 = vpop.permute.xlu0 %881
      %vm883 = vcmask 121856
      %v884 = vsel %vm883, %v878, %v880
      %v885 = vsel %vm883, %v880, %v882
      %v888 = vsel %vm655, %v884, 0.0
      %v889 = vsel %vm656, %v885, 0.0
      %890 = vset.pattern.permute.xlu0 8
      %891 = vperm.xlu0 %890, %v466
      %v892 = vpop.permute.xlu0 %891
      %v894 = vmul.f32 %v888, %v892
      %v895 = vmul.f32 %v889, %v892
      %v896 = vadd.f32 %v857, %v894
      %v897 = vadd.f32 %v858, %v895
      %v898 = vld [vmem:[#allocation2] sm:$0x3f]
      %v900 = vcombine.high %v898, %v898
      %v902 = vunpack.c.l.s4 1983009808
      %v903 = vunpack.c.0.s8 %v902
      %v904 = vlaneseq
      %v905 = vshrl.u32 %v904, 7
      %v906 = vsub.s32 %v903, %v905
      %v907 = vrot.slane %v898, %v906
      %v909 = vunpack.c.l.s4 1983009808
      %v910 = vunpack.c.0.s8 %v909
      %v911 = vlaneseq
      %v912 = vshrl.u32 %v911, 7
      %v913 = vsub.s32 %v910, %v912
      %v914 = vrot.slane %v900, %v913
      %v915 = vcombine.high %v907, %v907
      %916 = vrot.lane.b32.xlu0 %v907, 14
      %v917 = vpop.permute.xlu0 %916
      %918 = vrot.lane.b32.xlu0 %v915, 14
      %v919 = vpop.permute.xlu0 %918
      %920 = vrot.lane.b32.xlu0 %v914, 14
      %v921 = vpop.permute.xlu0 %920
      %vm922 = vcmask 113664
      %v923 = vsel %vm922, %v917, %v919
      %v924 = vsel %vm922, %v919, %v921
      %v927 = vsel %vm702, %v923, 0.0
      %v928 = vsel %vm703, %v924, 0.0
      %929 = vset.pattern.permute.xlu0 9
      %930 = vperm.xlu0 %929, %v466
      %v931 = vpop.permute.xlu0 %930
      %v933 = vmul.f32 %v927, %v931
      %v934 = vmul.f32 %v928, %v931
      %v935 = vadd.f32 %v896, %v933
      %v936 = vadd.f32 %v897, %v934
      %v937 = vld [vmem:[#allocation2] sm:$0x3f]
      %v939 = vcombine.high %v937, %v937
      %v941 = vunpack.c.l.s4 1983009808
      %v942 = vunpack.c.0.s8 %v941
      %v943 = vlaneseq
      %v944 = vshrl.u32 %v943, 7
      %v945 = vsub.s32 %v942, %v944
      %v946 = vrot.slane %v937, %v945
      %v948 = vunpack.c.l.s4 1983009808
      %v949 = vunpack.c.0.s8 %v948
      %v950 = vlaneseq
      %v951 = vshrl.u32 %v950, 7
      %v952 = vsub.s32 %v949, %v951
      %v953 = vrot.slane %v939, %v952
      %v954 = vcombine.high %v946, %v946
      %955 = vrot.lane.b32.xlu0 %v946, 2
      %v956 = vpop.permute.xlu0 %955
      %957 = vrot.lane.b32.xlu0 %v954, 2
      %v958 = vpop.permute.xlu0 %957
      %959 = vrot.lane.b32.xlu0 %v953, 2
      %v960 = vpop.permute.xlu0 %959
      %vm961 = vcmask 15360
      %v962 = vsel %vm961, %v956, %v958
      %v963 = vsel %vm961, %v958, %v960
      %v966 = vsel %vm515, %v962, 0.0
      %v967 = vsel %vm516, %v963, 0.0
      %968 = vset.pattern.permute.xlu0 10
      %969 = vperm.xlu0 %968, %v466
      %v970 = vpop.permute.xlu0 %969
      %v972 = vmul.f32 %v966, %v970
      %v973 = vmul.f32 %v967, %v970
      %v974 = vadd.f32 %v935, %v972
      %v975 = vadd.f32 %v936, %v973
      %v976 = vld [vmem:[#allocation2] sm:$0x3f]
      %v978 = vcombine.high %v976, %v976
      %v980 = vunpack.c.l.s4 1983009808
      %v981 = vunpack.c.0.s8 %v980
      %v982 = vlaneseq
      %v983 = vshrl.u32 %v982, 7
      %v984 = vsub.s32 %v981, %v983
      %v985 = vrot.slane %v976, %v984
      %v987 = vunpack.c.l.s4 1983009808
      %v988 = vunpack.c.0.s8 %v987
      %v989 = vlaneseq
      %v990 = vshrl.u32 %v989, 7
      %v991 = vsub.s32 %v988, %v990
      %v992 = vrot.slane %v978, %v991
      %v993 = vcombine.high %v985, %v985
      %994 = vrot.lane.b32.xlu0 %v985, 1
      %v995 = vpop.permute.xlu0 %994
      %996 = vrot.lane.b32.xlu0 %v993, 1
      %v997 = vpop.permute.xlu0 %996
      %998 = vrot.lane.b32.xlu0 %v992, 1
      %v999 = vpop.permute.xlu0 %998
      %vm1000 = vcmask 7168
      %v1001 = vsel %vm1000, %v995, %v997
      %v1002 = vsel %vm1000, %v997, %v999
      %v1005 = vsel %vm563, %v1001, 0.0
      %v1006 = vsel %vm564, %v1002, 0.0
      %1007 = vset.pattern.permute.xlu0 11
      %1008 = vperm.xlu0 %1007, %v466
      %v1009 = vpop.permute.xlu0 %1008
      %v1011 = vmul.f32 %v1005, %v1009
      %v1012 = vmul.f32 %v1006, %v1009
      %v1013 = vadd.f32 %v974, %v1011
      %v1014 = vadd.f32 %v975, %v1012
      %v1015 = vld [vmem:[#allocation2 + $0x2] sm:$0xf]
      %v1018 = vunpack.c.l.s4 1983009808
      %v1019 = vunpack.c.0.s8 %v1018
      %v1020 = vlaneseq
      %v1021 = vshrl.u32 %v1020, 7
      %v1022 = vsub.s32 %v1019, %v1021
      %v1023 = vrot.slane %v1015, %v1022
      %v1024 = vcombine.high %v1023, %v1023
      %v1027 = vsel %vm608, %v1023, 0.0
      %v1028 = vsel %vm609, %v1024, 0.0
      %1029 = vset.pattern.permute.xlu0 12
      %1030 = vperm.xlu0 %1029, %v466
      %v1031 = vpop.permute.xlu0 %1030
      %v1033 = vmul.f32 %v1027, %v1031
      %v1034 = vmul.f32 %v1028, %v1031
      %v1035 = vadd.f32 %v1013, %v1033
      %v1036 = vadd.f32 %v1014, %v1034
      %v1037 = vld [vmem:[#allocation2 + $0x2] sm:$0x3f]
      %v1039 = vcombine.high %v1037, %v1037
      %v1041 = vunpack.c.l.s4 1983009808
      %v1042 = vunpack.c.0.s8 %v1041
      %v1043 = vlaneseq
      %v1044 = vshrl.u32 %v1043, 7
      %v1045 = vsub.s32 %v1042, %v1044
      %v1046 = vrot.slane %v1037, %v1045
      %v1048 = vunpack.c.l.s4 1983009808
      %v1049 = vunpack.c.0.s8 %v1048
      %v1050 = vlaneseq
      %v1051 = vshrl.u32 %v1050, 7
      %v1052 = vsub.s32 %v1049, %v1051
      %v1053 = vrot.slane %v1039, %v1052
      %v1054 = vcombine.high %v1046, %v1046
      %1055 = vrot.lane.b32.xlu0 %v1046, 127
      %v1056 = vpop.permute.xlu0 %1055
      %1057 = vrot.lane.b32.xlu0 %v1054, 127
      %v1058 = vpop.permute.xlu0 %1057
      %1059 = vrot.lane.b32.xlu0 %v1053, 127
      %v1060 = vpop.permute.xlu0 %1059
      %vm1061 = vcmask 1039360
      %v1062 = vsel %vm1061, %v1056, %v1058
      %v1063 = vsel %vm1061, %v1058, %v1060
      %v1066 = vsel %vm655, %v1062, 0.0
      %v1067 = vsel %vm656, %v1063, 0.0
      %1068 = vset.pattern.permute.xlu0 13
      %1069 = vperm.xlu0 %1068, %v466
      %v1070 = vpop.permute.xlu0 %1069
      %v1072 = vmul.f32 %v1066, %v1070
      %v1073 = vmul.f32 %v1067, %v1070
      %v1074 = vadd.f32 %v1035, %v1072
      %v1075 = vadd.f32 %v1036, %v1073
      %v1076 = vld [vmem:[#allocation2 + $0x2] sm:$0x3f]
      %v1078 = vcombine.high %v1076, %v1076
      %v1080 = vunpack.c.l.s4 1983009808
      %v1081 = vunpack.c.0.s8 %v1080
      %v1082 = vlaneseq
      %v1083 = vshrl.u32 %v1082, 7
      %v1084 = vsub.s32 %v1081, %v1083
      %v1085 = vrot.slane %v1076, %v1084
      %v1087 = vunpack.c.l.s4 1983009808
      %v1088 = vunpack.c.0.s8 %v1087
      %v1089 = vlaneseq
      %v1090 = vshrl.u32 %v1089, 7
      %v1091 = vsub.s32 %v1088, %v1090
      %v1092 = vrot.slane %v1078, %v1091
      %v1093 = vcombine.high %v1085, %v1085
      %1094 = vrot.lane.b32.xlu0 %v1085, 126
      %v1095 = vpop.permute.xlu0 %1094
      %1096 = vrot.lane.b32.xlu0 %v1093, 126
      %v1097 = vpop.permute.xlu0 %1096
      %1098 = vrot.lane.b32.xlu0 %v1092, 126
      %v1099 = vpop.permute.xlu0 %1098
      %vm1100 = vcmask 1031168
      %v1101 = vsel %vm1100, %v1095, %v1097
      %v1102 = vsel %vm1100, %v1097, %v1099
      %v1105 = vsel %vm702, %v1101, 0.0
      %v1106 = vsel %vm703, %v1102, 0.0
      %1107 = vset.pattern.permute.xlu0 14
      %1108 = vperm.xlu0 %1107, %v466
      %v1109 = vpop.permute.xlu0 %1108
      %v1111 = vmul.f32 %v1105, %v1109
      %v1112 = vmul.f32 %v1106, %v1109
      %v1113 = vadd.f32 %v1074, %v1111
      %v1114 = vadd.f32 %v1075, %v1112
      %v1115 = vld [vmem:[#allocation2 + $0x2] sm:$0x3f]
      %v1117 = vcombine.high %v1115, %v1115
      %v1119 = vunpack.c.l.s4 1983009808
      %v1120 = vunpack.c.0.s8 %v1119
      %v1121 = vlaneseq
      %v1122 = vshrl.u32 %v1121, 7
      %v1123 = vsub.s32 %v1120, %v1122
      %v1124 = vrot.slane %v1115, %v1123
      %v1126 = vunpack.c.l.s4 1983009808
      %v1127 = vunpack.c.0.s8 %v1126
      %v1128 = vlaneseq
      %v1129 = vshrl.u32 %v1128, 7
      %v1130 = vsub.s32 %v1127, %v1129
      %v1131 = vrot.slane %v1117, %v1130
      %v1132 = vcombine.high %v1124, %v1124
      %1133 = vrot.lane.b32.xlu0 %v1124, 114
      %v1134 = vpop.permute.xlu0 %1133
      %1135 = vrot.lane.b32.xlu0 %v1132, 114
      %v1136 = vpop.permute.xlu0 %1135
      %1137 = vrot.lane.b32.xlu0 %v1131, 114
      %v1138 = vpop.permute.xlu0 %1137
      %vm1139 = vcmask 932864
      %v1140 = vsel %vm1139, %v1134, %v1136
      %v1141 = vsel %vm1139, %v1136, %v1138
      %v1144 = vsel %vm515, %v1140, 0.0
      %v1145 = vsel %vm516, %v1141, 0.0
      %1146 = vset.pattern.permute.xlu0 15
      %1147 = vperm.xlu0 %1146, %v466
      %v1148 = vpop.permute.xlu0 %1147
      %v1150 = vmul.f32 %v1144, %v1148
      %v1151 = vmul.f32 %v1145, %v1148
      %v1152 = vadd.f32 %v1113, %v1150
      %v1153 = vadd.f32 %v1114, %v1151
      %v1154 = vld [vmem:[#allocation2 + $0x2] sm:$0x3f]
      %v1156 = vcombine.high %v1154, %v1154
      %v1158 = vunpack.c.l.s4 1983009808
      %v1159 = vunpack.c.0.s8 %v1158
      %v1160 = vlaneseq
      %v1161 = vshrl.u32 %v1160, 7
      %v1162 = vsub.s32 %v1159, %v1161
      %v1163 = vrot.slane %v1154, %v1162
      %v1165 = vunpack.c.l.s4 1983009808
      %v1166 = vunpack.c.0.s8 %v1165
      %v1167 = vlaneseq
      %v1168 = vshrl.u32 %v1167, 7
      %v1169 = vsub.s32 %v1166, %v1168
      %v1170 = vrot.slane %v1156, %v1169
      %v1171 = vcombine.high %v1163, %v1163
      %1172 = vrot.lane.b32.xlu0 %v1163, 113
      %v1173 = vpop.permute.xlu0 %1172
      %1174 = vrot.lane.b32.xlu0 %v1171, 113
      %v1175 = vpop.permute.xlu0 %1174
      %1176 = vrot.lane.b32.xlu0 %v1170, 113
      %v1177 = vpop.permute.xlu0 %1176
      %vm1178 = vcmask 924672
      %v1179 = vsel %vm1178, %v1173, %v1175
      %v1180 = vsel %vm1178, %v1175, %v1177
      %v1183 = vsel %vm563, %v1179, 0.0
      %v1184 = vsel %vm564, %v1180, 0.0
      %1185 = vset.pattern.permute.xlu0 16
      %1186 = vperm.xlu0 %1185, %v466
      %v1187 = vpop.permute.xlu0 %1186
      %v1189 = vmul.f32 %v1183, %v1187
      %v1190 = vmul.f32 %v1184, %v1187
      %v1191 = vadd.f32 %v1152, %v1189
      %v1192 = vadd.f32 %v1153, %v1190
      %v1193 = vld [vmem:[#allocation2 + $0x2] sm:$0x3f]
      %v1195 = vcombine.high %v1193, %v1193
      %v1197 = vunpack.c.l.s4 1983009808
      %v1198 = vunpack.c.0.s8 %v1197
      %v1199 = vlaneseq
      %v1200 = vshrl.u32 %v1199, 7
      %v1201 = vsub.s32 %v1198, %v1200
      %v1202 = vrot.slane %v1193, %v1201
      %v1204 = vunpack.c.l.s4 1983009808
      %v1205 = vunpack.c.0.s8 %v1204
      %v1206 = vlaneseq
      %v1207 = vshrl.u32 %v1206, 7
      %v1208 = vsub.s32 %v1205, %v1207
      %v1209 = vrot.slane %v1195, %v1208
      %v1210 = vcombine.high %v1202, %v1202
      %1211 = vrot.lane.b32.xlu0 %v1202, 112
      %v1212 = vpop.permute.xlu0 %1211
      %1213 = vrot.lane.b32.xlu0 %v1210, 112
      %v1214 = vpop.permute.xlu0 %1213
      %1215 = vrot.lane.b32.xlu0 %v1209, 112
      %v1216 = vpop.permute.xlu0 %1215
      %vm1217 = vcmask 916480
      %v1218 = vsel %vm1217, %v1212, %v1214
      %v1219 = vsel %vm1217, %v1214, %v1216
      %v1222 = vsel %vm608, %v1218, 0.0
      %v1223 = vsel %vm609, %v1219, 0.0
      %1224 = vset.pattern.permute.xlu0 17
      %1225 = vperm.xlu0 %1224, %v466
      %v1226 = vpop.permute.xlu0 %1225
      %v1228 = vmul.f32 %v1222, %v1226
      %v1229 = vmul.f32 %v1223, %v1226
      %v1230 = vadd.f32 %v1191, %v1228
      %v1231 = vadd.f32 %v1192, %v1229
      %v1232 = vld [vmem:[#allocation2 + $0x2] sm:$0x3f]
      %v1234 = vcombine.high %v1232, %v1232
      %v1236 = vunpack.c.l.s4 1983009808
      %v1237 = vunpack.c.0.s8 %v1236
      %v1238 = vlaneseq
      %v1239 = vshrl.u32 %v1238, 7
      %v1240 = vsub.s32 %v1237, %v1239
      %v1241 = vrot.slane %v1232, %v1240
      %v1243 = vunpack.c.l.s4 1983009808
      %v1244 = vunpack.c.0.s8 %v1243
      %v1245 = vlaneseq
      %v1246 = vshrl.u32 %v1245, 7
      %v1247 = vsub.s32 %v1244, %v1246
      %v1248 = vrot.slane %v1234, %v1247
      %v1249 = vcombine.high %v1241, %v1241
      %1250 = vrot.lane.b32.xlu0 %v1241, 111
      %v1251 = vpop.permute.xlu0 %1250
      %1252 = vrot.lane.b32.xlu0 %v1249, 111
      %v1253 = vpop.permute.xlu0 %1252
      %1254 = vrot.lane.b32.xlu0 %v1248, 111
      %v1255 = vpop.permute.xlu0 %1254
      %vm1256 = vcmask 908288
      %v1257 = vsel %vm1256, %v1251, %v1253
      %v1258 = vsel %vm1256, %v1253, %v1255
      %v1261 = vsel %vm655, %v1257, 0.0
      %v1262 = vsel %vm656, %v1258, 0.0
      %1263 = vset.pattern.permute.xlu0 18
      %1264 = vperm.xlu0 %1263, %v466
      %v1265 = vpop.permute.xlu0 %1264
      %v1267 = vmul.f32 %v1261, %v1265
      %v1268 = vmul.f32 %v1262, %v1265
      %v1269 = vadd.f32 %v1230, %v1267
      %v1270 = vadd.f32 %v1231, %v1268
      %v1271 = vld [vmem:[#allocation2 + $0x2] sm:$0x3f]
      %v1273 = vcombine.high %v1271, %v1271
      %v1275 = vunpack.c.l.s4 1983009808
      %v1276 = vunpack.c.0.s8 %v1275
      %v1277 = vlaneseq
      %v1278 = vshrl.u32 %v1277, 7
      %v1279 = vsub.s32 %v1276, %v1278
      %v1280 = vrot.slane %v1271, %v1279
      %v1282 = vunpack.c.l.s4 1983009808
      %v1283 = vunpack.c.0.s8 %v1282
      %v1284 = vlaneseq
      %v1285 = vshrl.u32 %v1284, 7
      %v1286 = vsub.s32 %v1283, %v1285
      %v1287 = vrot.slane %v1273, %v1286
      %v1288 = vcombine.high %v1280, %v1280
      %1289 = vrot.lane.b32.xlu0 %v1280, 110
      %v1290 = vpop.permute.xlu0 %1289
      %1291 = vrot.lane.b32.xlu0 %v1288, 110
      %v1292 = vpop.permute.xlu0 %1291
      %1293 = vrot.lane.b32.xlu0 %v1287, 110
      %v1294 = vpop.permute.xlu0 %1293
      %vm1295 = vcmask 900096
      %v1296 = vsel %vm1295, %v1290, %v1292
      %v1297 = vsel %vm1295, %v1292, %v1294
      %v1300 = vsel %vm702, %v1296, 0.0
      %v1301 = vsel %vm703, %v1297, 0.0
      %1302 = vset.pattern.permute.xlu0 19
      %1303 = vperm.xlu0 %1302, %v466
      %v1304 = vpop.permute.xlu0 %1303
      %v1306 = vmul.f32 %v1300, %v1304
      %v1307 = vmul.f32 %v1301, %v1304
      %v1308 = vadd.f32 %v1269, %v1306
      %v1309 = vadd.f32 %v1270, %v1307
      %v1310 = vld [vmem:[#allocation2 + $0x2] sm:$0x3f]
      %v1312 = vcombine.high %v1310, %v1310
      %v1314 = vunpack.c.l.s4 1983009808
      %v1315 = vunpack.c.0.s8 %v1314
      %v1316 = vlaneseq
      %v1317 = vshrl.u32 %v1316, 7
      %v1318 = vsub.s32 %v1315, %v1317
      %v1319 = vrot.slane %v1310, %v1318
      %v1321 = vunpack.c.l.s4 1983009808
      %v1322 = vunpack.c.0.s8 %v1321
      %v1323 = vlaneseq
      %v1324 = vshrl.u32 %v1323, 7
      %v1325 = vsub.s32 %v1322, %v1324
      %v1326 = vrot.slane %v1312, %v1325
      %v1327 = vcombine.high %v1319, %v1319
      %1328 = vrot.lane.b32.xlu0 %v1319, 98
      %v1329 = vpop.permute.xlu0 %1328
      %1330 = vrot.lane.b32.xlu0 %v1327, 98
      %v1331 = vpop.permute.xlu0 %1330
      %1332 = vrot.lane.b32.xlu0 %v1326, 98
      %v1333 = vpop.permute.xlu0 %1332
      %vm1334 = vcmask 801792
      %v1335 = vsel %vm1334, %v1329, %v1331
      %v1336 = vsel %vm1334, %v1331, %v1333
      %v1339 = vsel %vm515, %v1335, 0.0
      %v1340 = vsel %vm516, %v1336, 0.0
      %1341 = vset.pattern.permute.xlu0 20
      %1342 = vperm.xlu0 %1341, %v466
      %v1343 = vpop.permute.xlu0 %1342
      %v1345 = vmul.f32 %v1339, %v1343
      %v1346 = vmul.f32 %v1340, %v1343
      %v1347 = vadd.f32 %v1308, %v1345
      %v1348 = vadd.f32 %v1309, %v1346
      %v1349 = vld [vmem:[#allocation2 + $0x2] sm:$0x3f]
      %v1351 = vcombine.high %v1349, %v1349
      %v1353 = vunpack.c.l.s4 1983009808
      %v1354 = vunpack.c.0.s8 %v1353
      %v1355 = vlaneseq
      %v1356 = vshrl.u32 %v1355, 7
      %v1357 = vsub.s32 %v1354, %v1356
      %v1358 = vrot.slane %v1349, %v1357
      %v1360 = vunpack.c.l.s4 1983009808
      %v1361 = vunpack.c.0.s8 %v1360
      %v1362 = vlaneseq
      %v1363 = vshrl.u32 %v1362, 7
      %v1364 = vsub.s32 %v1361, %v1363
      %v1365 = vrot.slane %v1351, %v1364
      %v1366 = vcombine.high %v1358, %v1358
      %1367 = vrot.lane.b32.xlu0 %v1358, 97
      %v1368 = vpop.permute.xlu0 %1367
      %1369 = vrot.lane.b32.xlu0 %v1366, 97
      %v1370 = vpop.permute.xlu0 %1369
      %1371 = vrot.lane.b32.xlu0 %v1365, 97
      %v1372 = vpop.permute.xlu0 %1371
      %vm1373 = vcmask 793600
      %v1374 = vsel %vm1373, %v1368, %v1370
      %v1375 = vsel %vm1373, %v1370, %v1372
      %v1378 = vsel %vm563, %v1374, 0.0
      %v1379 = vsel %vm564, %v1375, 0.0
      %1380 = vset.pattern.permute.xlu0 21
      %1381 = vperm.xlu0 %1380, %v466
      %v1382 = vpop.permute.xlu0 %1381
      %v1384 = vmul.f32 %v1378, %v1382
      %v1385 = vmul.f32 %v1379, %v1382
      %v1386 = vadd.f32 %v1347, %v1384
      %v1387 = vadd.f32 %v1348, %v1385
      %v1388 = vld [vmem:[#allocation2 + $0x2] sm:$0x3f]
      %v1390 = vcombine.high %v1388, %v1388
      %v1392 = vunpack.c.l.s4 1983009808
      %v1393 = vunpack.c.0.s8 %v1392
      %v1394 = vlaneseq
      %v1395 = vshrl.u32 %v1394, 7
      %v1396 = vsub.s32 %v1393, %v1395
      %v1397 = vrot.slane %v1388, %v1396
      %v1399 = vunpack.c.l.s4 1983009808
      %v1400 = vunpack.c.0.s8 %v1399
      %v1401 = vlaneseq
      %v1402 = vshrl.u32 %v1401, 7
      %v1403 = vsub.s32 %v1400, %v1402
      %v1404 = vrot.slane %v1390, %v1403
      %v1405 = vcombine.high %v1397, %v1397
      %1406 = vrot.lane.b32.xlu0 %v1397, 96
      %v1407 = vpop.permute.xlu0 %1406
      %1408 = vrot.lane.b32.xlu0 %v1405, 96
      %v1409 = vpop.permute.xlu0 %1408
      %1410 = vrot.lane.b32.xlu0 %v1404, 96
      %v1411 = vpop.permute.xlu0 %1410
      %vm1412 = vcmask 785408
      %v1413 = vsel %vm1412, %v1407, %v1409
      %v1414 = vsel %vm1412, %v1409, %v1411
      %v1417 = vsel %vm608, %v1413, 0.0
      %v1418 = vsel %vm609, %v1414, 0.0
      %1419 = vset.pattern.permute.xlu0 22
      %1420 = vperm.xlu0 %1419, %v466
      %v1421 = vpop.permute.xlu0 %1420
      %v1423 = vmul.f32 %v1417, %v1421
      %v1424 = vmul.f32 %v1418, %v1421
      %v1425 = vadd.f32 %v1386, %v1423
      %v1426 = vadd.f32 %v1387, %v1424
      %v1427 = vld [vmem:[#allocation2 + $0x2] sm:$0x3f]
      %v1429 = vcombine.high %v1427, %v1427
      %v1431 = vunpack.c.l.s4 1983009808
      %v1432 = vunpack.c.0.s8 %v1431
      %v1433 = vlaneseq
      %v1434 = vshrl.u32 %v1433, 7
      %v1435 = vsub.s32 %v1432, %v1434
      %v1436 = vrot.slane %v1427, %v1435
      %v1438 = vunpack.c.l.s4 1983009808
      %v1439 = vunpack.c.0.s8 %v1438
      %v1440 = vlaneseq
      %v1441 = vshrl.u32 %v1440, 7
      %v1442 = vsub.s32 %v1439, %v1441
      %v1443 = vrot.slane %v1429, %v1442
      %v1444 = vcombine.high %v1436, %v1436
      %1445 = vrot.lane.b32.xlu0 %v1436, 95
      %v1446 = vpop.permute.xlu0 %1445
      %1447 = vrot.lane.b32.xlu0 %v1444, 95
      %v1448 = vpop.permute.xlu0 %1447
      %1449 = vrot.lane.b32.xlu0 %v1443, 95
      %v1450 = vpop.permute.xlu0 %1449
      %vm1451 = vcmask 777216
      %v1452 = vsel %vm1451, %v1446, %v1448
      %v1453 = vsel %vm1451, %v1448, %v1450
      %v1456 = vsel %vm655, %v1452, 0.0
      %v1457 = vsel %vm656, %v1453, 0.0
      %1458 = vset.pattern.permute.xlu0 23
      %1459 = vperm.xlu0 %1458, %v466
      %v1460 = vpop.permute.xlu0 %1459
      %v1462 = vmul.f32 %v1456, %v1460
      %v1463 = vmul.f32 %v1457, %v1460
      %v1464 = vadd.f32 %v1425, %v1462
      %v1465 = vadd.f32 %v1426, %v1463
      %v1466 = vld [vmem:[#allocation2 + $0x2] sm:$0x3f]
      %v1468 = vcombine.high %v1466, %v1466
      %v1470 = vunpack.c.l.s4 1983009808
      %v1471 = vunpack.c.0.s8 %v1470
      %v1472 = vlaneseq
      %v1473 = vshrl.u32 %v1472, 7
      %v1474 = vsub.s32 %v1471, %v1473
      %v1475 = vrot.slane %v1466, %v1474
      %v1477 = vunpack.c.l.s4 1983009808
      %v1478 = vunpack.c.0.s8 %v1477
      %v1479 = vlaneseq
      %v1480 = vshrl.u32 %v1479, 7
      %v1481 = vsub.s32 %v1478, %v1480
      %v1482 = vrot.slane %v1468, %v1481
      %v1483 = vcombine.high %v1475, %v1475
      %1484 = vrot.lane.b32.xlu0 %v1475, 94
      %v1485 = vpop.permute.xlu0 %1484
      %1486 = vrot.lane.b32.xlu0 %v1483, 94
      %v1487 = vpop.permute.xlu0 %1486
      %1488 = vrot.lane.b32.xlu0 %v1482, 94
      %v1489 = vpop.permute.xlu0 %1488
      %vm1490 = vcmask 769024
      %v1491 = vsel %vm1490, %v1485, %v1487
      %v1492 = vsel %vm1490, %v1487, %v1489
      %v1495 = vsel %vm702, %v1491, 0.0
      %v1496 = vsel %vm703, %v1492, 0.0
      %1497 = vset.pattern.permute.xlu0 24
      %1498 = vperm.xlu0 %1497, %v466
      %v1499 = vpop.permute.xlu0 %1498
      %v1501 = vmul.f32 %v1495, %v1499
      %v1502 = vmul.f32 %v1496, %v1499
      %v1503 = vadd.f32 %v1464, %v1501
      %v1504 = vadd.f32 %v1465, %v1502
      %1506 = vset.pattern.permute.xlu0 0
      %1507 = vperm.xlu0 %1506, %v467
      %v1508 = vpop.permute.xlu0 %1507
      %v1510 = vadd.f32 %v1503, %v1508
      %v1511 = vadd.f32 %v1504, %v1508
      %v1512 = vmax.f32 %v1510, 0.0
      %v1513 = vmax.f32 %v1511, 0.0
      %v1514 = vand.u32 2147483647, %v1510
      %v1515 = vand.u32 2147483647, %v1511
      %v1516 = vsub.f32 0.0, %v1514
      %v1517 = vsub.f32 0.0, %v1515
      %v1518 = vmul.f32 %v1516, 1.442695
      %v1519 = vpow.pop %v1518
      %v1520 = vmul.f32 %v1517, 1.442695
      %v1521 = vpow.pop %v1520
      %v1522 = vadd.f32 %v1519, 1.0
      %v1523 = vadd.f32 %v1521, 1.0
      %v1524 = vlog2.pop %v1522
      %v1525 = vmul.f32 %v1524, 0.6931472
      %v1526 = vlog2.pop %v1523
      %v1527 = vmul.f32 %v1526, 0.6931472
      %v1528 = vadd.f32 %v1512, %v1525
      %v1529 = vadd.f32 %v1513, %v1527
      %v1530 = vtanh.pop %v1528
      %v1531 = vtanh.pop %v1529
      %v1532 = vmul.f32 %v1510, %v1530
      %v1533 = vmul.f32 %v1511, %v1531
      %v1534 = vld [vmem:[%s5] sm:$0xf]
      %v1535 = vld [vmem:[%s6] sm:$0xf]
      %v1537 = vsel %vm961, %v1535, 0
      %vm1539 = vcmask 1041408
      %v1541 = vsel %vm1539, %v1532, 0
      %v1544 = vsel %vm1539, %v1533, 0
      %1546 = vmatprep.subr.mxu0 %v1544
      %1547 = vmatpush1.msra.mxu0 %v1541
      %1548 = vmatprep.subr.mxu0 0.0
      %1549 = vmatpush1.msra.mxu0 0.0
      %1550 = vmatprep.subr.mxu0 0.0
      %1551 = vmatpush1.msra.mxu0 0.0
      %1552 = vmatprep.subr.mxu0 0.0
      %1553 = vmatpush1.msra.mxu0 0.0
      %1554 = vmatprep.subr.mxu0 0.0
      %1555 = vmatpush1.msra.mxu0 0.0
      %1556 = vmatprep.subr.mxu0 0.0
      %1557 = vmatpush1.msra.mxu0 0.0
      %1558 = vmatprep.subr.mxu0 0.0
      %1559 = vmatpush1.msra.mxu0 0.0
      %1560 = vmatprep.subr.mxu0 0.0
      %1561 = vmatpush1.msra.mxu0 0.0
      %1562 = vmatprep.subr.mxu0 0.0
      %1563 = vmatpush1.msra.mxu0 0.0
      %1564 = vmatprep.subr.mxu0 0.0
      %1565 = vmatpush1.msra.mxu0 0.0
      %1566 = vmatprep.subr.mxu0 0.0
      %1567 = vmatpush1.msra.mxu0 0.0
      %1568 = vmatprep.subr.mxu0 0.0
      %1569 = vmatpush1.msra.mxu0 0.0
      %1570 = vmatprep.subr.mxu0 0.0
      %1571 = vmatpush1.msra.mxu0 0.0
      %1572 = vmatprep.subr.mxu0 0.0
      %1573 = vmatpush1.msra.mxu0 0.0
      %1574 = vmatprep.subr.mxu0 0.0
      %1575 = vmatpush1.msra.mxu0 0.0
      %1576 = vmatprep.subr.mxu0 0.0
      %1577 = vmatpush1.msra.mxu0 0.0
      %1578 = vmatprep.subr.mxu0 0.0
      %1579 = vmatpush1.msra.mxu0 0.0
      %1580 = vmatprep.subr.mxu0 0.0
      %1581 = vmatpush1.msra.mxu0 0.0
      %1582 = vmatprep.subr.mxu0 0.0
      %1583 = vmatpush1.msra.mxu0 0.0
      %1584 = vmatprep.subr.mxu0 0.0
      %1585 = vmatpush1.msra.mxu0 0.0
      %1586 = vmatprep.subr.mxu0 0.0
      %1587 = vmatpush1.msra.mxu0 0.0
      %1588 = vmatprep.subr.mxu0 0.0
      %1589 = vmatpush1.msra.mxu0 0.0
      %1590 = vmatprep.subr.mxu0 0.0
      %1591 = vmatpush1.msra.mxu0 0.0
      %1592 = vmatprep.subr.mxu0 0.0
      %1593 = vmatpush1.msra.mxu0 0.0
      %1594 = vmatprep.subr.mxu0 0.0
      %1595 = vmatpush1.msra.mxu0 0.0
      %1596 = vmatprep.subr.mxu0 0.0
      %1597 = vmatpush1.msra.mxu0 0.0
      %1598 = vmatprep.subr.mxu0 0.0
      %1599 = vmatpush1.msra.mxu0 0.0
      %1600 = vmatprep.subr.mxu0 0.0
      %1601 = vmatpush1.msra.mxu0 0.0
      %1602 = vmatprep.subr.mxu0 0.0
      %1603 = vmatpush1.msra.mxu0 0.0
      %1604 = vmatprep.subr.mxu0 0.0
      %1605 = vmatpush1.msra.mxu0 0.0
      %1606 = vmatprep.subr.mxu0 0.0
      %1607 = vmatpush1.msra.mxu0 0.0
      %1608 = vmatprep.subr.mxu0 0.0
      %1609 = vmatpush1.msra.mxu0 0.0
      %1610 = vmatprep.mubr.f32.mxu0 0.0
      %1611 = vmatmul.mubr.f32.gmra.mrb[0].mxu0 %v1537
      %v1612 = vpop.f32.mrb[0].mxu0
      %v1613 = vadd.f32 0.0, %v1612
      %v1614 = vpop.f32.mrb[0].mxu0
      %v1615 = vadd.f32 0.0, %v1614
      %1616 = vdwg.mxu0
      %v1618 = vsel %vm961, %v1534, 0
      %v1620 = vsel %vm1539, %v464, 0
      %v1622 = vsel %vm1539, %v465, 0
      %1624 = vmatprep.subr.mxu0 %v1622
      %1625 = vmatpush1.msra.mxu0 %v1620
      %1626 = vmatprep.subr.mxu0 0.0
      %1627 = vmatpush1.msra.mxu0 0.0
      %1628 = vmatprep.subr.mxu0 0.0
      %1629 = vmatpush1.msra.mxu0 0.0
      %1630 = vmatprep.subr.mxu0 0.0
      %1631 = vmatpush1.msra.mxu0 0.0
      %1632 = vmatprep.subr.mxu0 0.0
      %1633 = vmatpush1.msra.mxu0 0.0
      %1634 = vmatprep.subr.mxu0 0.0
      %1635 = vmatpush1.msra.mxu0 0.0
      %1636 = vmatprep.subr.mxu0 0.0
      %1637 = vmatpush1.msra.mxu0 0.0
      %1638 = vmatprep.subr.mxu0 0.0
      %1639 = vmatpush1.msra.mxu0 0.0
      %1640 = vmatprep.subr.mxu0 0.0
      %1641 = vmatpush1.msra.mxu0 0.0
      %1642 = vmatprep.subr.mxu0 0.0
      %1643 = vmatpush1.msra.mxu0 0.0
      %1644 = vmatprep.subr.mxu0 0.0
      %1645 = vmatpush1.msra.mxu0 0.0
      %1646 = vmatprep.subr.mxu0 0.0
      %1647 = vmatpush1.msra.mxu0 0.0
      %1648 = vmatprep.subr.mxu0 0.0
      %1649 = vmatpush1.msra.mxu0 0.0
      %1650 = vmatprep.subr.mxu0 0.0
      %1651 = vmatpush1.msra.mxu0 0.0
      %1652 = vmatprep.subr.mxu0 0.0
      %1653 = vmatpush1.msra.mxu0 0.0
      %1654 = vmatprep.subr.mxu0 0.0
      %1655 = vmatpush1.msra.mxu0 0.0
      %1656 = vmatprep.subr.mxu0 0.0
      %1657 = vmatpush1.msra.mxu0 0.0
      %1658 = vmatprep.subr.mxu0 0.0
      %1659 = vmatpush1.msra.mxu0 0.0
      %1660 = vmatprep.subr.mxu0 0.0
      %1661 = vmatpush1.msra.mxu0 0.0
      %1662 = vmatprep.subr.mxu0 0.0
      %1663 = vmatpush1.msra.mxu0 0.0
      %1664 = vmatprep.subr.mxu0 0.0
      %1665 = vmatpush1.msra.mxu0 0.0
      %1666 = vmatprep.subr.mxu0 0.0
      %1667 = vmatpush1.msra.mxu0 0.0
      %1668 = vmatprep.subr.mxu0 0.0
      %1669 = vmatpush1.msra.mxu0 0.0
      %1670 = vmatprep.subr.mxu0 0.0
      %1671 = vmatpush1.msra.mxu0 0.0
      %1672 = vmatprep.subr.mxu0 0.0
      %1673 = vmatpush1.msra.mxu0 0.0
      %1674 = vmatprep.subr.mxu0 0.0
      %1675 = vmatpush1.msra.mxu0 0.0
      %1676 = vmatprep.subr.mxu0 0.0
      %1677 = vmatpush1.msra.mxu0 0.0
      %1678 = vmatprep.subr.mxu0 0.0
      %1679 = vmatpush1.msra.mxu0 0.0
      %1680 = vmatprep.subr.mxu0 0.0
      %1681 = vmatpush1.msra.mxu0 0.0
      %1682 = vmatprep.subr.mxu0 0.0
      %1683 = vmatpush1.msra.mxu0 0.0
      %1684 = vmatprep.subr.mxu0 0.0
      %1685 = vmatpush1.msra.mxu0 0.0
      %1686 = vmatprep.subr.mxu0 0.0
      %1687 = vmatpush1.msra.mxu0 0.0
      %1688 = vmatprep.mubr.f32.mxu0 0.0
      %1689 = vmatmul.mubr.f32.gmra.mrb[0].mxu0 %v1618
      %v1690 = vpop.f32.mrb[0].mxu0
      %v1691 = vadd.f32 %v1613, %v1690
      %v1692 = vpop.f32.mrb[0].mxu0
      %v1693 = vadd.f32 %v1615, %v1692
      %1694 = vdwg.mxu0
      %v1695 = vld [vmem:[%s7] sm:$0xf]
      %1697 = vset.pattern.permute.xlu0 0
      %1698 = vperm.xlu0 %1697, %v1695
      %v1699 = vpop.permute.xlu0 %1698
      %v1701 = vadd.f32 %v1691, %v1699
      %v1702 = vadd.f32 %v1693, %v1699
      %v1703 = vld [vmem:[%s8] sm:$0xf]
      %v1704 = vld [vmem:[%s9] sm:$0xf]
      %1705 = vst [vmem:[#allocation3] sm:$0xff] 0.0
      %1706 = vst [vmem:[#allocation3 + $0x8] sm:$0xff] 0.0
      %v1709 = vcombine.low %v1701, %v1702
      %1711 = vst [vmem:[#allocation3 + $0x4] sm:$0xff] %v1709
      %v1712 = vld [vmem:[#allocation3] sm:$0xff]
      %v1713 = vld [vmem:[#allocation3 + $0x8] sm:$0xf]
      %v1716 = vcombine.high %v1712, %v1712
      %1717 = vrot.lane.b32.xlu0 %v1712, 34
      %v1718 = vpop.permute.xlu0 %1717
      %1719 = vrot.lane.b32.xlu0 %v1716, 34
      %v1720 = vpop.permute.xlu0 %1719
      %1721 = vrot.lane.b32.xlu0 %v1713, 34
      %v1722 = vpop.permute.xlu0 %1721
      %v1723 = vsel %vm540, %v1718, %v1720
      %v1724 = vsel %vm540, %v1720, %v1722
      %v1727 = vsel %vm515, %v1723, 0.0
      %v1728 = vsel %vm516, %v1724, 0.0
      %1730 = vset.pattern.permute.xlu0 0
      %1731 = vperm.xlu0 %1730, %v1703
      %v1732 = vpop.permute.xlu0 %1731
      %v1734 = vmul.f32 %v1727, %v1732
      %v1735 = vmul.f32 %v1728, %v1732
      %v1736 = vadd.f32 %v1734, 0.0
      %v1737 = vadd.f32 %v1735, 0.0
      %v1738 = vld [vmem:[#allocation3] sm:$0xff]
      %v1739 = vld [vmem:[#allocation3 + $0x8] sm:$0xf]
      %v1742 = vcombine.high %v1738, %v1738
      %1743 = vrot.lane.b32.xlu0 %v1738, 33
      %v1744 = vpop.permute.xlu0 %1743
      %1745 = vrot.lane.b32.xlu0 %v1742, 33
      %v1746 = vpop.permute.xlu0 %1745
      %1747 = vrot.lane.b32.xlu0 %v1739, 33
      %v1748 = vpop.permute.xlu0 %1747
      %v1749 = vsel %vm588, %v1744, %v1746
      %v1750 = vsel %vm588, %v1746, %v1748
      %v1753 = vsel %vm563, %v1749, 0.0
      %v1754 = vsel %vm564, %v1750, 0.0
      %1755 = vset.pattern.permute.xlu0 1
      %1756 = vperm.xlu0 %1755, %v1703
      %v1757 = vpop.permute.xlu0 %1756
      %v1759 = vmul.f32 %v1753, %v1757
      %v1760 = vmul.f32 %v1754, %v1757
      %v1761 = vadd.f32 %v1736, %v1759
      %v1762 = vadd.f32 %v1737, %v1760
      %v1763 = vld [vmem:[#allocation3] sm:$0xff]
      %v1764 = vld [vmem:[#allocation3 + $0x8] sm:$0xf]
      %v1767 = vcombine.high %v1763, %v1763
      %1768 = vrot.lane.b32.xlu0 %v1763, 32
      %v1769 = vpop.permute.xlu0 %1768
      %1770 = vrot.lane.b32.xlu0 %v1767, 32
      %v1771 = vpop.permute.xlu0 %1770
      %1772 = vrot.lane.b32.xlu0 %v1764, 32
      %v1773 = vpop.permute.xlu0 %1772
      %v1774 = vsel %vm633, %v1769, %v1771
      %v1775 = vsel %vm633, %v1771, %v1773
      %v1778 = vsel %vm608, %v1774, 0.0
      %v1779 = vsel %vm609, %v1775, 0.0
      %1780 = vset.pattern.permute.xlu0 2
      %1781 = vperm.xlu0 %1780, %v1703
      %v1782 = vpop.permute.xlu0 %1781
      %v1784 = vmul.f32 %v1778, %v1782
      %v1785 = vmul.f32 %v1779, %v1782
      %v1786 = vadd.f32 %v1761, %v1784
      %v1787 = vadd.f32 %v1762, %v1785
      %v1788 = vld [vmem:[#allocation3] sm:$0xff]
      %v1789 = vld [vmem:[#allocation3 + $0x8] sm:$0xf]
      %v1792 = vcombine.high %v1788, %v1788
      %1793 = vrot.lane.b32.xlu0 %v1788, 31
      %v1794 = vpop.permute.xlu0 %1793
      %1795 = vrot.lane.b32.xlu0 %v1792, 31
      %v1796 = vpop.permute.xlu0 %1795
      %1797 = vrot.lane.b32.xlu0 %v1789, 31
      %v1798 = vpop.permute.xlu0 %1797
      %v1799 = vsel %vm680, %v1794, %v1796
      %v1800 = vsel %vm680, %v1796, %v1798
      %v1803 = vsel %vm655, %v1799, 0.0
      %v1804 = vsel %vm656, %v1800, 0.0
      %1805 = vset.pattern.permute.xlu0 3
      %1806 = vperm.xlu0 %1805, %v1703
      %v1807 = vpop.permute.xlu0 %1806
      %v1809 = vmul.f32 %v1803, %v1807
      %v1810 = vmul.f32 %v1804, %v1807
      %v1811 = vadd.f32 %v1786, %v1809
      %v1812 = vadd.f32 %v1787, %v1810
      %v1813 = vld [vmem:[#allocation3] sm:$0xff]
      %v1814 = vld [vmem:[#allocation3 + $0x8] sm:$0xf]
      %v1817 = vcombine.high %v1813, %v1813
      %1818 = vrot.lane.b32.xlu0 %v1813, 30
      %v1819 = vpop.permute.xlu0 %1818
      %1820 = vrot.lane.b32.xlu0 %v1817, 30
      %v1821 = vpop.permute.xlu0 %1820
      %1822 = vrot.lane.b32.xlu0 %v1814, 30
      %v1823 = vpop.permute.xlu0 %1822
      %v1824 = vsel %vm727, %v1819, %v1821
      %v1825 = vsel %vm727, %v1821, %v1823
      %v1828 = vsel %vm702, %v1824, 0.0
      %v1829 = vsel %vm703, %v1825, 0.0
      %1830 = vset.pattern.permute.xlu0 4
      %1831 = vperm.xlu0 %1830, %v1703
      %v1832 = vpop.permute.xlu0 %1831
      %v1834 = vmul.f32 %v1828, %v1832
      %v1835 = vmul.f32 %v1829, %v1832
      %v1836 = vadd.f32 %v1811, %v1834
      %v1837 = vadd.f32 %v1812, %v1835
      %v1838 = vld [vmem:[#allocation3] sm:$0xff]
      %v1839 = vld [vmem:[#allocation3 + $0x8] sm:$0xf]
      %v1842 = vcombine.high %v1838, %v1838
      %1843 = vrot.lane.b32.xlu0 %v1838, 18
      %v1844 = vpop.permute.xlu0 %1843
      %1845 = vrot.lane.b32.xlu0 %v1842, 18
      %v1846 = vpop.permute.xlu0 %1845
      %1847 = vrot.lane.b32.xlu0 %v1839, 18
      %v1848 = vpop.permute.xlu0 %1847
      %v1849 = vsel %vm766, %v1844, %v1846
      %v1850 = vsel %vm766, %v1846, %v1848
      %v1853 = vsel %vm515, %v1849, 0.0
      %v1854 = vsel %vm516, %v1850, 0.0
      %1855 = vset.pattern.permute.xlu0 5
      %1856 = vperm.xlu0 %1855, %v1703
      %v1857 = vpop.permute.xlu0 %1856
      %v1859 = vmul.f32 %v1853, %v1857
      %v1860 = vmul.f32 %v1854, %v1857
      %v1861 = vadd.f32 %v1836, %v1859
      %v1862 = vadd.f32 %v1837, %v1860
      %v1863 = vld [vmem:[#allocation3] sm:$0xff]
      %v1864 = vld [vmem:[#allocation3 + $0x8] sm:$0xf]
      %v1867 = vcombine.high %v1863, %v1863
      %1868 = vrot.lane.b32.xlu0 %v1863, 17
      %v1869 = vpop.permute.xlu0 %1868
      %1870 = vrot.lane.b32.xlu0 %v1867, 17
      %v1871 = vpop.permute.xlu0 %1870
      %1872 = vrot.lane.b32.xlu0 %v1864, 17
      %v1873 = vpop.permute.xlu0 %1872
      %v1874 = vsel %vm805, %v1869, %v1871
      %v1875 = vsel %vm805, %v1871, %v1873
      %v1878 = vsel %vm563, %v1874, 0.0
      %v1879 = vsel %vm564, %v1875, 0.0
      %1880 = vset.pattern.permute.xlu0 6
      %1881 = vperm.xlu0 %1880, %v1703
      %v1882 = vpop.permute.xlu0 %1881
      %v1884 = vmul.f32 %v1878, %v1882
      %v1885 = vmul.f32 %v1879, %v1882
      %v1886 = vadd.f32 %v1861, %v1884
      %v1887 = vadd.f32 %v1862, %v1885
      %v1888 = vld [vmem:[#allocation3] sm:$0xff]
      %v1889 = vld [vmem:[#allocation3 + $0x8] sm:$0xf]
      %v1892 = vcombine.high %v1888, %v1888
      %1893 = vrot.lane.b32.xlu0 %v1888, 16
      %v1894 = vpop.permute.xlu0 %1893
      %1895 = vrot.lane.b32.xlu0 %v1892, 16
      %v1896 = vpop.permute.xlu0 %1895
      %1897 = vrot.lane.b32.xlu0 %v1889, 16
      %v1898 = vpop.permute.xlu0 %1897
      %v1899 = vsel %vm844, %v1894, %v1896
      %v1900 = vsel %vm844, %v1896, %v1898
      %v1903 = vsel %vm608, %v1899, 0.0
      %v1904 = vsel %vm609, %v1900, 0.0
      %1905 = vset.pattern.permute.xlu0 7
      %1906 = vperm.xlu0 %1905, %v1703
      %v1907 = vpop.permute.xlu0 %1906
      %v1909 = vmul.f32 %v1903, %v1907
      %v1910 = vmul.f32 %v1904, %v1907
      %v1911 = vadd.f32 %v1886, %v1909
      %v1912 = vadd.f32 %v1887, %v1910
      %v1913 = vld [vmem:[#allocation3] sm:$0xff]
      %v1914 = vld [vmem:[#allocation3 + $0x8] sm:$0xf]
      %v1917 = vcombine.high %v1913, %v1913
      %1918 = vrot.lane.b32.xlu0 %v1913, 15
      %v1919 = vpop.permute.xlu0 %1918
      %1920 = vrot.lane.b32.xlu0 %v1917, 15
      %v1921 = vpop.permute.xlu0 %1920
      %1922 = vrot.lane.b32.xlu0 %v1914, 15
      %v1923 = vpop.permute.xlu0 %1922
      %v1924 = vsel %vm883, %v1919, %v1921
      %v1925 = vsel %vm883, %v1921, %v1923
      %v1928 = vsel %vm655, %v1924, 0.0
      %v1929 = vsel %vm656, %v1925, 0.0
      %1930 = vset.pattern.permute.xlu0 8
      %1931 = vperm.xlu0 %1930, %v1703
      %v1932 = vpop.permute.xlu0 %1931
      %v1934 = vmul.f32 %v1928, %v1932
      %v1935 = vmul.f32 %v1929, %v1932
      %v1936 = vadd.f32 %v1911, %v1934
      %v1937 = vadd.f32 %v1912, %v1935
      %v1938 = vld [vmem:[#allocation3] sm:$0xff]
      %v1939 = vld [vmem:[#allocation3 + $0x8] sm:$0xf]
      %v1942 = vcombine.high %v1938, %v1938
      %1943 = vrot.lane.b32.xlu0 %v1938, 14
      %v1944 = vpop.permute.xlu0 %1943
      %1945 = vrot.lane.b32.xlu0 %v1942, 14
      %v1946 = vpop.permute.xlu0 %1945
      %1947 = vrot.lane.b32.xlu0 %v1939, 14
      %v1948 = vpop.permute.xlu0 %1947
      %v1949 = vsel %vm922, %v1944, %v1946
      %v1950 = vsel %vm922, %v1946, %v1948
      %v1953 = vsel %vm702, %v1949, 0.0
      %v1954 = vsel %vm703, %v1950, 0.0
      %1955 = vset.pattern.permute.xlu0 9
      %1956 = vperm.xlu0 %1955, %v1703
      %v1957 = vpop.permute.xlu0 %1956
      %v1959 = vmul.f32 %v1953, %v1957
      %v1960 = vmul.f32 %v1954, %v1957
      %v1961 = vadd.f32 %v1936, %v1959
      %v1962 = vadd.f32 %v1937, %v1960
      %v1963 = vld [vmem:[#allocation3] sm:$0xff]
      %v1964 = vld [vmem:[#allocation3 + $0x8] sm:$0xf]
      %v1967 = vcombine.high %v1963, %v1963
      %1968 = vrot.lane.b32.xlu0 %v1963, 2
      %v1969 = vpop.permute.xlu0 %1968
      %1970 = vrot.lane.b32.xlu0 %v1967, 2
      %v1971 = vpop.permute.xlu0 %1970
      %1972 = vrot.lane.b32.xlu0 %v1964, 2
      %v1973 = vpop.permute.xlu0 %1972
      %v1974 = vsel %vm961, %v1969, %v1971
      %v1975 = vsel %vm961, %v1971, %v1973
      %v1978 = vsel %vm515, %v1974, 0.0
      %v1979 = vsel %vm516, %v1975, 0.0
      %1980 = vset.pattern.permute.xlu0 10
      %1981 = vperm.xlu0 %1980, %v1703
      %v1982 = vpop.permute.xlu0 %1981
      %v1984 = vmul.f32 %v1978, %v1982
      %v1985 = vmul.f32 %v1979, %v1982
      %v1986 = vadd.f32 %v1961, %v1984
      %v1987 = vadd.f32 %v1962, %v1985
      %v1988 = vld [vmem:[#allocation3] sm:$0xff]
      %v1989 = vld [vmem:[#allocation3 + $0x8] sm:$0xf]
      %v1992 = vcombine.high %v1988, %v1988
      %1993 = vrot.lane.b32.xlu0 %v1988, 1
      %v1994 = vpop.permute.xlu0 %1993
      %1995 = vrot.lane.b32.xlu0 %v1992, 1
      %v1996 = vpop.permute.xlu0 %1995
      %1997 = vrot.lane.b32.xlu0 %v1989, 1
      %v1998 = vpop.permute.xlu0 %1997
      %v1999 = vsel %vm1000, %v1994, %v1996
      %v2000 = vsel %vm1000, %v1996, %v1998
      %v2003 = vsel %vm563, %v1999, 0.0
      %v2004 = vsel %vm564, %v2000, 0.0
      %2005 = vset.pattern.permute.xlu0 11
      %2006 = vperm.xlu0 %2005, %v1703
      %v2007 = vpop.permute.xlu0 %2006
      %v2009 = vmul.f32 %v2003, %v2007
      %v2010 = vmul.f32 %v2004, %v2007
      %v2011 = vadd.f32 %v1986, %v2009
      %v2012 = vadd.f32 %v1987, %v2010
      %v2013 = vld [vmem:[#allocation3 + $0x4] sm:$0xff]
      %v2015 = vcombine.high %v2013, %v2013
      %v2017 = vsel %vm608, %v2013, 0.0
      %v2018 = vsel %vm609, %v2015, 0.0
      %2019 = vset.pattern.permute.xlu0 12
      %2020 = vperm.xlu0 %2019, %v1703
      %v2021 = vpop.permute.xlu0 %2020
      %v2023 = vmul.f32 %v2017, %v2021
      %v2024 = vmul.f32 %v2018, %v2021
      %v2025 = vadd.f32 %v2011, %v2023
      %v2026 = vadd.f32 %v2012, %v2024
      %v2027 = vld [vmem:[#allocation3 + $0x4] sm:$0xff]
      %v2028 = vld [vmem:[#allocation3 + $0xc] sm:$0xf]
      %v2031 = vcombine.high %v2027, %v2027
      %2032 = vrot.lane.b32.xlu0 %v2027, 127
      %v2033 = vpop.permute.xlu0 %2032
      %2034 = vrot.lane.b32.xlu0 %v2031, 127
      %v2035 = vpop.permute.xlu0 %2034
      %2036 = vrot.lane.b32.xlu0 %v2028, 127
      %v2037 = vpop.permute.xlu0 %2036
      %v2038 = vsel %vm1061, %v2033, %v2035
      %v2039 = vsel %vm1061, %v2035, %v2037
      %v2042 = vsel %vm655, %v2038, 0.0
      %v2043 = vsel %vm656, %v2039, 0.0
      %2044 = vset.pattern.permute.xlu0 13
      %2045 = vperm.xlu0 %2044, %v1703
      %v2046 = vpop.permute.xlu0 %2045
      %v2048 = vmul.f32 %v2042, %v2046
      %v2049 = vmul.f32 %v2043, %v2046
      %v2050 = vadd.f32 %v2025, %v2048
      %v2051 = vadd.f32 %v2026, %v2049
      %v2052 = vld [vmem:[#allocation3 + $0x4] sm:$0xff]
      %v2053 = vld [vmem:[#allocation3 + $0xc] sm:$0xf]
      %v2056 = vcombine.high %v2052, %v2052
      %2057 = vrot.lane.b32.xlu0 %v2052, 126
      %v2058 = vpop.permute.xlu0 %2057
      %2059 = vrot.lane.b32.xlu0 %v2056, 126
      %v2060 = vpop.permute.xlu0 %2059
      %2061 = vrot.lane.b32.xlu0 %v2053, 126
      %v2062 = vpop.permute.xlu0 %2061
      %v2063 = vsel %vm1100, %v2058, %v2060
      %v2064 = vsel %vm1100, %v2060, %v2062
      %v2067 = vsel %vm702, %v2063, 0.0
      %v2068 = vsel %vm703, %v2064, 0.0
      %2069 = vset.pattern.permute.xlu0 14
      %2070 = vperm.xlu0 %2069, %v1703
      %v2071 = vpop.permute.xlu0 %2070
      %v2073 = vmul.f32 %v2067, %v2071
      %v2074 = vmul.f32 %v2068, %v2071
      %v2075 = vadd.f32 %v2050, %v2073
      %v2076 = vadd.f32 %v2051, %v2074
      %v2077 = vld [vmem:[#allocation3 + $0x4] sm:$0xff]
      %v2078 = vld [vmem:[#allocation3 + $0xc] sm:$0xf]
      %v2081 = vcombine.high %v2077, %v2077
      %2082 = vrot.lane.b32.xlu0 %v2077, 114
      %v2083 = vpop.permute.xlu0 %2082
      %2084 = vrot.lane.b32.xlu0 %v2081, 114
      %v2085 = vpop.permute.xlu0 %2084
      %2086 = vrot.lane.b32.xlu0 %v2078, 114
      %v2087 = vpop.permute.xlu0 %2086
      %v2088 = vsel %vm1139, %v2083, %v2085
      %v2089 = vsel %vm1139, %v2085, %v2087
      %v2092 = vsel %vm515, %v2088, 0.0
      %v2093 = vsel %vm516, %v2089, 0.0
      %2094 = vset.pattern.permute.xlu0 15
      %2095 = vperm.xlu0 %2094, %v1703
      %v2096 = vpop.permute.xlu0 %2095
      %v2098 = vmul.f32 %v2092, %v2096
      %v2099 = vmul.f32 %v2093, %v2096
      %v2100 = vadd.f32 %v2075, %v2098
      %v2101 = vadd.f32 %v2076, %v2099
      %v2102 = vld [vmem:[#allocation3 + $0x4] sm:$0xff]
      %v2103 = vld [vmem:[#allocation3 + $0xc] sm:$0xf]
      %v2106 = vcombine.high %v2102, %v2102
      %2107 = vrot.lane.b32.xlu0 %v2102, 113
      %v2108 = vpop.permute.xlu0 %2107
      %2109 = vrot.lane.b32.xlu0 %v2106, 113
      %v2110 = vpop.permute.xlu0 %2109
      %2111 = vrot.lane.b32.xlu0 %v2103, 113
      %v2112 = vpop.permute.xlu0 %2111
      %v2113 = vsel %vm1178, %v2108, %v2110
      %v2114 = vsel %vm1178, %v2110, %v2112
      %v2117 = vsel %vm563, %v2113, 0.0
      %v2118 = vsel %vm564, %v2114, 0.0
      %2119 = vset.pattern.permute.xlu0 16
      %2120 = vperm.xlu0 %2119, %v1703
      %v2121 = vpop.permute.xlu0 %2120
      %v2123 = vmul.f32 %v2117, %v2121
      %v2124 = vmul.f32 %v2118, %v2121
      %v2125 = vadd.f32 %v2100, %v2123
      %v2126 = vadd.f32 %v2101, %v2124
      %v2127 = vld [vmem:[#allocation3 + $0x4] sm:$0xff]
      %v2128 = vld [vmem:[#allocation3 + $0xc] sm:$0xf]
      %v2131 = vcombine.high %v2127, %v2127
      %2132 = vrot.lane.b32.xlu0 %v2127, 112
      %v2133 = vpop.permute.xlu0 %2132
      %2134 = vrot.lane.b32.xlu0 %v2131, 112
      %v2135 = vpop.permute.xlu0 %2134
      %2136 = vrot.lane.b32.xlu0 %v2128, 112
      %v2137 = vpop.permute.xlu0 %2136
      %v2138 = vsel %vm1217, %v2133, %v2135
      %v2139 = vsel %vm1217, %v2135, %v2137
      %v2142 = vsel %vm608, %v2138, 0.0
      %v2143 = vsel %vm609, %v2139, 0.0
      %2144 = vset.pattern.permute.xlu0 17
      %2145 = vperm.xlu0 %2144, %v1703
      %v2146 = vpop.permute.xlu0 %2145
      %v2148 = vmul.f32 %v2142, %v2146
      %v2149 = vmul.f32 %v2143, %v2146
      %v2150 = vadd.f32 %v2125, %v2148
      %v2151 = vadd.f32 %v2126, %v2149
      %v2152 = vld [vmem:[#allocation3 + $0x4] sm:$0xff]
      %v2153 = vld [vmem:[#allocation3 + $0xc] sm:$0xf]
      %v2156 = vcombine.high %v2152, %v2152
      %2157 = vrot.lane.b32.xlu0 %v2152, 111
      %v2158 = vpop.permute.xlu0 %2157
      %2159 = vrot.lane.b32.xlu0 %v2156, 111
      %v2160 = vpop.permute.xlu0 %2159
      %2161 = vrot.lane.b32.xlu0 %v2153, 111
      %v2162 = vpop.permute.xlu0 %2161
      %v2163 = vsel %vm1256, %v2158, %v2160
      %v2164 = vsel %vm1256, %v2160, %v2162
      %v2167 = vsel %vm655, %v2163, 0.0
      %v2168 = vsel %vm656, %v2164, 0.0
      %2169 = vset.pattern.permute.xlu0 18
      %2170 = vperm.xlu0 %2169, %v1703
      %v2171 = vpop.permute.xlu0 %2170
      %v2173 = vmul.f32 %v2167, %v2171
      %v2174 = vmul.f32 %v2168, %v2171
      %v2175 = vadd.f32 %v2150, %v2173
      %v2176 = vadd.f32 %v2151, %v2174
      %v2177 = vld [vmem:[#allocation3 + $0x4] sm:$0xff]
      %v2178 = vld [vmem:[#allocation3 + $0xc] sm:$0xf]
      %v2181 = vcombine.high %v2177, %v2177
      %2182 = vrot.lane.b32.xlu0 %v2177, 110
      %v2183 = vpop.permute.xlu0 %2182
      %2184 = vrot.lane.b32.xlu0 %v2181, 110
      %v2185 = vpop.permute.xlu0 %2184
      %2186 = vrot.lane.b32.xlu0 %v2178, 110
      %v2187 = vpop.permute.xlu0 %2186
      %v2188 = vsel %vm1295, %v2183, %v2185
      %v2189 = vsel %vm1295, %v2185, %v2187
      %v2192 = vsel %vm702, %v2188, 0.0
      %v2193 = vsel %vm703, %v2189, 0.0
      %2194 = vset.pattern.permute.xlu0 19
      %2195 = vperm.xlu0 %2194, %v1703
      %v2196 = vpop.permute.xlu0 %2195
      %v2198 = vmul.f32 %v2192, %v2196
      %v2199 = vmul.f32 %v2193, %v2196
      %v2200 = vadd.f32 %v2175, %v2198
      %v2201 = vadd.f32 %v2176, %v2199
      %v2202 = vld [vmem:[#allocation3 + $0x4] sm:$0xff]
      %v2203 = vld [vmem:[#allocation3 + $0xc] sm:$0xf]
      %v2206 = vcombine.high %v2202, %v2202
      %2207 = vrot.lane.b32.xlu0 %v2202, 98
      %v2208 = vpop.permute.xlu0 %2207
      %2209 = vrot.lane.b32.xlu0 %v2206, 98
      %v2210 = vpop.permute.xlu0 %2209
      %2211 = vrot.lane.b32.xlu0 %v2203, 98
      %v2212 = vpop.permute.xlu0 %2211
      %v2213 = vsel %vm1334, %v2208, %v2210
      %v2214 = vsel %vm1334, %v2210, %v2212
      %v2217 = vsel %vm515, %v2213, 0.0
      %v2218 = vsel %vm516, %v2214, 0.0
      %2219 = vset.pattern.permute.xlu0 20
      %2220 = vperm.xlu0 %2219, %v1703
      %v2221 = vpop.permute.xlu0 %2220
      %v2223 = vmul.f32 %v2217, %v2221
      %v2224 = vmul.f32 %v2218, %v2221
      %v2225 = vadd.f32 %v2200, %v2223
      %v2226 = vadd.f32 %v2201, %v2224
      %v2227 = vld [vmem:[#allocation3 + $0x4] sm:$0xff]
      %v2228 = vld [vmem:[#allocation3 + $0xc] sm:$0xf]
      %v2231 = vcombine.high %v2227, %v2227
      %2232 = vrot.lane.b32.xlu0 %v2227, 97
      %v2233 = vpop.permute.xlu0 %2232
      %2234 = vrot.lane.b32.xlu0 %v2231, 97
      %v2235 = vpop.permute.xlu0 %2234
      %2236 = vrot.lane.b32.xlu0 %v2228, 97
      %v2237 = vpop.permute.xlu0 %2236
      %v2238 = vsel %vm1373, %v2233, %v2235
      %v2239 = vsel %vm1373, %v2235, %v2237
      %v2242 = vsel %vm563, %v2238, 0.0
      %v2243 = vsel %vm564, %v2239, 0.0
      %2244 = vset.pattern.permute.xlu0 21
      %2245 = vperm.xlu0 %2244, %v1703
      %v2246 = vpop.permute.xlu0 %2245
      %v2248 = vmul.f32 %v2242, %v2246
      %v2249 = vmul.f32 %v2243, %v2246
      %v2250 = vadd.f32 %v2225, %v2248
      %v2251 = vadd.f32 %v2226, %v2249
      %v2252 = vld [vmem:[#allocation3 + $0x4] sm:$0xff]
      %v2253 = vld [vmem:[#allocation3 + $0xc] sm:$0xf]
      %v2256 = vcombine.high %v2252, %v2252
      %2257 = vrot.lane.b32.xlu0 %v2252, 96
      %v2258 = vpop.permute.xlu0 %2257
      %2259 = vrot.lane.b32.xlu0 %v2256, 96
      %v2260 = vpop.permute.xlu0 %2259
      %2261 = vrot.lane.b32.xlu0 %v2253, 96
      %v2262 = vpop.permute.xlu0 %2261
      %v2263 = vsel %vm1412, %v2258, %v2260
      %v2264 = vsel %vm1412, %v2260, %v2262
      %v2267 = vsel %vm608, %v2263, 0.0
      %v2268 = vsel %vm609, %v2264, 0.0
      %2269 = vset.pattern.permute.xlu0 22
      %2270 = vperm.xlu0 %2269, %v1703
      %v2271 = vpop.permute.xlu0 %2270
      %v2273 = vmul.f32 %v2267, %v2271
      %v2274 = vmul.f32 %v2268, %v2271
      %v2275 = vadd.f32 %v2250, %v2273
      %v2276 = vadd.f32 %v2251, %v2274
      %v2277 = vld [vmem:[#allocation3 + $0x4] sm:$0xff]
      %v2278 = vld [vmem:[#allocation3 + $0xc] sm:$0xf]
      %v2281 = vcombine.high %v2277, %v2277
      %2282 = vrot.lane.b32.xlu0 %v2277, 95
      %v2283 = vpop.permute.xlu0 %2282
      %2284 = vrot.lane.b32.xlu0 %v2281, 95
      %v2285 = vpop.permute.xlu0 %2284
      %2286 = vrot.lane.b32.xlu0 %v2278, 95
      %v2287 = vpop.permute.xlu0 %2286
      %v2288 = vsel %vm1451, %v2283, %v2285
      %v2289 = vsel %vm1451, %v2285, %v2287
      %v2292 = vsel %vm655, %v2288, 0.0
      %v2293 = vsel %vm656, %v2289, 0.0
      %2294 = vset.pattern.permute.xlu0 23
      %2295 = vperm.xlu0 %2294, %v1703
      %v2296 = vpop.permute.xlu0 %2295
      %v2298 = vmul.f32 %v2292, %v2296
      %v2299 = vmul.f32 %v2293, %v2296
      %v2300 = vadd.f32 %v2275, %v2298
      %v2301 = vadd.f32 %v2276, %v2299
      %v2302 = vld [vmem:[#allocation3 + $0x4] sm:$0xff]
      %v2303 = vld [vmem:[#allocation3 + $0xc] sm:$0xf]
      %v2306 = vcombine.high %v2302, %v2302
      %2307 = vrot.lane.b32.xlu0 %v2302, 94
      %v2308 = vpop.permute.xlu0 %2307
      %2309 = vrot.lane.b32.xlu0 %v2306, 94
      %v2310 = vpop.permute.xlu0 %2309
      %2311 = vrot.lane.b32.xlu0 %v2303, 94
      %v2312 = vpop.permute.xlu0 %2311
      %v2313 = vsel %vm1490, %v2308, %v2310
      %v2314 = vsel %vm1490, %v2310, %v2312
      %v2317 = vsel %vm702, %v2313, 0.0
      %v2318 = vsel %vm703, %v2314, 0.0
      %2319 = vset.pattern.permute.xlu0 24
      %2320 = vperm.xlu0 %2319, %v1703
      %v2321 = vpop.permute.xlu0 %2320
      %v2323 = vmul.f32 %v2317, %v2321
      %v2324 = vmul.f32 %v2318, %v2321
      %v2325 = vadd.f32 %v2300, %v2323
      %v2326 = vadd.f32 %v2301, %v2324
      %2328 = vset.pattern.permute.xlu0 0
      %2329 = vperm.xlu0 %2328, %v1704
      %v2330 = vpop.permute.xlu0 %2329
      %v2332 = vadd.f32 %v2325, %v2330
      %v2333 = vadd.f32 %v2326, %v2330
      %v2334 = vadd.f32 %v1701, %v360
      %v2335 = vadd.f32 %v1702, %v361
      %2336 = vst [vmem:[%s359] sm:$0xf] %v2334
      %2337 = vst [vmem:[%s359 + $0x8] sm:$0xf] %v2335
      %v2340 = vrot.slane %v360, 4
      %v2341 = vrot.slane %v361, 4
      %v2344 = vadd.f32 %v2332, %v2340
      %v2345 = vadd.f32 %v2333, %v2341
      %v2348 = vrot.slane %v2344, 4
      %v2349 = vrot.slane %v2345, 4
      %2352 = vst [vmem:[%s359] sm:$0xf0] %v2348
      %2353 = vst [vmem:[%s359 + $0x8] sm:$0xf0] %v2349
      %p2354 = scmp.lt.s32.totalorder %s21, 1
      %s2355 = scalar_select %p2354, %s21, 1
      %s2356 = smul.addr %s2355, 2
      %s2357 = smul.addr %s2356, 8
      %s2358 = scalar_lea.vmem %s10, %s2357
      // Predicated region
      $region61: #{ghost_bottleneck_forward.1} parent=59 // pred_check
        %p2359 = pneg %p254
      $region62: #{ghost_bottleneck_forward.1} parent=59 // pred_check_branch
        %2361 = sbr.rel (%p2359) target = $region64
      $region63: #{ghost_bottleneck_forward.1} parent=59 // pred_region
        _
      $region64: #{ghost_bottleneck_forward.1} parent=59 // pred_fallthru
        _
    $region60: #{ghost_bottleneck_forward.1} parent=5 // pred_fallthru
      _
    %p2362 = scmp.le.s32.totalorder 2, %s16
    // Predicated region
    $region65: #{ghost_bottleneck_forward.1} parent=5 // pred_check
      %p2363 = pneg %p2362
    $region66: #{ghost_bottleneck_forward.1} parent=5 // pred_check_branch
      %2365 = sbr.rel (%p2363) target = $region68
    $region67: #{ghost_bottleneck_forward.1} parent=5 // pred_region
      %s2366 = ssub.s32 %s16, 2
      // Predicated region
      $region69: #{ghost_bottleneck_forward.1} parent=67 // pred_check
        %p2367 = pneg %p260
      $region70: #{ghost_bottleneck_forward.1} parent=67 // pred_check_branch
        %2369 = sbr.rel (%p2367) target = $region72
      $region71: #{ghost_bottleneck_forward.1} parent=67 // pred_region
        %p2370 = scmp.lt.s32.totalorder %s22, 1
        %s2371 = scalar_select %p2370, %s22, 1
        %s2372 = smul.addr %s2371, 2
        %s2373 = smul.addr %s2372, 8
        %s2374 = scalar_lea.vmem %s10, %s2373
      $region72: #{ghost_bottleneck_forward.1} parent=67 // pred_fallthru
        _
    $region68: #{ghost_bottleneck_forward.1} parent=5 // pred_fallthru
      _
  $region6: #{ghost_bottleneck_forward.1} parent=0 // loop_footer
    %s20 = sadd.s32 1, %s16
  $region7: #{ghost_bottleneck_forward.1} parent=0 // loop_footer_branch
    %15 = sbr.rel target = $region3
  $region8: #{ghost_bottleneck_forward.1} parent=0 // loop_exit
    _

</llo_original>
